<compile_context>
chip_gen: v5e
topology: v5e:2x2
jax: 0.10.0
libtpu: 0.0.40
codegen_flags: <defaults>
</compile_context>

<pallas_src>
import functools

import jax
import jax.numpy as jnp
from jax.experimental import pallas as pl
from jax.experimental.pallas import tpu as pltpu


# ---------------------------------------------------------------------------
# Kernel 1: fused multi-layer LSTM + Swish + BatchNorm batch statistics.
# Grid: time chunks (sequential -> "arbitrary").  Batch-first layout throughout.
# ---------------------------------------------------------------------------
def _make_lstm_stack_kernel(n_layers: int, t_chunk: int, hidden: int, inv_n: float):
    H = hidden

    def kernel(*refs):
        x_ref = refs[0]
        w_refs = refs[1:1 + 3 * n_layers]
        y_ref, mean_ref, var_ref = refs[1 + 3 * n_layers:4 + 3 * n_layers]
        h_scr, c_scr, a_scr, g_scr = refs[4 + 3 * n_layers:]

        ci = pl.program_id(0)
        n_chunks = pl.num_programs(0)
        B = x_ref.shape[0]
        d0 = x_ref.shape[-1]

        @pl.when(ci == 0)
        def _init():
            h_scr[...] = jnp.zeros_like(h_scr)
            c_scr[...] = jnp.zeros_like(c_scr)
            mean_ref[...] = jnp.zeros_like(mean_ref)
            var_ref[...] = jnp.zeros_like(var_ref)

        # (B, T_CHUNK, D) -> (B*T_CHUNK, D): leading-dim merge, no data movement.
        cur2d = x_ref[...].reshape(B * t_chunk, d0)

        for layer in range(n_layers):
            wih = w_refs[3 * layer][...]       # (d_in, 4H)  pre-transposed
            whh = w_refs[3 * layer + 1][...]   # (H, 4H)     pre-transposed
            bias = w_refs[3 * layer + 2][...]  # (1, 4H)     = b_ih + b_hh

            # Hoisted, chunk-batched input projection: M = B*T_CHUNK rows on the MXU
            # (bias folded here too) instead of an M=B matmul every timestep.
            gx = jnp.dot(cur2d, wih, preferred_element_type=jnp.float32) + bias
            g_scr[...] = gx.reshape(B, t_chunk, 4 * H)

            h = h_scr[layer]                   # (B, H)
            c = c_scr[layer]                   # (B, H)
            last = layer == n_layers - 1

            # Static trip count -> fully unrolled; scheduler overlaps the small
            # recurrent matmul (MXU), sigmoid/tanh (EUP) and VPU elementwise work.
            for t in range(t_chunk):
                gates = g_scr[:, t, :] + jnp.dot(
                    h, whh, preferred_element_type=jnp.float32)     # (B, 4H), order i,f,g,o
                i_g = jax.nn.sigmoid(gates[:, 0 * H:1 * H])
                f_g = jax.nn.sigmoid(gates[:, 1 * H:2 * H])
                g_g = jnp.tanh(gates[:, 2 * H:3 * H])
                o_g = jax.nn.sigmoid(gates[:, 3 * H:4 * H])
                c = f_g * c + i_g * g_g
                h = o_g * jnp.tanh(c)
                if last:
                    y_ref[:, t, :] = h * jax.nn.sigmoid(h)          # fused Swish
                else:
                    a_scr[:, t, :] = h

            h_scr[layer] = h
            c_scr[layer] = c
            if not last:
                cur2d = a_scr[...].reshape(B * t_chunk, H)

        # Chunk-level batch statistics of the Swish output: one reduction over the
        # VMEM-resident output chunk (cheaper than per-timestep partial sums).
        a2d = y_ref[...].reshape(B * t_chunk, H)
        mean_ref[...] += jnp.sum(a2d, axis=0, keepdims=True)
        var_ref[...] += jnp.sum(a2d * a2d, axis=0, keepdims=True)

        @pl.when(ci == n_chunks - 1)
        def _finalize():
            m = mean_ref[...] * inv_n
            v = var_ref[...] * inv_n - m * m   # biased variance, as in BatchNorm training
            mean_ref[...] = m
            var_ref[...] = v

    return kernel


def lstm_stack(x_btd, layer_params, t_chunk):
    """Fused LSTM stack + Swish + batch statistics.

    x_btd: (B, T, D) batch-first.
    layer_params: sequence of (w_ih_t (D_in, 4H), w_hh_t (H, 4H), bias (1, 4H)).
    Returns (a, mean, var): a = swish(last hidden) (B, T, H); mean/var (1, H).
    """
    B, T, D = x_btd.shape
    n_layers = len(layer_params)
    H = layer_params[0][1].shape[0]
    assert T % t_chunk == 0, (T, t_chunk)
    assert t_chunk == T or t_chunk % 8 == 0, t_chunk   # (8,128) tiling rule
    n_chunks = T // t_chunk

    in_specs = [pl.BlockSpec((B, t_chunk, D), lambda c: (0, c, 0))]
    args = [x_btd]
    for (w_ih_t, w_hh_t, bias2d) in layer_params:
        d_in = w_ih_t.shape[0]
        in_specs.append(pl.BlockSpec((d_in, 4 * H), lambda c: (0, 0)))
        in_specs.append(pl.BlockSpec((H, 4 * H), lambda c: (0, 0)))
        in_specs.append(pl.BlockSpec((1, 4 * H), lambda c: (0, 0)))
        args += [w_ih_t, w_hh_t, bias2d]

    kernel = _make_lstm_stack_kernel(n_layers, t_chunk, H, 1.0 / float(T * B))

    return pl.pallas_call(
        kernel,
        out_shape=(
            jax.ShapeDtypeStruct((B, T, H), jnp.float32),   # swish(h_last), batch-first
            jax.ShapeDtypeStruct((1, H), jnp.float32),      # batch mean
            jax.ShapeDtypeStruct((1, H), jnp.float32),      # batch (biased) variance
        ),
        grid=(n_chunks,),
        in_specs=in_specs,
        out_specs=(
            pl.BlockSpec((B, t_chunk, H), lambda c: (0, c, 0)),
            pl.BlockSpec((1, H), lambda c: (0, 0)),
            pl.BlockSpec((1, H), lambda c: (0, 0)),
        ),
        scratch_shapes=[
            pltpu.VMEM((n_layers, B, H), jnp.float32),       # h per layer (chunk carry)
            pltpu.VMEM((n_layers, B, H), jnp.float32),       # c per layer (chunk carry)
            pltpu.VMEM((B, t_chunk, H), jnp.float32),        # inter-layer chunk activations
            pltpu.VMEM((B, t_chunk, 4 * H), jnp.float32),    # hoisted input-projection gates
        ],
        compiler_params=pltpu.CompilerParams(
            dimension_semantics=("arbitrary",),              # sequential time recurrence
            # Explicit VMEM budget (raise for production sizes; keep < 64 MiB on v7x).
            vmem_limit_bytes=32 * 1024 * 1024,
        ),
    )(*args)


# ---------------------------------------------------------------------------
# Kernel 2: head = BatchNorm-folded output projection, tiled over time tiles.
# ---------------------------------------------------------------------------
def _head_kernel(a_ref, w_ref, b_ref, o_ref):
    B, TT, H = a_ref.shape
    V = o_ref.shape[-1]
    a = a_ref[...].reshape(B * TT, H)
    out = jnp.dot(a, w_ref[...], preferred_element_type=jnp.float32) + b_ref[...]
    o_ref[...] = out.reshape(B, TT, V)


def head(a_bth, w_eff, b_eff, t_tile):
    B, T, H = a_bth.shape
    V = w_eff.shape[1]
    assert T % t_tile == 0
    # TODO(synk): for production vocab sizes also tile V (multiple of 128 -> unmasked,
    # lane-dense stores) instead of holding the full (H, V) weight block resident.
    return pl.pallas_call(
        _head_kernel,
        out_shape=jax.ShapeDtypeStruct((B, T, V), jnp.float32),
        grid=(T // t_tile,),
        in_specs=[
            pl.BlockSpec((B, t_tile, H), lambda r: (0, r, 0)),
            pl.BlockSpec((H, V), lambda r: (0, 0)),
            pl.BlockSpec((1, V), lambda r: (0, 0)),
        ],
        out_specs=pl.BlockSpec((B, t_tile, V), lambda r: (0, r, 0)),
        compiler_params=pltpu.CompilerParams(
            dimension_semantics=("parallel",),
            vmem_limit_bytes=32 * 1024 * 1024,
        ),
    )(a_bth, w_eff, b_eff)


# ---------------------------------------------------------------------------
# Full decoder forward (lengths=None path of the PyTorch module).
# ---------------------------------------------------------------------------
@functools.partial(jax.jit, static_argnames=("t_chunk",))
def decoder_forward(x_btd, lstm_params, gamma, beta, w_out, b_out, *, t_chunk=8):
    B, T, _ = x_btd.shape
    V, H = w_out.shape

    # Pre-transpose weights once (wrapper-level, free relative to the recurrence):
    # kernels consume (K, N) layouts directly.
    layer_params = tuple(
        (jnp.transpose(w_ih), jnp.transpose(w_hh), bias.reshape(1, -1))
        for (w_ih, w_hh, bias) in lstm_params
    )

    a, mean, var = lstm_stack(x_btd, layer_params, t_chunk)

    # Fold BatchNorm (training-mode batch statistics, eps=1e-5) into the output
    # projection: out = a @ (W^T * s) + ((beta - mean*s) @ W^T + b),  s = gamma*rsqrt(var+eps).
    # O(H*V) once per call instead of O(B*T*H) elementwise work in the hot path.
    w_out_t = jnp.transpose(w_out)                        # (H, V)
    s = gamma.reshape(1, H) * jax.lax.rsqrt(var + 1e-5)   # (1, H)
    w_eff = w_out_t * jnp.transpose(s)                    # (H, V)
    b_eff = b_out.reshape(1, V) + jnp.dot(beta.reshape(1, H) - mean * s, w_out_t)

    return head(a, w_eff, b_eff, t_chunk)                 # (B, T, V) batch-first


# ---------------------------------------------------------------------------
# Pure-JAX reference for correctness check.
# ---------------------------------------------------------------------------
def decoder_ref(x, lstm_params, gamma, beta, w_out, b_out):
    B, T, _ = x.shape
    h_in = x
    for (w_ih, w_hh, bias) in lstm_params:
        H = w_hh.shape[1]

        def step(carry, xt, w_ih=w_ih, w_hh=w_hh, bias=bias, H=H):
            h, c = carry
            gates = xt @ w_ih.T + h @ w_hh.T + bias
            i = jax.nn.sigmoid(gates[:, 0 * H:1 * H])
            f = jax.nn.sigmoid(gates[:, 1 * H:2 * H])
            g = jnp.tanh(gates[:, 2 * H:3 * H])
            o = jax.nn.sigmoid(gates[:, 3 * H:4 * H])
            c = f * c + i * g
            h = o * jnp.tanh(c)
            return (h, c), h

        init = (jnp.zeros((B, H)), jnp.zeros((B, H)))
        _, ys = jax.lax.scan(step, init, jnp.swapaxes(h_in, 0, 1))
        h_in = jnp.swapaxes(ys, 0, 1)

    a = h_in * jax.nn.sigmoid(h_in)
    mean = a.mean(axis=(0, 1))
    var = ((a - mean) ** 2).mean(axis=(0, 1))
    norm = (a - mean) / jnp.sqrt(var + 1e-5) * gamma + beta
    return norm @ w_out.T + b_out


if __name__ == "__main__":
    # Small shapes consistent with the module (T chosen so the chunked recurrence
    # exercises the cross-chunk h/c carry: 2 chunks of 8 steps).
    vocab_size, d_model, hidden_dim, n_layers = 40, 16, 32, 2
    B, T = 2, 16

    key = jax.random.PRNGKey(0)
    keys = jax.random.split(key, 16)

    def u(k, shape, scale=0.1):
        return jax.random.uniform(k, shape, jnp.float32, -scale, scale)

    # Deterministic synthetic parameters (PyTorch LSTM gate layout: [i, f, g, o]).
    lstm_params = []
    ki = 0
    for layer in range(n_layers):
        in_dim = d_model if layer == 0 else hidden_dim
        w_ih = u(keys[ki], (4 * hidden_dim, in_dim)); ki += 1
        w_hh = u(keys[ki], (4 * hidden_dim, hidden_dim)); ki += 1
        bias = u(keys[ki], (4 * hidden_dim,)); ki += 1     # combined b_ih + b_hh
        lstm_params.append((w_ih, w_hh, bias))
    lstm_params = tuple(lstm_params)

    gamma = 1.0 + u(keys[ki], (hidden_dim,)); ki += 1
    beta = u(keys[ki], (hidden_dim,)); ki += 1
    w_out = u(keys[ki], (vocab_size, hidden_dim)); ki += 1
    b_out = u(keys[ki], (vocab_size,)); ki += 1

    x = jax.random.normal(keys[ki], (B, T, d_model), jnp.float32)

    out = decoder_forward(x, lstm_params, gamma, beta, w_out, b_out)
    out = jax.block_until_ready(out)
    assert out.shape == (B, T, vocab_size), out.shape

    ref = decoder_ref(x, lstm_params, gamma, beta, w_out, b_out)
    err = float(jnp.max(jnp.abs(out - ref)))
    assert err < 1e-2, f"max abs err {err}"

    # TODO(synk): `lengths is not None` (pack_padded_sequence) path is not implemented;
    # only the lengths=None forward path is reproduced (BatchNorm uses training-mode
    # batch statistics, as in the training forward of the module).
    print("KERNEL_OK")
</pallas_src>

<mosaic_0001>
module attributes {stable_mosaic.version = 11 : i64} {
  func.func @kernel(%arg0: i32, %arg1: memref<2x8x16xf32, #tpu.memory_space<vmem>>, %arg2: memref<16x128xf32, #tpu.memory_space<vmem>>, %arg3: memref<32x128xf32, #tpu.memory_space<vmem>>, %arg4: memref<1x128xf32, #tpu.memory_space<vmem>>, %arg5: memref<32x128xf32, #tpu.memory_space<vmem>>, %arg6: memref<32x128xf32, #tpu.memory_space<vmem>>, %arg7: memref<1x128xf32, #tpu.memory_space<vmem>>, %arg8: memref<2x8x32xf32, #tpu.memory_space<vmem>>, %arg9: memref<1x32xf32, #tpu.memory_space<vmem>>, %arg10: memref<1x32xf32, #tpu.memory_space<vmem>>, %arg11: memref<2x2x32xf32, #tpu.memory_space<vmem>>, %arg12: memref<2x2x32xf32, #tpu.memory_space<vmem>>, %arg13: memref<2x8x32xf32, #tpu.memory_space<vmem>>, %arg14: memref<2x8x128xf32, #tpu.memory_space<vmem>>) attributes {dimension_semantics = [#tpu.dimension_semantics<arbitrary>], iteration_bounds = array<i64: 2>, scalar_prefetch = 0 : i64, scratch_operands = 4 : i64, tpu.core_type = #tpu.core_type<tc>, window_params = [{transform_indices = @transform_0, window_bounds = array<i64: 2, 8, 16>}, {pipeline_mode = #tpu.pipeline_mode<synchronous>, transform_indices = @transform_1, window_bounds = array<i64: 16, 128>}, {pipeline_mode = #tpu.pipeline_mode<synchronous>, transform_indices = @transform_2, window_bounds = array<i64: 32, 128>}, {pipeline_mode = #tpu.pipeline_mode<synchronous>, transform_indices = @transform_3, window_bounds = array<i64: 1, 128>}, {pipeline_mode = #tpu.pipeline_mode<synchronous>, transform_indices = @transform_4, window_bounds = array<i64: 32, 128>}, {pipeline_mode = #tpu.pipeline_mode<synchronous>, transform_indices = @transform_5, window_bounds = array<i64: 32, 128>}, {pipeline_mode = #tpu.pipeline_mode<synchronous>, transform_indices = @transform_6, window_bounds = array<i64: 1, 128>}, {transform_indices = @transform_7, window_bounds = array<i64: 2, 8, 32>}, {pipeline_mode = #tpu.pipeline_mode<synchronous>, transform_indices = @transform_8, window_bounds = array<i64: 1, 32>}, {pipeline_mode = #tpu.pipeline_mode<synchronous>, transform_indices = @transform_9, window_bounds = array<i64: 1, 32>}]} {
    %c0_i32 = arith.constant 0 : i32
    %0 = arith.cmpi eq, %arg0, %c0_i32 : i32
    %1 = arith.extui %0 : i1 to i32
    %c0_i32_0 = arith.constant 0 : i32
    %2 = arith.cmpi ne, %1, %c0_i32_0 : i32
    scf.if %2 {
      %cst_224 = arith.constant 0.000000e+00 : f32
      %619 = vector.broadcast %cst_224 : f32 to vector<2x2x32xf32>
      %c0_225 = arith.constant 0 : index
      %c0_226 = arith.constant 0 : index
      %c0_227 = arith.constant 0 : index
      %620 = vector.load %arg11[%c0_225, %c0_226, %c0_227] : memref<2x2x32xf32, #tpu.memory_space<vmem>>, vector<2x2x32xf32>
      tpu.vector_store %arg11[%c0_225, %c0_226, %c0_227], %619 {strides = array<i32>} : memref<2x2x32xf32, #tpu.memory_space<vmem>>, vector<2x2x32xf32>,
      %cst_228 = arith.constant 0.000000e+00 : f32
      %621 = vector.broadcast %cst_228 : f32 to vector<2x2x32xf32>
      %c0_229 = arith.constant 0 : index
      %c0_230 = arith.constant 0 : index
      %c0_231 = arith.constant 0 : index
      %622 = vector.load %arg12[%c0_229, %c0_230, %c0_231] : memref<2x2x32xf32, #tpu.memory_space<vmem>>, vector<2x2x32xf32>
      tpu.vector_store %arg12[%c0_229, %c0_230, %c0_231], %621 {strides = array<i32>} : memref<2x2x32xf32, #tpu.memory_space<vmem>>, vector<2x2x32xf32>,
      %cst_232 = arith.constant 0.000000e+00 : f32
      %623 = vector.broadcast %cst_232 : f32 to vector<1x32xf32>
      %c0_233 = arith.constant 0 : index
      %c0_234 = arith.constant 0 : index
      %624 = vector.load %arg9[%c0_233, %c0_234] : memref<1x32xf32, #tpu.memory_space<vmem>>, vector<1x32xf32>
      tpu.vector_store %arg9[%c0_233, %c0_234], %623 {strides = array<i32>} : memref<1x32xf32, #tpu.memory_space<vmem>>, vector<1x32xf32>,
      %cst_235 = arith.constant 0.000000e+00 : f32
      %625 = vector.broadcast %cst_235 : f32 to vector<1x32xf32>
      %c0_236 = arith.constant 0 : index
      %c0_237 = arith.constant 0 : index
      %626 = vector.load %arg10[%c0_236, %c0_237] : memref<1x32xf32, #tpu.memory_space<vmem>>, vector<1x32xf32>
      tpu.vector_store %arg10[%c0_236, %c0_237], %625 {strides = array<i32>} : memref<1x32xf32, #tpu.memory_space<vmem>>, vector<1x32xf32>,
    } else {
    }
    %c0 = arith.constant 0 : index
    %c0_1 = arith.constant 0 : index
    %c0_2 = arith.constant 0 : index
    %3 = vector.load %arg1[%c0, %c0_1, %c0_2] : memref<2x8x16xf32, #tpu.memory_space<vmem>>, vector<2x8x16xf32>
    %4 = vector.shape_cast %3 : vector<2x8x16xf32> to vector<16x16xf32>
    %c0_3 = arith.constant 0 : index
    %c0_4 = arith.constant 0 : index
    %5 = vector.load %arg2[%c0_3, %c0_4] : memref<16x128xf32, #tpu.memory_space<vmem>>, vector<16x128xf32>
    %c0_5 = arith.constant 0 : index
    %c0_6 = arith.constant 0 : index
    %6 = vector.load %arg3[%c0_5, %c0_6] : memref<32x128xf32, #tpu.memory_space<vmem>>, vector<32x128xf32>
    %c0_7 = arith.constant 0 : index
    %c0_8 = arith.constant 0 : index
    %7 = vector.load %arg4[%c0_7, %c0_8] : memref<1x128xf32, #tpu.memory_space<vmem>>, vector<1x128xf32>
    %cst = arith.constant dense<0.000000e+00> : vector<16x128xf32>
    %8 = tpu.matmul %4, %5, %cst {dimension_numbers = #tpu.dot_dimension_numbers<[1], [0], [0], [1], [0, 0, 1, 1], [], []>} : vector<16x16xf32>, vector<16x128xf32>, vector<16x128xf32> -> vector<16x128xf32>
    %9 = vector.broadcast %7 : vector<1x128xf32> to vector<16x128xf32>
    %10 = arith.addf %8, %9 : vector<16x128xf32>
    %11 = vector.shape_cast %10 : vector<16x128xf32> to vector<2x8x128xf32>
    %c0_9 = arith.constant 0 : index
    %c0_10 = arith.constant 0 : index
    %c0_11 = arith.constant 0 : index
    %12 = vector.load %arg14[%c0_9, %c0_10, %c0_11] : memref<2x8x128xf32, #tpu.memory_space<vmem>>, vector<2x8x128xf32>
    tpu.vector_store %arg14[%c0_9, %c0_10, %c0_11], %11 {strides = array<i32>} : memref<2x8x128xf32, #tpu.memory_space<vmem>>, vector<2x8x128xf32>,
    %c0_12 = arith.constant 0 : index
    %c0_13 = arith.constant 0 : index
    %c0_14 = arith.constant 0 : index
    %13 = vector.load %arg11[%c0_12, %c0_13, %c0_14] : memref<2x2x32xf32, #tpu.memory_space<vmem>>, vector<1x2x32xf32>
    %14 = vector.shape_cast %13 : vector<1x2x32xf32> to vector<2x32xf32>
    %c0_15 = arith.constant 0 : index
    %c0_16 = arith.constant 0 : index
    %c0_17 = arith.constant 0 : index
    %15 = vector.load %arg12[%c0_15, %c0_16, %c0_17] : memref<2x2x32xf32, #tpu.memory_space<vmem>>, vector<1x2x32xf32>
    %16 = vector.shape_cast %15 : vector<1x2x32xf32> to vector<2x32xf32>
    %c0_18 = arith.constant 0 : index
    %c0_19 = arith.constant 0 : index
    %c0_20 = arith.constant 0 : index
    %17 = vector.load %arg14[%c0_18, %c0_19, %c0_20] : memref<2x8x128xf32, #tpu.memory_space<vmem>>, vector<2x1x128xf32>
    %18 = vector.shape_cast %17 : vector<2x1x128xf32> to vector<2x128xf32>
    %cst_21 = arith.constant dense<0.000000e+00> : vector<2x128xf32>
    %19 = tpu.matmul %14, %6, %cst_21 {dimension_numbers = #tpu.dot_dimension_numbers<[1], [0], [0], [1], [0, 0, 1, 1], [], []>} : vector<2x32xf32>, vector<32x128xf32>, vector<2x128xf32> -> vector<2x128xf32>
    %20 = arith.addf %18, %19 : vector<2x128xf32>
    %21 = vector.extract_strided_slice %20 {offsets = [0, 0], sizes = [2, 32], strides = [1, 1]} : vector<2x128xf32> to vector<2x32xf32>
    %22 = arith.negf %21 : vector<2x32xf32>
    %23 = math.exp %22 : vector<2x32xf32>
    %cst_22 = arith.constant 1.000000e+00 : f32
    %24 = vector.broadcast %cst_22 : f32 to vector<2x32xf32>
    %25 = arith.addf %24, %23 : vector<2x32xf32>
    %26 = arith.divf %24, %25 : vector<2x32xf32>
    %27 = vector.extract_strided_slice %20 {offsets = [0, 32], sizes = [2, 32], strides = [1, 1]} : vector<2x128xf32> to vector<2x32xf32>
    %28 = arith.negf %27 : vector<2x32xf32>
    %29 = math.exp %28 : vector<2x32xf32>
    %cst_23 = arith.constant 1.000000e+00 : f32
    %30 = vector.broadcast %cst_23 : f32 to vector<2x32xf32>
    %31 = arith.addf %30, %29 : vector<2x32xf32>
    %32 = arith.divf %30, %31 : vector<2x32xf32>
    %33 = vector.extract_strided_slice %20 {offsets = [0, 64], sizes = [2, 32], strides = [1, 1]} : vector<2x128xf32> to vector<2x32xf32>
    %34 = math.tanh %33 : vector<2x32xf32>
    %35 = vector.extract_strided_slice %20 {offsets = [0, 96], sizes = [2, 32], strides = [1, 1]} : vector<2x128xf32> to vector<2x32xf32>
    %36 = arith.negf %35 : vector<2x32xf32>
    %37 = math.exp %36 : vector<2x32xf32>
    %cst_24 = arith.constant 1.000000e+00 : f32
    %38 = vector.broadcast %cst_24 : f32 to vector<2x32xf32>
    %39 = arith.addf %38, %37 : vector<2x32xf32>
    %40 = arith.divf %38, %39 : vector<2x32xf32>
    %41 = arith.mulf %32, %16 : vector<2x32xf32>
    %42 = arith.mulf %26, %34 : vector<2x32xf32>
    %43 = arith.addf %41, %42 : vector<2x32xf32>
    %44 = math.tanh %43 : vector<2x32xf32>
    %45 = arith.mulf %40, %44 : vector<2x32xf32>
    %c0_25 = arith.constant 0 : index
    %c0_26 = arith.constant 0 : index
    %c0_27 = arith.constant 0 : index
    %46 = vector.load %arg13[%c0_25, %c0_26, %c0_27] : memref<2x8x32xf32, #tpu.memory_space<vmem>>, vector<2x1x32xf32>
    %47 = vector.shape_cast %46 : vector<2x1x32xf32> to vector<2x32xf32>
    %48 = vector.shape_cast %45 : vector<2x32xf32> to vector<2x1x32xf32>
    tpu.vector_store %arg13[%c0_25, %c0_26, %c0_27], %48 {strides = array<i32>} : memref<2x8x32xf32, #tpu.memory_space<vmem>>, vector<2x1x32xf32>,
    %c0_28 = arith.constant 0 : index
    %c1 = arith.constant 1 : index
    %c0_29 = arith.constant 0 : index
    %49 = vector.load %arg14[%c0_28, %c1, %c0_29] : memref<2x8x128xf32, #tpu.memory_space<vmem>>, vector<2x1x128xf32>
    %50 = vector.shape_cast %49 : vector<2x1x128xf32> to vector<2x128xf32>
    %cst_30 = arith.constant dense<0.000000e+00> : vector<2x128xf32>
    %51 = tpu.matmul %45, %6, %cst_30 {dimension_numbers = #tpu.dot_dimension_numbers<[1], [0], [0], [1], [0, 0, 1, 1], [], []>} : vector<2x32xf32>, vector<32x128xf32>, vector<2x128xf32> -> vector<2x128xf32>
    %52 = arith.addf %50, %51 : vector<2x128xf32>
    %53 = vector.extract_strided_slice %52 {offsets = [0, 0], sizes = [2, 32], strides = [1, 1]} : vector<2x128xf32> to vector<2x32xf32>
    %54 = arith.negf %53 : vector<2x32xf32>
    %55 = math.exp %54 : vector<2x32xf32>
    %cst_31 = arith.constant 1.000000e+00 : f32
    %56 = vector.broadcast %cst_31 : f32 to vector<2x32xf32>
    %57 = arith.addf %56, %55 : vector<2x32xf32>
    %58 = arith.divf %56, %57 : vector<2x32xf32>
    %59 = vector.extract_strided_slice %52 {offsets = [0, 32], sizes = [2, 32], strides = [1, 1]} : vector<2x128xf32> to vector<2x32xf32>
    %60 = arith.negf %59 : vector<2x32xf32>
    %61 = math.exp %60 : vector<2x32xf32>
    %cst_32 = arith.constant 1.000000e+00 : f32
    %62 = vector.broadcast %cst_32 : f32 to vector<2x32xf32>
    %63 = arith.addf %62, %61 : vector<2x32xf32>
    %64 = arith.divf %62, %63 : vector<2x32xf32>
    %65 = vector.extract_strided_slice %52 {offsets = [0, 64], sizes = [2, 32], strides = [1, 1]} : vector<2x128xf32> to vector<2x32xf32>
    %66 = math.tanh %65 : vector<2x32xf32>
    %67 = vector.extract_strided_slice %52 {offsets = [0, 96], sizes = [2, 32], strides = [1, 1]} : vector<2x128xf32> to vector<2x32xf32>
    %68 = arith.negf %67 : vector<2x32xf32>
    %69 = math.exp %68 : vector<2x32xf32>
    %cst_33 = arith.constant 1.000000e+00 : f32
    %70 = vector.broadcast %cst_33 : f32 to vector<2x32xf32>
    %71 = arith.addf %70, %69 : vector<2x32xf32>
    %72 = arith.divf %70, %71 : vector<2x32xf32>
    %73 = arith.mulf %64, %43 : vector<2x32xf32>
    %74 = arith.mulf %58, %66 : vector<2x32xf32>
    %75 = arith.addf %73, %74 : vector<2x32xf32>
    %76 = math.tanh %75 : vector<2x32xf32>
    %77 = arith.mulf %72, %76 : vector<2x32xf32>
    %c0_34 = arith.constant 0 : index
    %c1_35 = arith.constant 1 : index
    %c0_36 = arith.constant 0 : index
    %78 = vector.load %arg13[%c0_34, %c1_35, %c0_36] : memref<2x8x32xf32, #tpu.memory_space<vmem>>, vector<2x1x32xf32>
    %79 = vector.shape_cast %78 : vector<2x1x32xf32> to vector<2x32xf32>
    %80 = vector.shape_cast %77 : vector<2x32xf32> to vector<2x1x32xf32>
    tpu.vector_store %arg13[%c0_34, %c1_35, %c0_36], %80 {strides = array<i32>} : memref<2x8x32xf32, #tpu.memory_space<vmem>>, vector<2x1x32xf32>,
    %c0_37 = arith.constant 0 : index
    %c2 = arith.constant 2 : index
    %c0_38 = arith.constant 0 : index
    %81 = vector.load %arg14[%c0_37, %c2, %c0_38] : memref<2x8x128xf32, #tpu.memory_space<vmem>>, vector<2x1x128xf32>
    %82 = vector.shape_cast %81 : vector<2x1x128xf32> to vector<2x128xf32>
    %cst_39 = arith.constant dense<0.000000e+00> : vector<2x128xf32>
    %83 = tpu.matmul %77, %6, %cst_39 {dimension_numbers = #tpu.dot_dimension_numbers<[1], [0], [0], [1], [0, 0, 1, 1], [], []>} : vector<2x32xf32>, vector<32x128xf32>, vector<2x128xf32> -> vector<2x128xf32>
    %84 = arith.addf %82, %83 : vector<2x128xf32>
    %85 = vector.extract_strided_slice %84 {offsets = [0, 0], sizes = [2, 32], strides = [1, 1]} : vector<2x128xf32> to vector<2x32xf32>
    %86 = arith.negf %85 : vector<2x32xf32>
    %87 = math.exp %86 : vector<2x32xf32>
    %cst_40 = arith.constant 1.000000e+00 : f32
    %88 = vector.broadcast %cst_40 : f32 to vector<2x32xf32>
    %89 = arith.addf %88, %87 : vector<2x32xf32>
    %90 = arith.divf %88, %89 : vector<2x32xf32>
    %91 = vector.extract_strided_slice %84 {offsets = [0, 32], sizes = [2, 32], strides = [1, 1]} : vector<2x128xf32> to vector<2x32xf32>
    %92 = arith.negf %91 : vector<2x32xf32>
    %93 = math.exp %92 : vector<2x32xf32>
    %cst_41 = arith.constant 1.000000e+00 : f32
    %94 = vector.broadcast %cst_41 : f32 to vector<2x32xf32>
    %95 = arith.addf %94, %93 : vector<2x32xf32>
    %96 = arith.divf %94, %95 : vector<2x32xf32>
    %97 = vector.extract_strided_slice %84 {offsets = [0, 64], sizes = [2, 32], strides = [1, 1]} : vector<2x128xf32> to vector<2x32xf32>
    %98 = math.tanh %97 : vector<2x32xf32>
    %99 = vector.extract_strided_slice %84 {offsets = [0, 96], sizes = [2, 32], strides = [1, 1]} : vector<2x128xf32> to vector<2x32xf32>
    %100 = arith.negf %99 : vector<2x32xf32>
    %101 = math.exp %100 : vector<2x32xf32>
    %cst_42 = arith.constant 1.000000e+00 : f32
    %102 = vector.broadcast %cst_42 : f32 to vector<2x32xf32>
    %103 = arith.addf %102, %101 : vector<2x32xf32>
    %104 = arith.divf %102, %103 : vector<2x32xf32>
    %105 = arith.mulf %96, %75 : vector<2x32xf32>
    %106 = arith.mulf %90, %98 : vector<2x32xf32>
    %107 = arith.addf %105, %106 : vector<2x32xf32>
    %108 = math.tanh %107 : vector<2x32xf32>
    %109 = arith.mulf %104, %108 : vector<2x32xf32>
    %c0_43 = arith.constant 0 : index
    %c2_44 = arith.constant 2 : index
    %c0_45 = arith.constant 0 : index
    %110 = vector.load %arg13[%c0_43, %c2_44, %c0_45] : memref<2x8x32xf32, #tpu.memory_space<vmem>>, vector<2x1x32xf32>
    %111 = vector.shape_cast %110 : vector<2x1x32xf32> to vector<2x32xf32>
    %112 = vector.shape_cast %109 : vector<2x32xf32> to vector<2x1x32xf32>
    tpu.vector_store %arg13[%c0_43, %c2_44, %c0_45], %112 {strides = array<i32>} : memref<2x8x32xf32, #tpu.memory_space<vmem>>, vector<2x1x32xf32>,
    %c0_46 = arith.constant 0 : index
    %c3 = arith.constant 3 : index
    %c0_47 = arith.constant 0 : index
    %113 = vector.load %arg14[%c0_46, %c3, %c0_47] : memref<2x8x128xf32, #tpu.memory_space<vmem>>, vector<2x1x128xf32>
    %114 = vector.shape_cast %113 : vector<2x1x128xf32> to vector<2x128xf32>
    %cst_48 = arith.constant dense<0.000000e+00> : vector<2x128xf32>
    %115 = tpu.matmul %109, %6, %cst_48 {dimension_numbers = #tpu.dot_dimension_numbers<[1], [0], [0], [1], [0, 0, 1, 1], [], []>} : vector<2x32xf32>, vector<32x128xf32>, vector<2x128xf32> -> vector<2x128xf32>
    %116 = arith.addf %114, %115 : vector<2x128xf32>
    %117 = vector.extract_strided_slice %116 {offsets = [0, 0], sizes = [2, 32], strides = [1, 1]} : vector<2x128xf32> to vector<2x32xf32>
    %118 = arith.negf %117 : vector<2x32xf32>
    %119 = math.exp %118 : vector<2x32xf32>
    %cst_49 = arith.constant 1.000000e+00 : f32
    %120 = vector.broadcast %cst_49 : f32 to vector<2x32xf32>
    %121 = arith.addf %120, %119 : vector<2x32xf32>
    %122 = arith.divf %120, %121 : vector<2x32xf32>
    %123 = vector.extract_strided_slice %116 {offsets = [0, 32], sizes = [2, 32], strides = [1, 1]} : vector<2x128xf32> to vector<2x32xf32>
    %124 = arith.negf %123 : vector<2x32xf32>
    %125 = math.exp %124 : vector<2x32xf32>
    %cst_50 = arith.constant 1.000000e+00 : f32
    %126 = vector.broadcast %cst_50 : f32 to vector<2x32xf32>
    %127 = arith.addf %126, %125 : vector<2x32xf32>
    %128 = arith.divf %126, %127 : vector<2x32xf32>
    %129 = vector.extract_strided_slice %116 {offsets = [0, 64], sizes = [2, 32], strides = [1, 1]} : vector<2x128xf32> to vector<2x32xf32>
    %130 = math.tanh %129 : vector<2x32xf32>
    %131 = vector.extract_strided_slice %116 {offsets = [0, 96], sizes = [2, 32], strides = [1, 1]} : vector<2x128xf32> to vector<2x32xf32>
    %132 = arith.negf %131 : vector<2x32xf32>
    %133 = math.exp %132 : vector<2x32xf32>
    %cst_51 = arith.constant 1.000000e+00 : f32
    %134 = vector.broadcast %cst_51 : f32 to vector<2x32xf32>
    %135 = arith.addf %134, %133 : vector<2x32xf32>
    %136 = arith.divf %134, %135 : vector<2x32xf32>
    %137 = arith.mulf %128, %107 : vector<2x32xf32>
    %138 = arith.mulf %122, %130 : vector<2x32xf32>
    %139 = arith.addf %137, %138 : vector<2x32xf32>
    %140 = math.tanh %139 : vector<2x32xf32>
    %141 = arith.mulf %136, %140 : vector<2x32xf32>
    %c0_52 = arith.constant 0 : index
    %c3_53 = arith.constant 3 : index
    %c0_54 = arith.constant 0 : index
    %142 = vector.load %arg13[%c0_52, %c3_53, %c0_54] : memref<2x8x32xf32, #tpu.memory_space<vmem>>, vector<2x1x32xf32>
    %143 = vector.shape_cast %142 : vector<2x1x32xf32> to vector<2x32xf32>
    %144 = vector.shape_cast %141 : vector<2x32xf32> to vector<2x1x32xf32>
    tpu.vector_store %arg13[%c0_52, %c3_53, %c0_54], %144 {strides = array<i32>} : memref<2x8x32xf32, #tpu.memory_space<vmem>>, vector<2x1x32xf32>,
    %c0_55 = arith.constant 0 : index
    %c4 = arith.constant 4 : index
    %c0_56 = arith.constant 0 : index
    %145 = vector.load %arg14[%c0_55, %c4, %c0_56] : memref<2x8x128xf32, #tpu.memory_space<vmem>>, vector<2x1x128xf32>
    %146 = vector.shape_cast %145 : vector<2x1x128xf32> to vector<2x128xf32>
    %cst_57 = arith.constant dense<0.000000e+00> : vector<2x128xf32>
    %147 = tpu.matmul %141, %6, %cst_57 {dimension_numbers = #tpu.dot_dimension_numbers<[1], [0], [0], [1], [0, 0, 1, 1], [], []>} : vector<2x32xf32>, vector<32x128xf32>, vector<2x128xf32> -> vector<2x128xf32>
    %148 = arith.addf %146, %147 : vector<2x128xf32>
    %149 = vector.extract_strided_slice %148 {offsets = [0, 0], sizes = [2, 32], strides = [1, 1]} : vector<2x128xf32> to vector<2x32xf32>
    %150 = arith.negf %149 : vector<2x32xf32>
    %151 = math.exp %150 : vector<2x32xf32>
    %cst_58 = arith.constant 1.000000e+00 : f32
    %152 = vector.broadcast %cst_58 : f32 to vector<2x32xf32>
    %153 = arith.addf %152, %151 : vector<2x32xf32>
    %154 = arith.divf %152, %153 : vector<2x32xf32>
    %155 = vector.extract_strided_slice %148 {offsets = [0, 32], sizes = [2, 32], strides = [1, 1]} : vector<2x128xf32> to vector<2x32xf32>
    %156 = arith.negf %155 : vector<2x32xf32>
    %157 = math.exp %156 : vector<2x32xf32>
    %cst_59 = arith.constant 1.000000e+00 : f32
    %158 = vector.broadcast %cst_59 : f32 to vector<2x32xf32>
    %159 = arith.addf %158, %157 : vector<2x32xf32>
    %160 = arith.divf %158, %159 : vector<2x32xf32>
    %161 = vector.extract_strided_slice %148 {offsets = [0, 64], sizes = [2, 32], strides = [1, 1]} : vector<2x128xf32> to vector<2x32xf32>
    %162 = math.tanh %161 : vector<2x32xf32>
    %163 = vector.extract_strided_slice %148 {offsets = [0, 96], sizes = [2, 32], strides = [1, 1]} : vector<2x128xf32> to vector<2x32xf32>
    %164 = arith.negf %163 : vector<2x32xf32>
    %165 = math.exp %164 : vector<2x32xf32>
    %cst_60 = arith.constant 1.000000e+00 : f32
    %166 = vector.broadcast %cst_60 : f32 to vector<2x32xf32>
    %167 = arith.addf %166, %165 : vector<2x32xf32>
    %168 = arith.divf %166, %167 : vector<2x32xf32>
    %169 = arith.mulf %160, %139 : vector<2x32xf32>
    %170 = arith.mulf %154, %162 : vector<2x32xf32>
    %171 = arith.addf %169, %170 : vector<2x32xf32>
    %172 = math.tanh %171 : vector<2x32xf32>
    %173 = arith.mulf %168, %172 : vector<2x32xf32>
    %c0_61 = arith.constant 0 : index
    %c4_62 = arith.constant 4 : index
    %c0_63 = arith.constant 0 : index
    %174 = vector.load %arg13[%c0_61, %c4_62, %c0_63] : memref<2x8x32xf32, #tpu.memory_space<vmem>>, vector<2x1x32xf32>
    %175 = vector.shape_cast %174 : vector<2x1x32xf32> to vector<2x32xf32>
    %176 = vector.shape_cast %173 : vector<2x32xf32> to vector<2x1x32xf32>
    tpu.vector_store %arg13[%c0_61, %c4_62, %c0_63], %176 {strides = array<i32>} : memref<2x8x32xf32, #tpu.memory_space<vmem>>, vector<2x1x32xf32>,
    %c0_64 = arith.constant 0 : index
    %c5 = arith.constant 5 : index
    %c0_65 = arith.constant 0 : index
    %177 = vector.load %arg14[%c0_64, %c5, %c0_65] : memref<2x8x128xf32, #tpu.memory_space<vmem>>, vector<2x1x128xf32>
    %178 = vector.shape_cast %177 : vector<2x1x128xf32> to vector<2x128xf32>
    %cst_66 = arith.constant dense<0.000000e+00> : vector<2x128xf32>
    %179 = tpu.matmul %173, %6, %cst_66 {dimension_numbers = #tpu.dot_dimension_numbers<[1], [0], [0], [1], [0, 0, 1, 1], [], []>} : vector<2x32xf32>, vector<32x128xf32>, vector<2x128xf32> -> vector<2x128xf32>
    %180 = arith.addf %178, %179 : vector<2x128xf32>
    %181 = vector.extract_strided_slice %180 {offsets = [0, 0], sizes = [2, 32], strides = [1, 1]} : vector<2x128xf32> to vector<2x32xf32>
    %182 = arith.negf %181 : vector<2x32xf32>
    %183 = math.exp %182 : vector<2x32xf32>
    %cst_67 = arith.constant 1.000000e+00 : f32
    %184 = vector.broadcast %cst_67 : f32 to vector<2x32xf32>
    %185 = arith.addf %184, %183 : vector<2x32xf32>
    %186 = arith.divf %184, %185 : vector<2x32xf32>
    %187 = vector.extract_strided_slice %180 {offsets = [0, 32], sizes = [2, 32], strides = [1, 1]} : vector<2x128xf32> to vector<2x32xf32>
    %188 = arith.negf %187 : vector<2x32xf32>
    %189 = math.exp %188 : vector<2x32xf32>
    %cst_68 = arith.constant 1.000000e+00 : f32
    %190 = vector.broadcast %cst_68 : f32 to vector<2x32xf32>
    %191 = arith.addf %190, %189 : vector<2x32xf32>
    %192 = arith.divf %190, %191 : vector<2x32xf32>
    %193 = vector.extract_strided_slice %180 {offsets = [0, 64], sizes = [2, 32], strides = [1, 1]} : vector<2x128xf32> to vector<2x32xf32>
    %194 = math.tanh %193 : vector<2x32xf32>
    %195 = vector.extract_strided_slice %180 {offsets = [0, 96], sizes = [2, 32], strides = [1, 1]} : vector<2x128xf32> to vector<2x32xf32>
    %196 = arith.negf %195 : vector<2x32xf32>
    %197 = math.exp %196 : vector<2x32xf32>
    %cst_69 = arith.constant 1.000000e+00 : f32
    %198 = vector.broadcast %cst_69 : f32 to vector<2x32xf32>
    %199 = arith.addf %198, %197 : vector<2x32xf32>
    %200 = arith.divf %198, %199 : vector<2x32xf32>
    %201 = arith.mulf %192, %171 : vector<2x32xf32>
    %202 = arith.mulf %186, %194 : vector<2x32xf32>
    %203 = arith.addf %201, %202 : vector<2x32xf32>
    %204 = math.tanh %203 : vector<2x32xf32>
    %205 = arith.mulf %200, %204 : vector<2x32xf32>
    %c0_70 = arith.constant 0 : index
    %c5_71 = arith.constant 5 : index
    %c0_72 = arith.constant 0 : index
    %206 = vector.load %arg13[%c0_70, %c5_71, %c0_72] : memref<2x8x32xf32, #tpu.memory_space<vmem>>, vector<2x1x32xf32>
    %207 = vector.shape_cast %206 : vector<2x1x32xf32> to vector<2x32xf32>
    %208 = vector.shape_cast %205 : vector<2x32xf32> to vector<2x1x32xf32>
    tpu.vector_store %arg13[%c0_70, %c5_71, %c0_72], %208 {strides = array<i32>} : memref<2x8x32xf32, #tpu.memory_space<vmem>>, vector<2x1x32xf32>,
    %c0_73 = arith.constant 0 : index
    %c6 = arith.constant 6 : index
    %c0_74 = arith.constant 0 : index
    %209 = vector.load %arg14[%c0_73, %c6, %c0_74] : memref<2x8x128xf32, #tpu.memory_space<vmem>>, vector<2x1x128xf32>
    %210 = vector.shape_cast %209 : vector<2x1x128xf32> to vector<2x128xf32>
    %cst_75 = arith.constant dense<0.000000e+00> : vector<2x128xf32>
    %211 = tpu.matmul %205, %6, %cst_75 {dimension_numbers = #tpu.dot_dimension_numbers<[1], [0], [0], [1], [0, 0, 1, 1], [], []>} : vector<2x32xf32>, vector<32x128xf32>, vector<2x128xf32> -> vector<2x128xf32>
    %212 = arith.addf %210, %211 : vector<2x128xf32>
    %213 = vector.extract_strided_slice %212 {offsets = [0, 0], sizes = [2, 32], strides = [1, 1]} : vector<2x128xf32> to vector<2x32xf32>
    %214 = arith.negf %213 : vector<2x32xf32>
    %215 = math.exp %214 : vector<2x32xf32>
    %cst_76 = arith.constant 1.000000e+00 : f32
    %216 = vector.broadcast %cst_76 : f32 to vector<2x32xf32>
    %217 = arith.addf %216, %215 : vector<2x32xf32>
    %218 = arith.divf %216, %217 : vector<2x32xf32>
    %219 = vector.extract_strided_slice %212 {offsets = [0, 32], sizes = [2, 32], strides = [1, 1]} : vector<2x128xf32> to vector<2x32xf32>
    %220 = arith.negf %219 : vector<2x32xf32>
    %221 = math.exp %220 : vector<2x32xf32>
    %cst_77 = arith.constant 1.000000e+00 : f32
    %222 = vector.broadcast %cst_77 : f32 to vector<2x32xf32>
    %223 = arith.addf %222, %221 : vector<2x32xf32>
    %224 = arith.divf %222, %223 : vector<2x32xf32>
    %225 = vector.extract_strided_slice %212 {offsets = [0, 64], sizes = [2, 32], strides = [1, 1]} : vector<2x128xf32> to vector<2x32xf32>
    %226 = math.tanh %225 : vector<2x32xf32>
    %227 = vector.extract_strided_slice %212 {offsets = [0, 96], sizes = [2, 32], strides = [1, 1]} : vector<2x128xf32> to vector<2x32xf32>
    %228 = arith.negf %227 : vector<2x32xf32>
    %229 = math.exp %228 : vector<2x32xf32>
    %cst_78 = arith.constant 1.000000e+00 : f32
    %230 = vector.broadcast %cst_78 : f32 to vector<2x32xf32>
    %231 = arith.addf %230, %229 : vector<2x32xf32>
    %232 = arith.divf %230, %231 : vector<2x32xf32>
    %233 = arith.mulf %224, %203 : vector<2x32xf32>
    %234 = arith.mulf %218, %226 : vector<2x32xf32>
    %235 = arith.addf %233, %234 : vector<2x32xf32>
    %236 = math.tanh %235 : vector<2x32xf32>
    %237 = arith.mulf %232, %236 : vector<2x32xf32>
    %c0_79 = arith.constant 0 : index
    %c6_80 = arith.constant 6 : index
    %c0_81 = arith.constant 0 : index
    %238 = vector.load %arg13[%c0_79, %c6_80, %c0_81] : memref<2x8x32xf32, #tpu.memory_space<vmem>>, vector<2x1x32xf32>
    %239 = vector.shape_cast %238 : vector<2x1x32xf32> to vector<2x32xf32>
    %240 = vector.shape_cast %237 : vector<2x32xf32> to vector<2x1x32xf32>
    tpu.vector_store %arg13[%c0_79, %c6_80, %c0_81], %240 {strides = array<i32>} : memref<2x8x32xf32, #tpu.memory_space<vmem>>, vector<2x1x32xf32>,
    %c0_82 = arith.constant 0 : index
    %c7 = arith.constant 7 : index
    %c0_83 = arith.constant 0 : index
    %241 = vector.load %arg14[%c0_82, %c7, %c0_83] : memref<2x8x128xf32, #tpu.memory_space<vmem>>, vector<2x1x128xf32>
    %242 = vector.shape_cast %241 : vector<2x1x128xf32> to vector<2x128xf32>
    %cst_84 = arith.constant dense<0.000000e+00> : vector<2x128xf32>
    %243 = tpu.matmul %237, %6, %cst_84 {dimension_numbers = #tpu.dot_dimension_numbers<[1], [0], [0], [1], [0, 0, 1, 1], [], []>} : vector<2x32xf32>, vector<32x128xf32>, vector<2x128xf32> -> vector<2x128xf32>
    %244 = arith.addf %242, %243 : vector<2x128xf32>
    %245 = vector.extract_strided_slice %244 {offsets = [0, 0], sizes = [2, 32], strides = [1, 1]} : vector<2x128xf32> to vector<2x32xf32>
    %246 = arith.negf %245 : vector<2x32xf32>
    %247 = math.exp %246 : vector<2x32xf32>
    %cst_85 = arith.constant 1.000000e+00 : f32
    %248 = vector.broadcast %cst_85 : f32 to vector<2x32xf32>
    %249 = arith.addf %248, %247 : vector<2x32xf32>
    %250 = arith.divf %248, %249 : vector<2x32xf32>
    %251 = vector.extract_strided_slice %244 {offsets = [0, 32], sizes = [2, 32], strides = [1, 1]} : vector<2x128xf32> to vector<2x32xf32>
    %252 = arith.negf %251 : vector<2x32xf32>
    %253 = math.exp %252 : vector<2x32xf32>
    %cst_86 = arith.constant 1.000000e+00 : f32
    %254 = vector.broadcast %cst_86 : f32 to vector<2x32xf32>
    %255 = arith.addf %254, %253 : vector<2x32xf32>
    %256 = arith.divf %254, %255 : vector<2x32xf32>
    %257 = vector.extract_strided_slice %244 {offsets = [0, 64], sizes = [2, 32], strides = [1, 1]} : vector<2x128xf32> to vector<2x32xf32>
    %258 = math.tanh %257 : vector<2x32xf32>
    %259 = vector.extract_strided_slice %244 {offsets = [0, 96], sizes = [2, 32], strides = [1, 1]} : vector<2x128xf32> to vector<2x32xf32>
    %260 = arith.negf %259 : vector<2x32xf32>
    %261 = math.exp %260 : vector<2x32xf32>
    %cst_87 = arith.constant 1.000000e+00 : f32
    %262 = vector.broadcast %cst_87 : f32 to vector<2x32xf32>
    %263 = arith.addf %262, %261 : vector<2x32xf32>
    %264 = arith.divf %262, %263 : vector<2x32xf32>
    %265 = arith.mulf %256, %235 : vector<2x32xf32>
    %266 = arith.mulf %250, %258 : vector<2x32xf32>
    %267 = arith.addf %265, %266 : vector<2x32xf32>
    %268 = math.tanh %267 : vector<2x32xf32>
    %269 = arith.mulf %264, %268 : vector<2x32xf32>
    %c0_88 = arith.constant 0 : index
    %c7_89 = arith.constant 7 : index
    %c0_90 = arith.constant 0 : index
    %270 = vector.load %arg13[%c0_88, %c7_89, %c0_90] : memref<2x8x32xf32, #tpu.memory_space<vmem>>, vector<2x1x32xf32>
    %271 = vector.shape_cast %270 : vector<2x1x32xf32> to vector<2x32xf32>
    %272 = vector.shape_cast %269 : vector<2x32xf32> to vector<2x1x32xf32>
    tpu.vector_store %arg13[%c0_88, %c7_89, %c0_90], %272 {strides = array<i32>} : memref<2x8x32xf32, #tpu.memory_space<vmem>>, vector<2x1x32xf32>,
    %c0_91 = arith.constant 0 : index
    %c0_92 = arith.constant 0 : index
    %c0_93 = arith.constant 0 : index
    %273 = vector.load %arg11[%c0_91, %c0_92, %c0_93] : memref<2x2x32xf32, #tpu.memory_space<vmem>>, vector<1x2x32xf32>
    %274 = vector.shape_cast %273 : vector<1x2x32xf32> to vector<2x32xf32>
    %275 = vector.shape_cast %269 : vector<2x32xf32> to vector<1x2x32xf32>
    tpu.vector_store %arg11[%c0_91, %c0_92, %c0_93], %275 {strides = array<i32>} : memref<2x2x32xf32, #tpu.memory_space<vmem>>, vector<1x2x32xf32>,
    %c0_94 = arith.constant 0 : index
    %c0_95 = arith.constant 0 : index
    %c0_96 = arith.constant 0 : index
    %276 = vector.load %arg12[%c0_94, %c0_95, %c0_96] : memref<2x2x32xf32, #tpu.memory_space<vmem>>, vector<1x2x32xf32>
    %277 = vector.shape_cast %276 : vector<1x2x32xf32> to vector<2x32xf32>
    %278 = vector.shape_cast %267 : vector<2x32xf32> to vector<1x2x32xf32>
    tpu.vector_store %arg12[%c0_94, %c0_95, %c0_96], %278 {strides = array<i32>} : memref<2x2x32xf32, #tpu.memory_space<vmem>>, vector<1x2x32xf32>,
    %c0_97 = arith.constant 0 : index
    %c0_98 = arith.constant 0 : index
    %c0_99 = arith.constant 0 : index
    %279 = vector.load %arg13[%c0_97, %c0_98, %c0_99] : memref<2x8x32xf32, #tpu.memory_space<vmem>>, vector<2x8x32xf32>
    %280 = vector.shape_cast %279 : vector<2x8x32xf32> to vector<16x32xf32>
    %c0_100 = arith.constant 0 : index
    %c0_101 = arith.constant 0 : index
    %281 = vector.load %arg5[%c0_100, %c0_101] : memref<32x128xf32, #tpu.memory_space<vmem>>, vector<32x128xf32>
    %c0_102 = arith.constant 0 : index
    %c0_103 = arith.constant 0 : index
    %282 = vector.load %arg6[%c0_102, %c0_103] : memref<32x128xf32, #tpu.memory_space<vmem>>, vector<32x128xf32>
    %c0_104 = arith.constant 0 : index
    %c0_105 = arith.constant 0 : index
    %283 = vector.load %arg7[%c0_104, %c0_105] : memref<1x128xf32, #tpu.memory_space<vmem>>, vector<1x128xf32>
    %cst_106 = arith.constant dense<0.000000e+00> : vector<16x128xf32>
    %284 = tpu.matmul %280, %281, %cst_106 {dimension_numbers = #tpu.dot_dimension_numbers<[1], [0], [0], [1], [0, 0, 1, 1], [], []>} : vector<16x32xf32>, vector<32x128xf32>, vector<16x128xf32> -> vector<16x128xf32>
    %285 = vector.broadcast %283 : vector<1x128xf32> to vector<16x128xf32>
    %286 = arith.addf %284, %285 : vector<16x128xf32>
    %287 = vector.shape_cast %286 : vector<16x128xf32> to vector<2x8x128xf32>
    %c0_107 = arith.constant 0 : index
    %c0_108 = arith.constant 0 : index
    %c0_109 = arith.constant 0 : index
    %288 = vector.load %arg14[%c0_107, %c0_108, %c0_109] : memref<2x8x128xf32, #tpu.memory_space<vmem>>, vector<2x8x128xf32>
    tpu.vector_store %arg14[%c0_107, %c0_108, %c0_109], %287 {strides = array<i32>} : memref<2x8x128xf32, #tpu.memory_space<vmem>>, vector<2x8x128xf32>,
    %c1_110 = arith.constant 1 : index
    %c0_111 = arith.constant 0 : index
    %c0_112 = arith.constant 0 : index
    %289 = vector.load %arg11[%c1_110, %c0_111, %c0_112] : memref<2x2x32xf32, #tpu.memory_space<vmem>>, vector<1x2x32xf32>
    %290 = vector.shape_cast %289 : vector<1x2x32xf32> to vector<2x32xf32>
    %c1_113 = arith.constant 1 : index
    %c0_114 = arith.constant 0 : index
    %c0_115 = arith.constant 0 : index
    %291 = vector.load %arg12[%c1_113, %c0_114, %c0_115] : memref<2x2x32xf32, #tpu.memory_space<vmem>>, vector<1x2x32xf32>
    %292 = vector.shape_cast %291 : vector<1x2x32xf32> to vector<2x32xf32>
    %c0_116 = arith.constant 0 : index
    %c0_117 = arith.constant 0 : index
    %c0_118 = arith.constant 0 : index
    %293 = vector.load %arg14[%c0_116, %c0_117, %c0_118] : memref<2x8x128xf32, #tpu.memory_space<vmem>>, vector<2x1x128xf32>
    %294 = vector.shape_cast %293 : vector<2x1x128xf32> to vector<2x128xf32>
    %cst_119 = arith.constant dense<0.000000e+00> : vector<2x128xf32>
    %295 = tpu.matmul %290, %282, %cst_119 {dimension_numbers = #tpu.dot_dimension_numbers<[1], [0], [0], [1], [0, 0, 1, 1], [], []>} : vector<2x32xf32>, vector<32x128xf32>, vector<2x128xf32> -> vector<2x128xf32>
    %296 = arith.addf %294, %295 : vector<2x128xf32>
    %297 = vector.extract_strided_slice %296 {offsets = [0, 0], sizes = [2, 32], strides = [1, 1]} : vector<2x128xf32> to vector<2x32xf32>
    %298 = arith.negf %297 : vector<2x32xf32>
    %299 = math.exp %298 : vector<2x32xf32>
    %cst_120 = arith.constant 1.000000e+00 : f32
    %300 = vector.broadcast %cst_120 : f32 to vector<2x32xf32>
    %301 = arith.addf %300, %299 : vector<2x32xf32>
    %302 = arith.divf %300, %301 : vector<2x32xf32>
    %303 = vector.extract_strided_slice %296 {offsets = [0, 32], sizes = [2, 32], strides = [1, 1]} : vector<2x128xf32> to vector<2x32xf32>
    %304 = arith.negf %303 : vector<2x32xf32>
    %305 = math.exp %304 : vector<2x32xf32>
    %cst_121 = arith.constant 1.000000e+00 : f32
    %306 = vector.broadcast %cst_121 : f32 to vector<2x32xf32>
    %307 = arith.addf %306, %305 : vector<2x32xf32>
    %308 = arith.divf %306, %307 : vector<2x32xf32>
    %309 = vector.extract_strided_slice %296 {offsets = [0, 64], sizes = [2, 32], strides = [1, 1]} : vector<2x128xf32> to vector<2x32xf32>
    %310 = math.tanh %309 : vector<2x32xf32>
    %311 = vector.extract_strided_slice %296 {offsets = [0, 96], sizes = [2, 32], strides = [1, 1]} : vector<2x128xf32> to vector<2x32xf32>
    %312 = arith.negf %311 : vector<2x32xf32>
    %313 = math.exp %312 : vector<2x32xf32>
    %cst_122 = arith.constant 1.000000e+00 : f32
    %314 = vector.broadcast %cst_122 : f32 to vector<2x32xf32>
    %315 = arith.addf %314, %313 : vector<2x32xf32>
    %316 = arith.divf %314, %315 : vector<2x32xf32>
    %317 = arith.mulf %308, %292 : vector<2x32xf32>
    %318 = arith.mulf %302, %310 : vector<2x32xf32>
    %319 = arith.addf %317, %318 : vector<2x32xf32>
    %320 = math.tanh %319 : vector<2x32xf32>
    %321 = arith.mulf %316, %320 : vector<2x32xf32>
    %322 = arith.negf %321 : vector<2x32xf32>
    %323 = math.exp %322 : vector<2x32xf32>
    %cst_123 = arith.constant 1.000000e+00 : f32
    %324 = vector.broadcast %cst_123 : f32 to vector<2x32xf32>
    %325 = arith.addf %324, %323 : vector<2x32xf32>
    %326 = arith.divf %324, %325 : vector<2x32xf32>
    %327 = arith.mulf %321, %326 : vector<2x32xf32>
    %c0_124 = arith.constant 0 : index
    %c0_125 = arith.constant 0 : index
    %c0_126 = arith.constant 0 : index
    %328 = vector.load %arg8[%c0_124, %c0_125, %c0_126] : memref<2x8x32xf32, #tpu.memory_space<vmem>>, vector<2x1x32xf32>
    %329 = vector.shape_cast %328 : vector<2x1x32xf32> to vector<2x32xf32>
    %330 = vector.shape_cast %327 : vector<2x32xf32> to vector<2x1x32xf32>
    tpu.vector_store %arg8[%c0_124, %c0_125, %c0_126], %330 {strides = array<i32>} : memref<2x8x32xf32, #tpu.memory_space<vmem>>, vector<2x1x32xf32>,
    %c0_127 = arith.constant 0 : index
    %c1_128 = arith.constant 1 : index
    %c0_129 = arith.constant 0 : index
    %331 = vector.load %arg14[%c0_127, %c1_128, %c0_129] : memref<2x8x128xf32, #tpu.memory_space<vmem>>, vector<2x1x128xf32>
    %332 = vector.shape_cast %331 : vector<2x1x128xf32> to vector<2x128xf32>
    %cst_130 = arith.constant dense<0.000000e+00> : vector<2x128xf32>
    %333 = tpu.matmul %321, %282, %cst_130 {dimension_numbers = #tpu.dot_dimension_numbers<[1], [0], [0], [1], [0, 0, 1, 1], [], []>} : vector<2x32xf32>, vector<32x128xf32>, vector<2x128xf32> -> vector<2x128xf32>
    %334 = arith.addf %332, %333 : vector<2x128xf32>
    %335 = vector.extract_strided_slice %334 {offsets = [0, 0], sizes = [2, 32], strides = [1, 1]} : vector<2x128xf32> to vector<2x32xf32>
    %336 = arith.negf %335 : vector<2x32xf32>
    %337 = math.exp %336 : vector<2x32xf32>
    %cst_131 = arith.constant 1.000000e+00 : f32
    %338 = vector.broadcast %cst_131 : f32 to vector<2x32xf32>
    %339 = arith.addf %338, %337 : vector<2x32xf32>
    %340 = arith.divf %338, %339 : vector<2x32xf32>
    %341 = vector.extract_strided_slice %334 {offsets = [0, 32], sizes = [2, 32], strides = [1, 1]} : vector<2x128xf32> to vector<2x32xf32>
    %342 = arith.negf %341 : vector<2x32xf32>
    %343 = math.exp %342 : vector<2x32xf32>
    %cst_132 = arith.constant 1.000000e+00 : f32
    %344 = vector.broadcast %cst_132 : f32 to vector<2x32xf32>
    %345 = arith.addf %344, %343 : vector<2x32xf32>
    %346 = arith.divf %344, %345 : vector<2x32xf32>
    %347 = vector.extract_strided_slice %334 {offsets = [0, 64], sizes = [2, 32], strides = [1, 1]} : vector<2x128xf32> to vector<2x32xf32>
    %348 = math.tanh %347 : vector<2x32xf32>
    %349 = vector.extract_strided_slice %334 {offsets = [0, 96], sizes = [2, 32], strides = [1, 1]} : vector<2x128xf32> to vector<2x32xf32>
    %350 = arith.negf %349 : vector<2x32xf32>
    %351 = math.exp %350 : vector<2x32xf32>
    %cst_133 = arith.constant 1.000000e+00 : f32
    %352 = vector.broadcast %cst_133 : f32 to vector<2x32xf32>
    %353 = arith.addf %352, %351 : vector<2x32xf32>
    %354 = arith.divf %352, %353 : vector<2x32xf32>
    %355 = arith.mulf %346, %319 : vector<2x32xf32>
    %356 = arith.mulf %340, %348 : vector<2x32xf32>
    %357 = arith.addf %355, %356 : vector<2x32xf32>
    %358 = math.tanh %357 : vector<2x32xf32>
    %359 = arith.mulf %354, %358 : vector<2x32xf32>
    %360 = arith.negf %359 : vector<2x32xf32>
    %361 = math.exp %360 : vector<2x32xf32>
    %cst_134 = arith.constant 1.000000e+00 : f32
    %362 = vector.broadcast %cst_134 : f32 to vector<2x32xf32>
    %363 = arith.addf %362, %361 : vector<2x32xf32>
    %364 = arith.divf %362, %363 : vector<2x32xf32>
    %365 = arith.mulf %359, %364 : vector<2x32xf32>
    %c0_135 = arith.constant 0 : index
    %c1_136 = arith.constant 1 : index
    %c0_137 = arith.constant 0 : index
    %366 = vector.load %arg8[%c0_135, %c1_136, %c0_137] : memref<2x8x32xf32, #tpu.memory_space<vmem>>, vector<2x1x32xf32>
    %367 = vector.shape_cast %366 : vector<2x1x32xf32> to vector<2x32xf32>
    %368 = vector.shape_cast %365 : vector<2x32xf32> to vector<2x1x32xf32>
    tpu.vector_store %arg8[%c0_135, %c1_136, %c0_137], %368 {strides = array<i32>} : memref<2x8x32xf32, #tpu.memory_space<vmem>>, vector<2x1x32xf32>,
    %c0_138 = arith.constant 0 : index
    %c2_139 = arith.constant 2 : index
    %c0_140 = arith.constant 0 : index
    %369 = vector.load %arg14[%c0_138, %c2_139, %c0_140] : memref<2x8x128xf32, #tpu.memory_space<vmem>>, vector<2x1x128xf32>
    %370 = vector.shape_cast %369 : vector<2x1x128xf32> to vector<2x128xf32>
    %cst_141 = arith.constant dense<0.000000e+00> : vector<2x128xf32>
    %371 = tpu.matmul %359, %282, %cst_141 {dimension_numbers = #tpu.dot_dimension_numbers<[1], [0], [0], [1], [0, 0, 1, 1], [], []>} : vector<2x32xf32>, vector<32x128xf32>, vector<2x128xf32> -> vector<2x128xf32>
    %372 = arith.addf %370, %371 : vector<2x128xf32>
    %373 = vector.extract_strided_slice %372 {offsets = [0, 0], sizes = [2, 32], strides = [1, 1]} : vector<2x128xf32> to vector<2x32xf32>
    %374 = arith.negf %373 : vector<2x32xf32>
    %375 = math.exp %374 : vector<2x32xf32>
    %cst_142 = arith.constant 1.000000e+00 : f32
    %376 = vector.broadcast %cst_142 : f32 to vector<2x32xf32>
    %377 = arith.addf %376, %375 : vector<2x32xf32>
    %378 = arith.divf %376, %377 : vector<2x32xf32>
    %379 = vector.extract_strided_slice %372 {offsets = [0, 32], sizes = [2, 32], strides = [1, 1]} : vector<2x128xf32> to vector<2x32xf32>
    %380 = arith.negf %379 : vector<2x32xf32>
    %381 = math.exp %380 : vector<2x32xf32>
    %cst_143 = arith.constant 1.000000e+00 : f32
    %382 = vector.broadcast %cst_143 : f32 to vector<2x32xf32>
    %383 = arith.addf %382, %381 : vector<2x32xf32>
    %384 = arith.divf %382, %383 : vector<2x32xf32>
    %385 = vector.extract_strided_slice %372 {offsets = [0, 64], sizes = [2, 32], strides = [1, 1]} : vector<2x128xf32> to vector<2x32xf32>
    %386 = math.tanh %385 : vector<2x32xf32>
    %387 = vector.extract_strided_slice %372 {offsets = [0, 96], sizes = [2, 32], strides = [1, 1]} : vector<2x128xf32> to vector<2x32xf32>
    %388 = arith.negf %387 : vector<2x32xf32>
    %389 = math.exp %388 : vector<2x32xf32>
    %cst_144 = arith.constant 1.000000e+00 : f32
    %390 = vector.broadcast %cst_144 : f32 to vector<2x32xf32>
    %391 = arith.addf %390, %389 : vector<2x32xf32>
    %392 = arith.divf %390, %391 : vector<2x32xf32>
    %393 = arith.mulf %384, %357 : vector<2x32xf32>
    %394 = arith.mulf %378, %386 : vector<2x32xf32>
    %395 = arith.addf %393, %394 : vector<2x32xf32>
    %396 = math.tanh %395 : vector<2x32xf32>
    %397 = arith.mulf %392, %396 : vector<2x32xf32>
    %398 = arith.negf %397 : vector<2x32xf32>
    %399 = math.exp %398 : vector<2x32xf32>
    %cst_145 = arith.constant 1.000000e+00 : f32
    %400 = vector.broadcast %cst_145 : f32 to vector<2x32xf32>
    %401 = arith.addf %400, %399 : vector<2x32xf32>
    %402 = arith.divf %400, %401 : vector<2x32xf32>
    %403 = arith.mulf %397, %402 : vector<2x32xf32>
    %c0_146 = arith.constant 0 : index
    %c2_147 = arith.constant 2 : index
    %c0_148 = arith.constant 0 : index
    %404 = vector.load %arg8[%c0_146, %c2_147, %c0_148] : memref<2x8x32xf32, #tpu.memory_space<vmem>>, vector<2x1x32xf32>
    %405 = vector.shape_cast %404 : vector<2x1x32xf32> to vector<2x32xf32>
    %406 = vector.shape_cast %403 : vector<2x32xf32> to vector<2x1x32xf32>
    tpu.vector_store %arg8[%c0_146, %c2_147, %c0_148], %406 {strides = array<i32>} : memref<2x8x32xf32, #tpu.memory_space<vmem>>, vector<2x1x32xf32>,
    %c0_149 = arith.constant 0 : index
    %c3_150 = arith.constant 3 : index
    %c0_151 = arith.constant 0 : index
    %407 = vector.load %arg14[%c0_149, %c3_150, %c0_151] : memref<2x8x128xf32, #tpu.memory_space<vmem>>, vector<2x1x128xf32>
    %408 = vector.shape_cast %407 : vector<2x1x128xf32> to vector<2x128xf32>
    %cst_152 = arith.constant dense<0.000000e+00> : vector<2x128xf32>
    %409 = tpu.matmul %397, %282, %cst_152 {dimension_numbers = #tpu.dot_dimension_numbers<[1], [0], [0], [1], [0, 0, 1, 1], [], []>} : vector<2x32xf32>, vector<32x128xf32>, vector<2x128xf32> -> vector<2x128xf32>
    %410 = arith.addf %408, %409 : vector<2x128xf32>
    %411 = vector.extract_strided_slice %410 {offsets = [0, 0], sizes = [2, 32], strides = [1, 1]} : vector<2x128xf32> to vector<2x32xf32>
    %412 = arith.negf %411 : vector<2x32xf32>
    %413 = math.exp %412 : vector<2x32xf32>
    %cst_153 = arith.constant 1.000000e+00 : f32
    %414 = vector.broadcast %cst_153 : f32 to vector<2x32xf32>
    %415 = arith.addf %414, %413 : vector<2x32xf32>
    %416 = arith.divf %414, %415 : vector<2x32xf32>
    %417 = vector.extract_strided_slice %410 {offsets = [0, 32], sizes = [2, 32], strides = [1, 1]} : vector<2x128xf32> to vector<2x32xf32>
    %418 = arith.negf %417 : vector<2x32xf32>
    %419 = math.exp %418 : vector<2x32xf32>
    %cst_154 = arith.constant 1.000000e+00 : f32
    %420 = vector.broadcast %cst_154 : f32 to vector<2x32xf32>
    %421 = arith.addf %420, %419 : vector<2x32xf32>
    %422 = arith.divf %420, %421 : vector<2x32xf32>
    %423 = vector.extract_strided_slice %410 {offsets = [0, 64], sizes = [2, 32], strides = [1, 1]} : vector<2x128xf32> to vector<2x32xf32>
    %424 = math.tanh %423 : vector<2x32xf32>
    %425 = vector.extract_strided_slice %410 {offsets = [0, 96], sizes = [2, 32], strides = [1, 1]} : vector<2x128xf32> to vector<2x32xf32>
    %426 = arith.negf %425 : vector<2x32xf32>
    %427 = math.exp %426 : vector<2x32xf32>
    %cst_155 = arith.constant 1.000000e+00 : f32
    %428 = vector.broadcast %cst_155 : f32 to vector<2x32xf32>
    %429 = arith.addf %428, %427 : vector<2x32xf32>
    %430 = arith.divf %428, %429 : vector<2x32xf32>
    %431 = arith.mulf %422, %395 : vector<2x32xf32>
    %432 = arith.mulf %416, %424 : vector<2x32xf32>
    %433 = arith.addf %431, %432 : vector<2x32xf32>
    %434 = math.tanh %433 : vector<2x32xf32>
    %435 = arith.mulf %430, %434 : vector<2x32xf32>
    %436 = arith.negf %435 : vector<2x32xf32>
    %437 = math.exp %436 : vector<2x32xf32>
    %cst_156 = arith.constant 1.000000e+00 : f32
    %438 = vector.broadcast %cst_156 : f32 to vector<2x32xf32>
    %439 = arith.addf %438, %437 : vector<2x32xf32>
    %440 = arith.divf %438, %439 : vector<2x32xf32>
    %441 = arith.mulf %435, %440 : vector<2x32xf32>
    %c0_157 = arith.constant 0 : index
    %c3_158 = arith.constant 3 : index
    %c0_159 = arith.constant 0 : index
    %442 = vector.load %arg8[%c0_157, %c3_158, %c0_159] : memref<2x8x32xf32, #tpu.memory_space<vmem>>, vector<2x1x32xf32>
    %443 = vector.shape_cast %442 : vector<2x1x32xf32> to vector<2x32xf32>
    %444 = vector.shape_cast %441 : vector<2x32xf32> to vector<2x1x32xf32>
    tpu.vector_store %arg8[%c0_157, %c3_158, %c0_159], %444 {strides = array<i32>} : memref<2x8x32xf32, #tpu.memory_space<vmem>>, vector<2x1x32xf32>,
    %c0_160 = arith.constant 0 : index
    %c4_161 = arith.constant 4 : index
    %c0_162 = arith.constant 0 : index
    %445 = vector.load %arg14[%c0_160, %c4_161, %c0_162] : memref<2x8x128xf32, #tpu.memory_space<vmem>>, vector<2x1x128xf32>
    %446 = vector.shape_cast %445 : vector<2x1x128xf32> to vector<2x128xf32>
    %cst_163 = arith.constant dense<0.000000e+00> : vector<2x128xf32>
    %447 = tpu.matmul %435, %282, %cst_163 {dimension_numbers = #tpu.dot_dimension_numbers<[1], [0], [0], [1], [0, 0, 1, 1], [], []>} : vector<2x32xf32>, vector<32x128xf32>, vector<2x128xf32> -> vector<2x128xf32>
    %448 = arith.addf %446, %447 : vector<2x128xf32>
    %449 = vector.extract_strided_slice %448 {offsets = [0, 0], sizes = [2, 32], strides = [1, 1]} : vector<2x128xf32> to vector<2x32xf32>
    %450 = arith.negf %449 : vector<2x32xf32>
    %451 = math.exp %450 : vector<2x32xf32>
    %cst_164 = arith.constant 1.000000e+00 : f32
    %452 = vector.broadcast %cst_164 : f32 to vector<2x32xf32>
    %453 = arith.addf %452, %451 : vector<2x32xf32>
    %454 = arith.divf %452, %453 : vector<2x32xf32>
    %455 = vector.extract_strided_slice %448 {offsets = [0, 32], sizes = [2, 32], strides = [1, 1]} : vector<2x128xf32> to vector<2x32xf32>
    %456 = arith.negf %455 : vector<2x32xf32>
    %457 = math.exp %456 : vector<2x32xf32>
    %cst_165 = arith.constant 1.000000e+00 : f32
    %458 = vector.broadcast %cst_165 : f32 to vector<2x32xf32>
    %459 = arith.addf %458, %457 : vector<2x32xf32>
    %460 = arith.divf %458, %459 : vector<2x32xf32>
    %461 = vector.extract_strided_slice %448 {offsets = [0, 64], sizes = [2, 32], strides = [1, 1]} : vector<2x128xf32> to vector<2x32xf32>
    %462 = math.tanh %461 : vector<2x32xf32>
    %463 = vector.extract_strided_slice %448 {offsets = [0, 96], sizes = [2, 32], strides = [1, 1]} : vector<2x128xf32> to vector<2x32xf32>
    %464 = arith.negf %463 : vector<2x32xf32>
    %465 = math.exp %464 : vector<2x32xf32>
    %cst_166 = arith.constant 1.000000e+00 : f32
    %466 = vector.broadcast %cst_166 : f32 to vector<2x32xf32>
    %467 = arith.addf %466, %465 : vector<2x32xf32>
    %468 = arith.divf %466, %467 : vector<2x32xf32>
    %469 = arith.mulf %460, %433 : vector<2x32xf32>
    %470 = arith.mulf %454, %462 : vector<2x32xf32>
    %471 = arith.addf %469, %470 : vector<2x32xf32>
    %472 = math.tanh %471 : vector<2x32xf32>
    %473 = arith.mulf %468, %472 : vector<2x32xf32>
    %474 = arith.negf %473 : vector<2x32xf32>
    %475 = math.exp %474 : vector<2x32xf32>
    %cst_167 = arith.constant 1.000000e+00 : f32
    %476 = vector.broadcast %cst_167 : f32 to vector<2x32xf32>
    %477 = arith.addf %476, %475 : vector<2x32xf32>
    %478 = arith.divf %476, %477 : vector<2x32xf32>
    %479 = arith.mulf %473, %478 : vector<2x32xf32>
    %c0_168 = arith.constant 0 : index
    %c4_169 = arith.constant 4 : index
    %c0_170 = arith.constant 0 : index
    %480 = vector.load %arg8[%c0_168, %c4_169, %c0_170] : memref<2x8x32xf32, #tpu.memory_space<vmem>>, vector<2x1x32xf32>
    %481 = vector.shape_cast %480 : vector<2x1x32xf32> to vector<2x32xf32>
    %482 = vector.shape_cast %479 : vector<2x32xf32> to vector<2x1x32xf32>
    tpu.vector_store %arg8[%c0_168, %c4_169, %c0_170], %482 {strides = array<i32>} : memref<2x8x32xf32, #tpu.memory_space<vmem>>, vector<2x1x32xf32>,
    %c0_171 = arith.constant 0 : index
    %c5_172 = arith.constant 5 : index
    %c0_173 = arith.constant 0 : index
    %483 = vector.load %arg14[%c0_171, %c5_172, %c0_173] : memref<2x8x128xf32, #tpu.memory_space<vmem>>, vector<2x1x128xf32>
    %484 = vector.shape_cast %483 : vector<2x1x128xf32> to vector<2x128xf32>
    %cst_174 = arith.constant dense<0.000000e+00> : vector<2x128xf32>
    %485 = tpu.matmul %473, %282, %cst_174 {dimension_numbers = #tpu.dot_dimension_numbers<[1], [0], [0], [1], [0, 0, 1, 1], [], []>} : vector<2x32xf32>, vector<32x128xf32>, vector<2x128xf32> -> vector<2x128xf32>
    %486 = arith.addf %484, %485 : vector<2x128xf32>
    %487 = vector.extract_strided_slice %486 {offsets = [0, 0], sizes = [2, 32], strides = [1, 1]} : vector<2x128xf32> to vector<2x32xf32>
    %488 = arith.negf %487 : vector<2x32xf32>
    %489 = math.exp %488 : vector<2x32xf32>
    %cst_175 = arith.constant 1.000000e+00 : f32
    %490 = vector.broadcast %cst_175 : f32 to vector<2x32xf32>
    %491 = arith.addf %490, %489 : vector<2x32xf32>
    %492 = arith.divf %490, %491 : vector<2x32xf32>
    %493 = vector.extract_strided_slice %486 {offsets = [0, 32], sizes = [2, 32], strides = [1, 1]} : vector<2x128xf32> to vector<2x32xf32>
    %494 = arith.negf %493 : vector<2x32xf32>
    %495 = math.exp %494 : vector<2x32xf32>
    %cst_176 = arith.constant 1.000000e+00 : f32
    %496 = vector.broadcast %cst_176 : f32 to vector<2x32xf32>
    %497 = arith.addf %496, %495 : vector<2x32xf32>
    %498 = arith.divf %496, %497 : vector<2x32xf32>
    %499 = vector.extract_strided_slice %486 {offsets = [0, 64], sizes = [2, 32], strides = [1, 1]} : vector<2x128xf32> to vector<2x32xf32>
    %500 = math.tanh %499 : vector<2x32xf32>
    %501 = vector.extract_strided_slice %486 {offsets = [0, 96], sizes = [2, 32], strides = [1, 1]} : vector<2x128xf32> to vector<2x32xf32>
    %502 = arith.negf %501 : vector<2x32xf32>
    %503 = math.exp %502 : vector<2x32xf32>
    %cst_177 = arith.constant 1.000000e+00 : f32
    %504 = vector.broadcast %cst_177 : f32 to vector<2x32xf32>
    %505 = arith.addf %504, %503 : vector<2x32xf32>
    %506 = arith.divf %504, %505 : vector<2x32xf32>
    %507 = arith.mulf %498, %471 : vector<2x32xf32>
    %508 = arith.mulf %492, %500 : vector<2x32xf32>
    %509 = arith.addf %507, %508 : vector<2x32xf32>
    %510 = math.tanh %509 : vector<2x32xf32>
    %511 = arith.mulf %506, %510 : vector<2x32xf32>
    %512 = arith.negf %511 : vector<2x32xf32>
    %513 = math.exp %512 : vector<2x32xf32>
    %cst_178 = arith.constant 1.000000e+00 : f32
    %514 = vector.broadcast %cst_178 : f32 to vector<2x32xf32>
    %515 = arith.addf %514, %513 : vector<2x32xf32>
    %516 = arith.divf %514, %515 : vector<2x32xf32>
    %517 = arith.mulf %511, %516 : vector<2x32xf32>
    %c0_179 = arith.constant 0 : index
    %c5_180 = arith.constant 5 : index
    %c0_181 = arith.constant 0 : index
    %518 = vector.load %arg8[%c0_179, %c5_180, %c0_181] : memref<2x8x32xf32, #tpu.memory_space<vmem>>, vector<2x1x32xf32>
    %519 = vector.shape_cast %518 : vector<2x1x32xf32> to vector<2x32xf32>
    %520 = vector.shape_cast %517 : vector<2x32xf32> to vector<2x1x32xf32>
    tpu.vector_store %arg8[%c0_179, %c5_180, %c0_181], %520 {strides = array<i32>} : memref<2x8x32xf32, #tpu.memory_space<vmem>>, vector<2x1x32xf32>,
    %c0_182 = arith.constant 0 : index
    %c6_183 = arith.constant 6 : index
    %c0_184 = arith.constant 0 : index
    %521 = vector.load %arg14[%c0_182, %c6_183, %c0_184] : memref<2x8x128xf32, #tpu.memory_space<vmem>>, vector<2x1x128xf32>
    %522 = vector.shape_cast %521 : vector<2x1x128xf32> to vector<2x128xf32>
    %cst_185 = arith.constant dense<0.000000e+00> : vector<2x128xf32>
    %523 = tpu.matmul %511, %282, %cst_185 {dimension_numbers = #tpu.dot_dimension_numbers<[1], [0], [0], [1], [0, 0, 1, 1], [], []>} : vector<2x32xf32>, vector<32x128xf32>, vector<2x128xf32> -> vector<2x128xf32>
    %524 = arith.addf %522, %523 : vector<2x128xf32>
    %525 = vector.extract_strided_slice %524 {offsets = [0, 0], sizes = [2, 32], strides = [1, 1]} : vector<2x128xf32> to vector<2x32xf32>
    %526 = arith.negf %525 : vector<2x32xf32>
    %527 = math.exp %526 : vector<2x32xf32>
    %cst_186 = arith.constant 1.000000e+00 : f32
    %528 = vector.broadcast %cst_186 : f32 to vector<2x32xf32>
    %529 = arith.addf %528, %527 : vector<2x32xf32>
    %530 = arith.divf %528, %529 : vector<2x32xf32>
    %531 = vector.extract_strided_slice %524 {offsets = [0, 32], sizes = [2, 32], strides = [1, 1]} : vector<2x128xf32> to vector<2x32xf32>
    %532 = arith.negf %531 : vector<2x32xf32>
    %533 = math.exp %532 : vector<2x32xf32>
    %cst_187 = arith.constant 1.000000e+00 : f32
    %534 = vector.broadcast %cst_187 : f32 to vector<2x32xf32>
    %535 = arith.addf %534, %533 : vector<2x32xf32>
    %536 = arith.divf %534, %535 : vector<2x32xf32>
    %537 = vector.extract_strided_slice %524 {offsets = [0, 64], sizes = [2, 32], strides = [1, 1]} : vector<2x128xf32> to vector<2x32xf32>
    %538 = math.tanh %537 : vector<2x32xf32>
    %539 = vector.extract_strided_slice %524 {offsets = [0, 96], sizes = [2, 32], strides = [1, 1]} : vector<2x128xf32> to vector<2x32xf32>
    %540 = arith.negf %539 : vector<2x32xf32>
    %541 = math.exp %540 : vector<2x32xf32>
    %cst_188 = arith.constant 1.000000e+00 : f32
    %542 = vector.broadcast %cst_188 : f32 to vector<2x32xf32>
    %543 = arith.addf %542, %541 : vector<2x32xf32>
    %544 = arith.divf %542, %543 : vector<2x32xf32>
    %545 = arith.mulf %536, %509 : vector<2x32xf32>
    %546 = arith.mulf %530, %538 : vector<2x32xf32>
    %547 = arith.addf %545, %546 : vector<2x32xf32>
    %548 = math.tanh %547 : vector<2x32xf32>
    %549 = arith.mulf %544, %548 : vector<2x32xf32>
    %550 = arith.negf %549 : vector<2x32xf32>
    %551 = math.exp %550 : vector<2x32xf32>
    %cst_189 = arith.constant 1.000000e+00 : f32
    %552 = vector.broadcast %cst_189 : f32 to vector<2x32xf32>
    %553 = arith.addf %552, %551 : vector<2x32xf32>
    %554 = arith.divf %552, %553 : vector<2x32xf32>
    %555 = arith.mulf %549, %554 : vector<2x32xf32>
    %c0_190 = arith.constant 0 : index
    %c6_191 = arith.constant 6 : index
    %c0_192 = arith.constant 0 : index
    %556 = vector.load %arg8[%c0_190, %c6_191, %c0_192] : memref<2x8x32xf32, #tpu.memory_space<vmem>>, vector<2x1x32xf32>
    %557 = vector.shape_cast %556 : vector<2x1x32xf32> to vector<2x32xf32>
    %558 = vector.shape_cast %555 : vector<2x32xf32> to vector<2x1x32xf32>
    tpu.vector_store %arg8[%c0_190, %c6_191, %c0_192], %558 {strides = array<i32>} : memref<2x8x32xf32, #tpu.memory_space<vmem>>, vector<2x1x32xf32>,
    %c0_193 = arith.constant 0 : index
    %c7_194 = arith.constant 7 : index
    %c0_195 = arith.constant 0 : index
    %559 = vector.load %arg14[%c0_193, %c7_194, %c0_195] : memref<2x8x128xf32, #tpu.memory_space<vmem>>, vector<2x1x128xf32>
    %560 = vector.shape_cast %559 : vector<2x1x128xf32> to vector<2x128xf32>
    %cst_196 = arith.constant dense<0.000000e+00> : vector<2x128xf32>
    %561 = tpu.matmul %549, %282, %cst_196 {dimension_numbers = #tpu.dot_dimension_numbers<[1], [0], [0], [1], [0, 0, 1, 1], [], []>} : vector<2x32xf32>, vector<32x128xf32>, vector<2x128xf32> -> vector<2x128xf32>
    %562 = arith.addf %560, %561 : vector<2x128xf32>
    %563 = vector.extract_strided_slice %562 {offsets = [0, 0], sizes = [2, 32], strides = [1, 1]} : vector<2x128xf32> to vector<2x32xf32>
    %564 = arith.negf %563 : vector<2x32xf32>
    %565 = math.exp %564 : vector<2x32xf32>
    %cst_197 = arith.constant 1.000000e+00 : f32
    %566 = vector.broadcast %cst_197 : f32 to vector<2x32xf32>
    %567 = arith.addf %566, %565 : vector<2x32xf32>
    %568 = arith.divf %566, %567 : vector<2x32xf32>
    %569 = vector.extract_strided_slice %562 {offsets = [0, 32], sizes = [2, 32], strides = [1, 1]} : vector<2x128xf32> to vector<2x32xf32>
    %570 = arith.negf %569 : vector<2x32xf32>
    %571 = math.exp %570 : vector<2x32xf32>
    %cst_198 = arith.constant 1.000000e+00 : f32
    %572 = vector.broadcast %cst_198 : f32 to vector<2x32xf32>
    %573 = arith.addf %572, %571 : vector<2x32xf32>
    %574 = arith.divf %572, %573 : vector<2x32xf32>
    %575 = vector.extract_strided_slice %562 {offsets = [0, 64], sizes = [2, 32], strides = [1, 1]} : vector<2x128xf32> to vector<2x32xf32>
    %576 = math.tanh %575 : vector<2x32xf32>
    %577 = vector.extract_strided_slice %562 {offsets = [0, 96], sizes = [2, 32], strides = [1, 1]} : vector<2x128xf32> to vector<2x32xf32>
    %578 = arith.negf %577 : vector<2x32xf32>
    %579 = math.exp %578 : vector<2x32xf32>
    %cst_199 = arith.constant 1.000000e+00 : f32
    %580 = vector.broadcast %cst_199 : f32 to vector<2x32xf32>
    %581 = arith.addf %580, %579 : vector<2x32xf32>
    %582 = arith.divf %580, %581 : vector<2x32xf32>
    %583 = arith.mulf %574, %547 : vector<2x32xf32>
    %584 = arith.mulf %568, %576 : vector<2x32xf32>
    %585 = arith.addf %583, %584 : vector<2x32xf32>
    %586 = math.tanh %585 : vector<2x32xf32>
    %587 = arith.mulf %582, %586 : vector<2x32xf32>
    %588 = arith.negf %587 : vector<2x32xf32>
    %589 = math.exp %588 : vector<2x32xf32>
    %cst_200 = arith.constant 1.000000e+00 : f32
    %590 = vector.broadcast %cst_200 : f32 to vector<2x32xf32>
    %591 = arith.addf %590, %589 : vector<2x32xf32>
    %592 = arith.divf %590, %591 : vector<2x32xf32>
    %593 = arith.mulf %587, %592 : vector<2x32xf32>
    %c0_201 = arith.constant 0 : index
    %c7_202 = arith.constant 7 : index
    %c0_203 = arith.constant 0 : index
    %594 = vector.load %arg8[%c0_201, %c7_202, %c0_203] : memref<2x8x32xf32, #tpu.memory_space<vmem>>, vector<2x1x32xf32>
    %595 = vector.shape_cast %594 : vector<2x1x32xf32> to vector<2x32xf32>
    %596 = vector.shape_cast %593 : vector<2x32xf32> to vector<2x1x32xf32>
    tpu.vector_store %arg8[%c0_201, %c7_202, %c0_203], %596 {strides = array<i32>} : memref<2x8x32xf32, #tpu.memory_space<vmem>>, vector<2x1x32xf32>,
    %c1_204 = arith.constant 1 : index
    %c0_205 = arith.constant 0 : index
    %c0_206 = arith.constant 0 : index
    %597 = vector.load %arg11[%c1_204, %c0_205, %c0_206] : memref<2x2x32xf32, #tpu.memory_space<vmem>>, vector<1x2x32xf32>
    %598 = vector.shape_cast %597 : vector<1x2x32xf32> to vector<2x32xf32>
    %599 = vector.shape_cast %587 : vector<2x32xf32> to vector<1x2x32xf32>
    tpu.vector_store %arg11[%c1_204, %c0_205, %c0_206], %599 {strides = array<i32>} : memref<2x2x32xf32, #tpu.memory_space<vmem>>, vector<1x2x32xf32>,
    %c1_207 = arith.constant 1 : index
    %c0_208 = arith.constant 0 : index
    %c0_209 = arith.constant 0 : index
    %600 = vector.load %arg12[%c1_207, %c0_208, %c0_209] : memref<2x2x32xf32, #tpu.memory_space<vmem>>, vector<1x2x32xf32>
    %601 = vector.shape_cast %600 : vector<1x2x32xf32> to vector<2x32xf32>
    %602 = vector.shape_cast %585 : vector<2x32xf32> to vector<1x2x32xf32>
    tpu.vector_store %arg12[%c1_207, %c0_208, %c0_209], %602 {strides = array<i32>} : memref<2x2x32xf32, #tpu.memory_space<vmem>>, vector<1x2x32xf32>,
    %c0_210 = arith.constant 0 : index
    %c0_211 = arith.constant 0 : index
    %c0_212 = arith.constant 0 : index
    %603 = vector.load %arg8[%c0_210, %c0_211, %c0_212] : memref<2x8x32xf32, #tpu.memory_space<vmem>>, vector<2x8x32xf32>
    %604 = vector.shape_cast %603 : vector<2x8x32xf32> to vector<16x32xf32>
    %c0_213 = arith.constant 0 : index
    %c0_214 = arith.constant 0 : index
    %605 = vector.load %arg9[%c0_213, %c0_214] : memref<1x32xf32, #tpu.memory_space<vmem>>, vector<1x32xf32>
    %cst_215 = arith.constant dense<0.000000e+00> : vector<32xf32>
    %606 = vector.multi_reduction <add>, %604, %cst_215 [0] : vector<16x32xf32> to vector<32xf32>
    %607 = vector.shape_cast %606 : vector<32xf32> to vector<1x32xf32>
    %608 = arith.addf %605, %607 : vector<1x32xf32>
    %c0_216 = arith.constant 0 : index
    %c0_217 = arith.constant 0 : index
    %609 = vector.load %arg9[%c0_216, %c0_217] : memref<1x32xf32, #tpu.memory_space<vmem>>, vector<1x32xf32>
    tpu.vector_store %arg9[%c0_216, %c0_217], %608 {strides = array<i32>} : memref<1x32xf32, #tpu.memory_space<vmem>>, vector<1x32xf32>,
    %c0_218 = arith.constant 0 : index
    %c0_219 = arith.constant 0 : index
    %610 = vector.load %arg10[%c0_218, %c0_219] : memref<1x32xf32, #tpu.memory_space<vmem>>, vector<1x32xf32>
    %611 = arith.mulf %604, %604 : vector<16x32xf32>
    %cst_220 = arith.constant dense<0.000000e+00> : vector<32xf32>
    %612 = vector.multi_reduction <add>, %611, %cst_220 [0] : vector<16x32xf32> to vector<32xf32>
    %613 = vector.shape_cast %612 : vector<32xf32> to vector<1x32xf32>
    %614 = arith.addf %610, %613 : vector<1x32xf32>
    %c0_221 = arith.constant 0 : index
    %c0_222 = arith.constant 0 : index
    %615 = vector.load %arg10[%c0_221, %c0_222] : memref<1x32xf32, #tpu.memory_space<vmem>>, vector<1x32xf32>
    tpu.vector_store %arg10[%c0_221, %c0_222], %614 {strides = array<i32>} : memref<1x32xf32, #tpu.memory_space<vmem>>, vector<1x32xf32>,
    %c1_i32 = arith.constant 1 : i32
    %616 = arith.cmpi eq, %arg0, %c1_i32 : i32
    %617 = arith.extui %616 : i1 to i32
    %c0_i32_223 = arith.constant 0 : i32
    %618 = arith.cmpi ne, %617, %c0_i32_223 : i32
    scf.if %618 {
      %c0_224 = arith.constant 0 : index
      %c0_225 = arith.constant 0 : index
      %619 = vector.load %arg9[%c0_224, %c0_225] : memref<1x32xf32, #tpu.memory_space<vmem>>, vector<1x32xf32>
      %cst_226 = arith.constant 3.125000e-02 : f32
      %620 = vector.broadcast %cst_226 : f32 to vector<1x32xf32>
      %621 = arith.mulf %619, %620 : vector<1x32xf32>
      %c0_227 = arith.constant 0 : index
      %c0_228 = arith.constant 0 : index
      %622 = vector.load %arg10[%c0_227, %c0_228] : memref<1x32xf32, #tpu.memory_space<vmem>>, vector<1x32xf32>
      %cst_229 = arith.constant 3.125000e-02 : f32
      %623 = vector.broadcast %cst_229 : f32 to vector<1x32xf32>
      %624 = arith.mulf %622, %623 : vector<1x32xf32>
      %625 = arith.mulf %621, %621 : vector<1x32xf32>
      %626 = arith.subf %624, %625 : vector<1x32xf32>
      %c0_230 = arith.constant 0 : index
      %c0_231 = arith.constant 0 : index
      %627 = vector.load %arg9[%c0_230, %c0_231] : memref<1x32xf32, #tpu.memory_space<vmem>>, vector<1x32xf32>
      tpu.vector_store %arg9[%c0_230, %c0_231], %621 {strides = array<i32>} : memref<1x32xf32, #tpu.memory_space<vmem>>, vector<1x32xf32>,
      %c0_232 = arith.constant 0 : index
      %c0_233 = arith.constant 0 : index
      %628 = vector.load %arg10[%c0_232, %c0_233] : memref<1x32xf32, #tpu.memory_space<vmem>>, vector<1x32xf32>
      tpu.vector_store %arg10[%c0_232, %c0_233], %626 {strides = array<i32>} : memref<1x32xf32, #tpu.memory_space<vmem>>, vector<1x32xf32>,
    } else {
    }
    return
  }
  func.func @transform_0(%arg0: i32) -> (i32, i32, i32) {
    %c0_i32 = arith.constant 0 : i32
    %c0_i32_0 = arith.constant 0 : i32
    %c0_i32_1 = arith.constant 0 : i32
    return %c0_i32, %arg0, %c0_i32_0 : i32, i32, i32
  }
  func.func @transform_1(%arg0: i32) -> (i32, i32) {
    %c0_i32 = arith.constant 0 : i32
    %c0_i32_0 = arith.constant 0 : i32
    %c0_i32_1 = arith.constant 0 : i32
    return %c0_i32, %c0_i32_0 : i32, i32
  }
  func.func @transform_2(%arg0: i32) -> (i32, i32) {
    %c0_i32 = arith.constant 0 : i32
    %c0_i32_0 = arith.constant 0 : i32
    %c0_i32_1 = arith.constant 0 : i32
    return %c0_i32, %c0_i32_0 : i32, i32
  }
  func.func @transform_3(%arg0: i32) -> (i32, i32) {
    %c0_i32 = arith.constant 0 : i32
    %c0_i32_0 = arith.constant 0 : i32
    %c0_i32_1 = arith.constant 0 : i32
    return %c0_i32, %c0_i32_0 : i32, i32
  }
  func.func @transform_4(%arg0: i32) -> (i32, i32) {
    %c0_i32 = arith.constant 0 : i32
    %c0_i32_0 = arith.constant 0 : i32
    %c0_i32_1 = arith.constant 0 : i32
    return %c0_i32, %c0_i32_0 : i32, i32
  }
  func.func @transform_5(%arg0: i32) -> (i32, i32) {
    %c0_i32 = arith.constant 0 : i32
    %c0_i32_0 = arith.constant 0 : i32
    %c0_i32_1 = arith.constant 0 : i32
    return %c0_i32, %c0_i32_0 : i32, i32
  }
  func.func @transform_6(%arg0: i32) -> (i32, i32) {
    %c0_i32 = arith.constant 0 : i32
    %c0_i32_0 = arith.constant 0 : i32
    %c0_i32_1 = arith.constant 0 : i32
    return %c0_i32, %c0_i32_0 : i32, i32
  }
  func.func @transform_7(%arg0: i32) -> (i32, i32, i32) {
    %c0_i32 = arith.constant 0 : i32
    %c0_i32_0 = arith.constant 0 : i32
    %c0_i32_1 = arith.constant 0 : i32
    return %c0_i32, %arg0, %c0_i32_0 : i32, i32, i32
  }
  func.func @transform_8(%arg0: i32) -> (i32, i32) {
    %c0_i32 = arith.constant 0 : i32
    %c0_i32_0 = arith.constant 0 : i32
    %c0_i32_1 = arith.constant 0 : i32
    return %c0_i32, %c0_i32_0 : i32, i32
  }
  func.func @transform_9(%arg0: i32) -> (i32, i32) {
    %c0_i32 = arith.constant 0 : i32
    %c0_i32_0 = arith.constant 0 : i32
    %c0_i32_1 = arith.constant 0 : i32
    return %c0_i32, %c0_i32_0 : i32, i32
  }
}

module attributes {stable_mosaic.version = 11 : i64} {
  func.func @_head_kernel(%arg0: i32, %arg1: memref<2x8x32xf32, #tpu.memory_space<vmem>>, %arg2: memref<32x40xf32, #tpu.memory_space<vmem>>, %arg3: memref<1x40xf32, #tpu.memory_space<vmem>>, %arg4: memref<2x8x40xf32, #tpu.memory_space<vmem>>) attributes {dimension_semantics = [#tpu.dimension_semantics<parallel>], iteration_bounds = array<i64: 2>, scalar_prefetch = 0 : i64, scratch_operands = 0 : i64, tpu.core_type = #tpu.core_type<tc>, window_params = [{transform_indices = @transform_0, window_bounds = array<i64: 2, 8, 32>}, {pipeline_mode = #tpu.pipeline_mode<synchronous>, transform_indices = @transform_1, window_bounds = array<i64: 32, 40>}, {pipeline_mode = #tpu.pipeline_mode<synchronous>, transform_indices = @transform_2, window_bounds = array<i64: 1, 40>}, {transform_indices = @transform_3, window_bounds = array<i64: 2, 8, 40>}]} {
    %c0 = arith.constant 0 : index
    %c0_0 = arith.constant 0 : index
    %c0_1 = arith.constant 0 : index
    %0 = vector.load %arg1[%c0, %c0_0, %c0_1] : memref<2x8x32xf32, #tpu.memory_space<vmem>>, vector<2x8x32xf32>
    %1 = vector.shape_cast %0 : vector<2x8x32xf32> to vector<16x32xf32>
    %c0_2 = arith.constant 0 : index
    %c0_3 = arith.constant 0 : index
    %2 = vector.load %arg2[%c0_2, %c0_3] : memref<32x40xf32, #tpu.memory_space<vmem>>, vector<32x40xf32>
    %cst = arith.constant dense<0.000000e+00> : vector<16x40xf32>
    %3 = tpu.matmul %1, %2, %cst {dimension_numbers = #tpu.dot_dimension_numbers<[1], [0], [0], [1], [0, 0, 1, 1], [], []>} : vector<16x32xf32>, vector<32x40xf32>, vector<16x40xf32> -> vector<16x40xf32>
    %c0_4 = arith.constant 0 : index
    %c0_5 = arith.constant 0 : index
    %4 = vector.load %arg3[%c0_4, %c0_5] : memref<1x40xf32, #tpu.memory_space<vmem>>, vector<1x40xf32>
    %5 = vector.broadcast %4 : vector<1x40xf32> to vector<16x40xf32>
    %6 = arith.addf %3, %5 : vector<16x40xf32>
    %7 = vector.shape_cast %6 : vector<16x40xf32> to vector<2x8x40xf32>
    %c0_6 = arith.constant 0 : index
    %c0_7 = arith.constant 0 : index
    %c0_8 = arith.constant 0 : index
    %8 = vector.load %arg4[%c0_6, %c0_7, %c0_8] : memref<2x8x40xf32, #tpu.memory_space<vmem>>, vector<2x8x40xf32>
    tpu.vector_store %arg4[%c0_6, %c0_7, %c0_8], %7 {strides = array<i32>} : memref<2x8x40xf32, #tpu.memory_space<vmem>>, vector<2x8x40xf32>,
    return
  }
  func.func @transform_0(%arg0: i32) -> (i32, i32, i32) {
    %c0_i32 = arith.constant 0 : i32
    %c0_i32_0 = arith.constant 0 : i32
    %c0_i32_1 = arith.constant 0 : i32
    return %c0_i32, %arg0, %c0_i32_0 : i32, i32, i32
  }
  func.func @transform_1(%arg0: i32) -> (i32, i32) {
    %c0_i32 = arith.constant 0 : i32
    %c0_i32_0 = arith.constant 0 : i32
    %c0_i32_1 = arith.constant 0 : i32
    return %c0_i32, %c0_i32_0 : i32, i32
  }
  func.func @transform_2(%arg0: i32) -> (i32, i32) {
    %c0_i32 = arith.constant 0 : i32
    %c0_i32_0 = arith.constant 0 : i32
    %c0_i32_1 = arith.constant 0 : i32
    return %c0_i32, %c0_i32_0 : i32, i32
  }
  func.func @transform_3(%arg0: i32) -> (i32, i32, i32) {
    %c0_i32 = arith.constant 0 : i32
    %c0_i32_0 = arith.constant 0 : i32
    %c0_i32_1 = arith.constant 0 : i32
    return %c0_i32, %arg0, %c0_i32_0 : i32, i32, i32
  }
}

</mosaic_0001>

<llo_original>
// kernel: decoder_forward.3
$region0: #{decoder_forward.3}
  #allocation0 [shape = 'u32[]', space=smem, size = 0x4, offset = 0x4, fixed_abs, tag = 'smem constant byte address 0x4 - core index']
  #allocation1 [shape = 'u32[72,128]{1,0:T(1,128)}', space=vmem, size = 0x9000, scoped, tag = 'internal scratch']
  %s0 = inlined_call_operand.vmem [shape: f32[2,16,32], index: 0, kind: input, shape index: {}]
  %s1 = inlined_call_operand.vmem [shape: f32[32,40], index: 1, kind: input, shape index: {}]
  %s2 = inlined_call_operand.vmem [shape: f32[1,40], index: 2, kind: input, shape index: {}]
  %s3 = inlined_call_operand.hbm [shape: f32[2,16,40], index: 3, kind: output, shape index: {}]
  %s4 = sld [smem:[#allocation0]]
  $region83: #{decoder_forward.3} parent=0
    _
  %s6 = ssub.s32 1, %s4
  %s7 = scalar_select 0, %s6, %s4
  $region1: #{decoder_forward.3} parent=0
    #allocation2 [shape = 'u8[16384]{0}', space=vmem, size = 0x4000, scoped, tag = 'input window, operand 0']
    #allocation3 [shape = 'u8[16384]{0}', space=vmem, size = 0x4000, scoped, tag = 'output window, operand 0']
    #allocation4 [shape = 's32[2]{0}', space=sflag, size = 0x8, scoped, tag = 'scoped memory for decoder_forward.3']
    %8 = vsyncpa [#allocation4], 0
    %s9 = scalar_lea.sflag [#allocation4], 1
    %10 = vsyncpa %s9, 0
    loop: start=0, step=1, limit=4
    $region2: #{decoder_forward.3} parent=1 // loop_pre_header
      _
    $region3: #{decoder_forward.3} parent=1 // loop_header
      %s12 = sphi 0, %s16
      %p13 = scmp.ge.s32.totalorder %s12, 4
      %s22 = sphi 0, %s24
      %s25 = sphi 0, %s22
      %s26 = sphi 0, %s25
      %s42 = sphi 0, %s26
      %s46 = sphi 0, %s46
      %s48 = sphi 0, %s46
      %s49 = sphi 0, %s48
      %s63 = sphi 0, %s49
      %s67 = sphi 0, %s67
      %s69 = sphi 0, %s67
      %s70 = sphi 0, %s69
      %s84 = sphi 0, %s70
      %s90 = sphi 0, %s92
      %s93 = sphi 0, %s90
      %s94 = sphi 0, %s93
      %s110 = sphi 0, %s94
    $region4: #{decoder_forward.3} parent=1 // loop_header_branch
      %15 = sbr.rel (%p13) target = $region8
    $region5: #{decoder_forward.3} parent=1 // loop_body
      %s17 = ssub.s32 %s12, 1
      %s18 = ssub.s32 %s12, 2
      %s19 = sadd.s32 %s12, 1
      %s20 = ssub.s32 %s12, %s19
      %p21 = scmp.eq.s32.totalorder %s20, 0
      %s23 = sadd.s32 %s22, 1
      %s24 = scalar_select %p21, %s22, %s23
      %p27 = pneg %p21
      %p28 = scmp.eq.s32.totalorder %s12, 1
      %p29 = por %p27, %p28
      %p30 = scmp.ne.s32.totalorder %s22, %s25
      %p31 = scmp.eq.s32.totalorder %s12, 0
      %p32 = por %p30, %p31
      %p33 = scmp.ne.s32.totalorder %s22, %s25
      %p34 = scmp.eq.s32.totalorder %s17, 1
      %p35 = por %p33, %p34
      %p36 = scmp.ne.s32.totalorder %s25, %s26
      %p37 = scmp.eq.s32.totalorder %s17, 0
      %p38 = por %p36, %p37
      %p39 = scmp.ne.s32.totalorder %s25, %s26
      %p40 = scmp.eq.s32.totalorder %s18, 1
      %p41 = por %p39, %p40
      %p43 = scmp.ne.s32.totalorder %s26, %s42
      %p44 = scmp.eq.s32.totalorder %s18, 0
      %p45 = por %p43, %p44
      %s47 = sadd.s32 %s46, 1
      %p50 = scmp.eq.s32.totalorder %s12, 1
      %p51 = scmp.ne.s32.totalorder %s46, %s48
      %p52 = scmp.eq.s32.totalorder %s12, 0
      %p53 = por %p51, %p52
      %p54 = scmp.ne.s32.totalorder %s46, %s48
      %p55 = scmp.eq.s32.totalorder %s17, 1
      %p56 = por %p54, %p55
      %p57 = scmp.ne.s32.totalorder %s48, %s49
      %p58 = scmp.eq.s32.totalorder %s17, 0
      %p59 = por %p57, %p58
      %p60 = scmp.ne.s32.totalorder %s48, %s49
      %p61 = scmp.eq.s32.totalorder %s18, 1
      %p62 = por %p60, %p61
      %p64 = scmp.ne.s32.totalorder %s49, %s63
      %p65 = scmp.eq.s32.totalorder %s18, 0
      %p66 = por %p64, %p65
      %s68 = sadd.s32 %s67, 1
      %p71 = scmp.eq.s32.totalorder %s12, 1
      %p72 = scmp.ne.s32.totalorder %s67, %s69
      %p73 = scmp.eq.s32.totalorder %s12, 0
      %p74 = por %p72, %p73
      %p75 = scmp.ne.s32.totalorder %s67, %s69
      %p76 = scmp.eq.s32.totalorder %s17, 1
      %p77 = por %p75, %p76
      %p78 = scmp.ne.s32.totalorder %s69, %s70
      %p79 = scmp.eq.s32.totalorder %s17, 0
      %p80 = por %p78, %p79
      %p81 = scmp.ne.s32.totalorder %s69, %s70
      %p82 = scmp.eq.s32.totalorder %s18, 1
      %p83 = por %p81, %p82
      %p85 = scmp.ne.s32.totalorder %s70, %s84
      %p86 = scmp.eq.s32.totalorder %s18, 0
      %p87 = por %p85, %p86
      %s88 = ssub.s32 %s12, %s19
      %p89 = scmp.eq.s32.totalorder %s88, 0
      %s91 = sadd.s32 %s90, 1
      %s92 = scalar_select %p89, %s90, %s91
      %p95 = pneg %p89
      %p96 = scmp.eq.s32.totalorder %s12, 1
      %p97 = por %p95, %p96
      %p98 = scmp.ne.s32.totalorder %s90, %s93
      %p99 = scmp.eq.s32.totalorder %s12, 0
      %p100 = por %p98, %p99
      %p101 = scmp.ne.s32.totalorder %s90, %s93
      %p102 = scmp.eq.s32.totalorder %s17, 1
      %p103 = por %p101, %p102
      %p104 = scmp.ne.s32.totalorder %s93, %s94
      %p105 = scmp.eq.s32.totalorder %s17, 0
      %p106 = por %p104, %p105
      %p107 = scmp.ne.s32.totalorder %s93, %s94
      %p108 = scmp.eq.s32.totalorder %s18, 1
      %p109 = por %p107, %p108
      %p111 = scmp.ne.s32.totalorder %s94, %s110
      %p112 = scmp.eq.s32.totalorder %s18, 0
      %p113 = por %p111, %p112
      %p114 = scmp.le.s32.totalorder 1, %s12
      %p115 = scmp.lt.s32.totalorder %s12, 3
      %p116 = pnand %p114, %p115
      %p117 = pneg %p116
      // Predicated region
      $region9: #{decoder_forward.3} parent=5 // pred_check
        _
      $region10: #{decoder_forward.3} parent=5 // pred_check_branch
        %119 = sbr.rel (%p116) target = $region12
      $region11: #{decoder_forward.3} parent=5 // pred_region
        %s120 = ssub.s32 %s12, 1
        // Predicated region
        $region13: #{decoder_forward.3} parent=11 // pred_check
          %p121 = pneg %p59
        $region14: #{decoder_forward.3} parent=11 // pred_check_branch
          %123 = sbr.rel (%p121) target = $region16
        $region15: #{decoder_forward.3} parent=11 // pred_region
          _
        $region16: #{decoder_forward.3} parent=11 // pred_fallthru
          _
        // Predicated region
        $region17: #{decoder_forward.3} parent=11 // pred_check
          %p124 = pneg %p80
        $region18: #{decoder_forward.3} parent=11 // pred_check_branch
          %126 = sbr.rel (%p124) target = $region20
        $region19: #{decoder_forward.3} parent=11 // pred_region
          _
        $region20: #{decoder_forward.3} parent=11 // pred_fallthru
          _
      $region12: #{decoder_forward.3} parent=5 // pred_fallthru
        _
      %p127 = scmp.lt.s32.totalorder %s12, 2
      // Predicated region
      $region21: #{decoder_forward.3} parent=5 // pred_check
        %p128 = pneg %p127
      $region22: #{decoder_forward.3} parent=5 // pred_check_branch
        %130 = sbr.rel (%p128) target = $region24
      $region23: #{decoder_forward.3} parent=5 // pred_region
        // Predicated region
        $region25: #{decoder_forward.3} parent=23 // pred_check
          %p131 = pneg %p32
        $region26: #{decoder_forward.3} parent=23 // pred_check_branch
          %133 = sbr.rel (%p131) target = $region28
        $region27: #{decoder_forward.3} parent=23 // pred_region
          %s134 = sand.u32 %s22, 1
          %s135 = sand.u32 %s22, 1
          %s136 = smul.addr %s135, 16
          %s137 = scalar_lea.vmem [#allocation2], %s136
          %s138 = smul.addr %s12, 8
          %s139 = scalar_lea.vmem %s0, %s138
          // Predicated region
          $region29: #{decoder_forward.3} parent=27 // pred_check
            _
          $region30: #{decoder_forward.3} parent=27 // pred_check_branch
            %141 = sbr.rel (0) target = $region32
          $region31: #{decoder_forward.3} parent=27 // pred_region
            // Predicated region
            $region33: #{decoder_forward.3} parent=31 // pred_check
              _
            $region34: #{decoder_forward.3} parent=31 // pred_check_branch
              %143 = sbr.rel (0) target = $region36
            $region35: #{decoder_forward.3} parent=31 // pred_region
              // Predicated region
              $region48: #{decoder_forward.3} parent=35 // pred_check
                _
              $region49: #{decoder_forward.3} parent=35 // pred_check_branch
                %161 = sbr.rel (0) target = $region51
              $region50: #{decoder_forward.3} parent=35 // pred_region
                loop: start=0, step=1, limit=1
                $region52: #{decoder_forward.3} parent=50 // loop_pre_header
                  _
                $region53: #{decoder_forward.3} parent=50 // loop_header
                  %s163 = sphi 0, %s167
                  %p164 = scmp.ge.s32.totalorder %s163, 1
                  %s168 = sphi %s139, %s139
                  %s169 = sphi %s137, %s137
                $region54: #{decoder_forward.3} parent=50 // loop_header_branch
                  %166 = sbr.rel (%p164) target = $region58
                $region55: #{decoder_forward.3} parent=50 // loop_body
                  %v170 = vld [vmem:[%s168] sm:$0xff]
                  %171 = vst [vmem:[%s169] sm:$0xff] %v170
                  %v172 = vld [vmem:[%s168 + $0x10] sm:$0xff]
                  %173 = vst [vmem:[%s169 + $0x8] sm:$0xff] %v172
                $region56: #{decoder_forward.3} parent=50 // loop_footer
                  %s167 = sadd.s32 1, %s163
                $region57: #{decoder_forward.3} parent=50 // loop_footer_branch
                  %162 = sbr.rel target = $region53
                $region58: #{decoder_forward.3} parent=50 // loop_exit
                  _
              $region51: #{decoder_forward.3} parent=35 // pred_fallthru
                _
              // Predicated region
              $region59: #{decoder_forward.3} parent=35 // pred_check
                _
              $region60: #{decoder_forward.3} parent=35 // pred_check_branch
                %175 = sbr.rel target = $region62
              $region61: #{decoder_forward.3} parent=35 // pred_region
                _
              $region62: #{decoder_forward.3} parent=35 // pred_fallthru
                _
            $region36: #{decoder_forward.3} parent=31 // pred_fallthru
              _
            // Predicated region
            $region37: #{decoder_forward.3} parent=31 // pred_check
              _
            $region38: #{decoder_forward.3} parent=31 // pred_check_branch
              %145 = sbr.rel target = $region40
            $region39: #{decoder_forward.3} parent=31 // pred_region
              %s147 = ssub.s32 256, 1
              loop: start=0, step=1, limit=1
              $region41: #{decoder_forward.3} parent=39 // loop_pre_header
                _
              $region42: #{decoder_forward.3} parent=39 // loop_header
                %s149 = sphi 0, %s153
                %p150 = scmp.ge.s32.totalorder %s149, 1
                %s154 = sphi %s139, %s139
                %s155 = sphi %s137, %s137
              $region43: #{decoder_forward.3} parent=39 // loop_header_branch
                %152 = sbr.rel (%p150) target = $region47
              $region44: #{decoder_forward.3} parent=39 // loop_body
                %v156 = vld [vmem:[%s154] sm:%s147]
                %157 = vst [vmem:[%s155] sm:%s147] %v156
                %v158 = vld [vmem:[%s154 + $0x10] sm:%s147]
                %159 = vst [vmem:[%s155 + $0x8] sm:%s147] %v158
              $region45: #{decoder_forward.3} parent=39 // loop_footer
                %s153 = sadd.s32 1, %s149
              $region46: #{decoder_forward.3} parent=39 // loop_footer_branch
                %148 = sbr.rel target = $region42
              $region47: #{decoder_forward.3} parent=39 // loop_exit
                _
            $region40: #{decoder_forward.3} parent=31 // pred_fallthru
              _
          $region32: #{decoder_forward.3} parent=27 // pred_fallthru
            _
          %176 = vnop
        $region28: #{decoder_forward.3} parent=23 // pred_fallthru
          _
      $region24: #{decoder_forward.3} parent=5 // pred_fallthru
        _
      %p177 = scmp.le.s32.totalorder 1, %s12
      %p178 = scmp.lt.s32.totalorder %s12, 3
      %p179 = pnand %p177, %p178
      %p180 = pneg %p179
      // Predicated region
      $region63: #{decoder_forward.3} parent=5 // pred_check
        _
      $region64: #{decoder_forward.3} parent=5 // pred_check_branch
        %182 = sbr.rel (%p179) target = $region66
      $region65: #{decoder_forward.3} parent=5 // pred_region
        %s183 = ssub.s32 %s12, 1
        %s184 = sand.u32 %s25, 1
        %s185 = sand.u32 %s25, 1
        %s186 = smul.addr %s185, 16
        %s187 = scalar_lea.vmem [#allocation2], %s186
        // Predicated region
        $region67: #{decoder_forward.3} parent=65 // pred_check
          %p188 = pneg %p38
        $region68: #{decoder_forward.3} parent=65 // pred_check_branch
          %190 = sbr.rel (%p188) target = $region70
        $region69: #{decoder_forward.3} parent=65 // pred_region
          _
        $region70: #{decoder_forward.3} parent=65 // pred_fallthru
          _
        %s191 = sand.u32 %s25, 1
        %s192 = sand.u32 %s25, 1
        %s193 = smul.addr %s192, 16
        %s194 = scalar_lea.vmem [#allocation2], %s193
        %p195 = pneg %p38
        %p196 = pneg %p35
        %p197 = pneg %p59
        %p198 = pneg %p56
        %p199 = pneg %p80
        %p200 = pneg %p77
        %p201 = pneg %p106
        %p202 = pneg %p103
        %s203 = sand.u32 %s93, 1
        %s204 = scalar_lea.sflag [#allocation4], %s203
        %s205 = sand.u32 %s93, 1
        %s206 = smul.addr %s205, 16
        %s207 = scalar_lea.vmem [#allocation3], %s206
        %v208 = vld [vmem:[%s187] sm:$0xff]
        %v209 = vld [vmem:[%s187 + $0x8] sm:$0xff]
        %v210 = vld [vmem:[%s1] sm:$0xff]
        %v211 = vld [vmem:[%s1 + $0x8] sm:$0xff]
        %v212 = vld [vmem:[%s1 + $0x10] sm:$0xff]
        %v213 = vld [vmem:[%s1 + $0x18] sm:$0xff]
        %v214 = vld [vmem:[%s2] sm:$0x1]
        %v216 = vperm.slane %v214, 0
        %vm218 = vcmask 261120
        %v220 = vsel %vm218, %v208, 0
        %v223 = vsel %vm218, %v209, 0
        %225 = vmatpush.msra.mxu0 0.0
        %226 = vmatpush.msra.mxu0 0.0
        %227 = vmatpush.msra.mxu0 0.0
        %228 = vmatpush.msra.mxu0 0.0
        %229 = vmatpush.msra.mxu0 0.0
        %230 = vmatpush.msra.mxu0 0.0
        %231 = vmatpush.msra.mxu0 0.0
        %232 = vmatpush.msra.mxu0 0.0
        %233 = vmatpush.msra.mxu0 0.0
        %234 = vmatpush.msra.mxu0 0.0
        %235 = vmatpush.msra.mxu0 0.0
        %236 = vmatpush.msra.mxu0 0.0
        %237 = vmatpush.msra.mxu0 %v213
        %238 = vmatpush.msra.mxu0 %v212
        %239 = vmatpush.msra.mxu0 %v211
        %240 = vmatpush.msra.mxu0 %v210
        %241 = vmatmul.f32.gmra.mxu0 %v220
        %v242 = vpop.f32.mrf.mxu0
        %v243 = vadd.f32 %v216, %v242
        %244 = vmatmul.f32.gmra.mxu0 %v223
        %v245 = vpop.f32.mrf.mxu0
        %v246 = vadd.f32 %v216, %v245
        %247 = vdwg.mxu0
        %vm248 = vcmask 326656
        %249 = vst.msk [vmem:[%s207] sm:$0xff] %vm248, %v243
        %250 = vst.msk [vmem:[%s207 + $0x8] sm:$0xff] %vm248, %v246
        %s251 = sand.u32 %s93, 1
        %s252 = scalar_lea.sflag [#allocation4], %s251
        %s253 = sand.u32 %s93, 1
        %s254 = smul.addr %s253, 16
        %s255 = scalar_lea.vmem [#allocation3], %s254
        // Predicated region
        $region71: #{decoder_forward.3} parent=65 // pred_check
          %p256 = pneg %p103
        $region72: #{decoder_forward.3} parent=65 // pred_check_branch
          %258 = sbr.rel (%p256) target = $region74
        $region73: #{decoder_forward.3} parent=65 // pred_region
          %260 = vsyncadd %s252, 0
          %s261 = smul.addr %s17, 8
          %s262 = scalar_lea.hbm %s3, %s261
          %s263 = sshll.u32 %s255, 4
          %s264 = int_to_ptr.vmem [resolvable:$true] %s263
          %s265 = sshll.u32 %s262, 4
          %s266 = int_to_ptr.hbm [resolvable:$true] %s265
          %271 = dma.vmem_to_hbm [thread:$0]  %s264, 256, %s266, %s252, 128, 256, 8
        $region74: #{decoder_forward.3} parent=65 // pred_fallthru
          _
      $region66: #{decoder_forward.3} parent=5 // pred_fallthru
        _
      %p272 = scmp.le.s32.totalorder 2, %s12
      // Predicated region
      $region75: #{decoder_forward.3} parent=5 // pred_check
        %p273 = pneg %p272
      $region76: #{decoder_forward.3} parent=5 // pred_check_branch
        %275 = sbr.rel (%p273) target = $region78
      $region77: #{decoder_forward.3} parent=5 // pred_region
        %s276 = ssub.s32 %s12, 2
        // Predicated region
        $region79: #{decoder_forward.3} parent=77 // pred_check
          %p277 = pneg %p109
        $region80: #{decoder_forward.3} parent=77 // pred_check_branch
          %279 = sbr.rel (%p277) target = $region82
        $region81: #{decoder_forward.3} parent=77 // pred_region
          %s280 = sand.u32 %s94, 1
          %s281 = scalar_lea.sflag [#allocation4], %s280
          %s282 = sand.u32 %s94, 1
          %s283 = smul.addr %s282, 16
          %s284 = scalar_lea.vmem [#allocation3], %s283
          %286 = dma.done %s281, 256
        $region82: #{decoder_forward.3} parent=77 // pred_fallthru
          _
      $region78: #{decoder_forward.3} parent=5 // pred_fallthru
        _
    $region6: #{decoder_forward.3} parent=1 // loop_footer
      %s16 = sadd.s32 1, %s12
    $region7: #{decoder_forward.3} parent=1 // loop_footer_branch
      %11 = sbr.rel target = $region3
    $region8: #{decoder_forward.3} parent=1 // loop_exit
      _
    %287 = vsyncpa [#allocation4], 1
    %s288 = scalar_lea.sflag [#allocation4], 1
    %289 = vsyncpa %s288, 1

// kernel: decoder_forward.2
$region0: #{decoder_forward.2}
  #allocation0 [shape = 'u32[]', space=smem, size = 0x4, offset = 0x4, fixed_abs, tag = 'smem constant byte address 0x4 - core index']
  #allocation1 [shape = 'u32[72,128]{1,0:T(1,128)}', space=vmem, size = 0x9000, scoped, tag = 'internal scratch']
  #allocation2 [shape = 'f32[2,2,32]{2,1,0:T(2,128)}', space=vmem, size = 0x800, scoped, tag = 'scratch operand']
  #allocation3 [shape = 'f32[2,2,32]{2,1,0:T(2,128)}', space=vmem, size = 0x800, scoped, tag = 'scratch operand']
  #allocation4 [shape = 'f32[2,8,32]{2,1,0:T(8,128)}', space=vmem, size = 0x2000, scoped, tag = 'scratch operand']
  #allocation5 [shape = 'f32[2,8,128]{2,1,0:T(8,128)}', space=vmem, size = 0x2000, scoped, tag = 'scratch operand']
  %s0 = inlined_call_operand.hbm [shape: f32[2,16,16], index: 0, kind: input, shape index: {}]
  %s1 = inlined_call_operand.hbm [shape: f32[16,128], index: 1, kind: input, shape index: {}]
  %s2 = inlined_call_operand.hbm [shape: f32[32,128], index: 2, kind: input, shape index: {}]
  %s3 = inlined_call_operand.vmem [shape: f32[1,128], index: 3, kind: input, shape index: {}]
  %s4 = inlined_call_operand.hbm [shape: f32[32,128], index: 4, kind: input, shape index: {}]
  %s5 = inlined_call_operand.hbm [shape: f32[32,128], index: 5, kind: input, shape index: {}]
  %s6 = inlined_call_operand.vmem [shape: f32[1,128], index: 6, kind: input, shape index: {}]
  %s7 = inlined_call_operand.vmem [shape: f32[2,16,32], index: 7, kind: output, shape index: {0}]
  %s8 = inlined_call_operand.vmem [shape: f32[1,32], index: 8, kind: output, shape index: {1}]
  %s9 = inlined_call_operand.vmem [shape: f32[1,32], index: 9, kind: output, shape index: {2}]
  %10 = xla_tuple %s7, %s8, %s9
  %s11 = sld [smem:[#allocation0]]
  $region139: #{decoder_forward.2} parent=0
    _
  %s13 = ssub.s32 1, %s11
  %s14 = scalar_select 0, %s13, %s11
  $region1: #{decoder_forward.2} parent=0
    #allocation6 [shape = 'u8[16384]{0}', space=vmem, size = 0x4000, scoped, tag = 'input window, operand 0']
    #allocation7 [shape = 's32[2]{0}', space=sflag, size = 0x8, scoped, tag = 'scoped memory for decoder_forward.2']
    #allocation8 [shape = 'u8[8192]{0}', space=vmem, size = 0x2000, scoped, tag = 'input window, operand 1, single buffered']
    #allocation9 [shape = 's32[1]{0}', space=sflag, size = 0x4, scoped, tag = 'scoped memory for decoder_forward.2']
    #allocation10 [shape = 'u8[16384]{0}', space=vmem, size = 0x4000, scoped, tag = 'input window, operand 2, single buffered']
    #allocation11 [shape = 'u8[16384]{0}', space=vmem, size = 0x4000, scoped, tag = 'input window, operand 4, single buffered']
    #allocation12 [shape = 's32[1]{0}', space=sflag, size = 0x4, scoped, tag = 'scoped memory for decoder_forward.2']
    #allocation13 [shape = 'u8[16384]{0}', space=vmem, size = 0x4000, scoped, tag = 'input window, operand 5, single buffered']
    #allocation14 [shape = 'u8[16384]{0}', space=vmem, size = 0x4000, scoped, tag = 'output window, operand 0']
    %15 = vsyncpa [#allocation7], 0
    %s16 = scalar_lea.sflag [#allocation7], 1
    %17 = vsyncpa %s16, 0
    %18 = vsyncpa [#allocation9], 0
    %19 = vsyncpa [#allocation12], 0
    loop: start=0, step=1, limit=4
    $region2: #{decoder_forward.2} parent=1 // loop_pre_header
      _
    $region3: #{decoder_forward.2} parent=1 // loop_header
      %s21 = sphi 0, %s25
      %p22 = scmp.ge.s32.totalorder %s21, 4
      %s31 = sphi 0, %s33
      %s34 = sphi 0, %s31
      %s35 = sphi 0, %s34
      %s51 = sphi 0, %s35
      %s55 = sphi 0, %s55
      %s57 = sphi 0, %s55
      %s58 = sphi 0, %s57
      %s72 = sphi 0, %s58
      %s76 = sphi 0, %s76
      %s78 = sphi 0, %s76
      %s79 = sphi 0, %s78
      %s93 = sphi 0, %s79
      %s97 = sphi 0, %s97
      %s99 = sphi 0, %s97
      %s100 = sphi 0, %s99
      %s114 = sphi 0, %s100
      %s118 = sphi 0, %s118
      %s120 = sphi 0, %s118
      %s121 = sphi 0, %s120
      %s135 = sphi 0, %s121
      %s139 = sphi 0, %s139
      %s141 = sphi 0, %s139
      %s142 = sphi 0, %s141
      %s156 = sphi 0, %s142
      %s160 = sphi 0, %s160
      %s162 = sphi 0, %s160
      %s163 = sphi 0, %s162
      %s177 = sphi 0, %s163
      %s183 = sphi 0, %s185
      %s186 = sphi 0, %s183
      %s187 = sphi 0, %s186
      %s203 = sphi 0, %s187
      %s207 = sphi 0, %s207
      %s209 = sphi 0, %s207
      %s210 = sphi 0, %s209
      %s224 = sphi 0, %s210
      %s228 = sphi 0, %s228
      %s230 = sphi 0, %s228
      %s231 = sphi 0, %s230
      %s245 = sphi 0, %s231
    $region4: #{decoder_forward.2} parent=1 // loop_header_branch
      %24 = sbr.rel (%p22) target = $region8
    $region5: #{decoder_forward.2} parent=1 // loop_body
      %s26 = ssub.s32 %s21, 1
      %s27 = ssub.s32 %s21, 2
      %s28 = sadd.s32 %s21, 1
      %s29 = ssub.s32 %s21, %s28
      %p30 = scmp.eq.s32.totalorder %s29, 0
      %s32 = sadd.s32 %s31, 1
      %s33 = scalar_select %p30, %s31, %s32
      %p36 = pneg %p30
      %p37 = scmp.eq.s32.totalorder %s21, 1
      %p38 = por %p36, %p37
      %p39 = scmp.ne.s32.totalorder %s31, %s34
      %p40 = scmp.eq.s32.totalorder %s21, 0
      %p41 = por %p39, %p40
      %p42 = scmp.ne.s32.totalorder %s31, %s34
      %p43 = scmp.eq.s32.totalorder %s26, 1
      %p44 = por %p42, %p43
      %p45 = scmp.ne.s32.totalorder %s34, %s35
      %p46 = scmp.eq.s32.totalorder %s26, 0
      %p47 = por %p45, %p46
      %p48 = scmp.ne.s32.totalorder %s34, %s35
      %p49 = scmp.eq.s32.totalorder %s27, 1
      %p50 = por %p48, %p49
      %p52 = scmp.ne.s32.totalorder %s35, %s51
      %p53 = scmp.eq.s32.totalorder %s27, 0
      %p54 = por %p52, %p53
      %s56 = sadd.s32 %s55, 1
      %p59 = scmp.eq.s32.totalorder %s21, 1
      %p60 = scmp.ne.s32.totalorder %s55, %s57
      %p61 = scmp.eq.s32.totalorder %s21, 0
      %p62 = por %p60, %p61
      %p63 = scmp.ne.s32.totalorder %s55, %s57
      %p64 = scmp.eq.s32.totalorder %s26, 1
      %p65 = por %p63, %p64
      %p66 = scmp.ne.s32.totalorder %s57, %s58
      %p67 = scmp.eq.s32.totalorder %s26, 0
      %p68 = por %p66, %p67
      %p69 = scmp.ne.s32.totalorder %s57, %s58
      %p70 = scmp.eq.s32.totalorder %s27, 1
      %p71 = por %p69, %p70
      %p73 = scmp.ne.s32.totalorder %s58, %s72
      %p74 = scmp.eq.s32.totalorder %s27, 0
      %p75 = por %p73, %p74
      %s77 = sadd.s32 %s76, 1
      %p80 = scmp.eq.s32.totalorder %s21, 1
      %p81 = scmp.ne.s32.totalorder %s76, %s78
      %p82 = scmp.eq.s32.totalorder %s21, 0
      %p83 = por %p81, %p82
      %p84 = scmp.ne.s32.totalorder %s76, %s78
      %p85 = scmp.eq.s32.totalorder %s26, 1
      %p86 = por %p84, %p85
      %p87 = scmp.ne.s32.totalorder %s78, %s79
      %p88 = scmp.eq.s32.totalorder %s26, 0
      %p89 = por %p87, %p88
      %p90 = scmp.ne.s32.totalorder %s78, %s79
      %p91 = scmp.eq.s32.totalorder %s27, 1
      %p92 = por %p90, %p91
      %p94 = scmp.ne.s32.totalorder %s79, %s93
      %p95 = scmp.eq.s32.totalorder %s27, 0
      %p96 = por %p94, %p95
      %s98 = sadd.s32 %s97, 1
      %p101 = scmp.eq.s32.totalorder %s21, 1
      %p102 = scmp.ne.s32.totalorder %s97, %s99
      %p103 = scmp.eq.s32.totalorder %s21, 0
      %p104 = por %p102, %p103
      %p105 = scmp.ne.s32.totalorder %s97, %s99
      %p106 = scmp.eq.s32.totalorder %s26, 1
      %p107 = por %p105, %p106
      %p108 = scmp.ne.s32.totalorder %s99, %s100
      %p109 = scmp.eq.s32.totalorder %s26, 0
      %p110 = por %p108, %p109
      %p111 = scmp.ne.s32.totalorder %s99, %s100
      %p112 = scmp.eq.s32.totalorder %s27, 1
      %p113 = por %p111, %p112
      %p115 = scmp.ne.s32.totalorder %s100, %s114
      %p116 = scmp.eq.s32.totalorder %s27, 0
      %p117 = por %p115, %p116
      %s119 = sadd.s32 %s118, 1
      %p122 = scmp.eq.s32.totalorder %s21, 1
      %p123 = scmp.ne.s32.totalorder %s118, %s120
      %p124 = scmp.eq.s32.totalorder %s21, 0
      %p125 = por %p123, %p124
      %p126 = scmp.ne.s32.totalorder %s118, %s120
      %p127 = scmp.eq.s32.totalorder %s26, 1
      %p128 = por %p126, %p127
      %p129 = scmp.ne.s32.totalorder %s120, %s121
      %p130 = scmp.eq.s32.totalorder %s26, 0
      %p131 = por %p129, %p130
      %p132 = scmp.ne.s32.totalorder %s120, %s121
      %p133 = scmp.eq.s32.totalorder %s27, 1
      %p134 = por %p132, %p133
      %p136 = scmp.ne.s32.totalorder %s121, %s135
      %p137 = scmp.eq.s32.totalorder %s27, 0
      %p138 = por %p136, %p137
      %s140 = sadd.s32 %s139, 1
      %p143 = scmp.eq.s32.totalorder %s21, 1
      %p144 = scmp.ne.s32.totalorder %s139, %s141
      %p145 = scmp.eq.s32.totalorder %s21, 0
      %p146 = por %p144, %p145
      %p147 = scmp.ne.s32.totalorder %s139, %s141
      %p148 = scmp.eq.s32.totalorder %s26, 1
      %p149 = por %p147, %p148
      %p150 = scmp.ne.s32.totalorder %s141, %s142
      %p151 = scmp.eq.s32.totalorder %s26, 0
      %p152 = por %p150, %p151
      %p153 = scmp.ne.s32.totalorder %s141, %s142
      %p154 = scmp.eq.s32.totalorder %s27, 1
      %p155 = por %p153, %p154
      %p157 = scmp.ne.s32.totalorder %s142, %s156
      %p158 = scmp.eq.s32.totalorder %s27, 0
      %p159 = por %p157, %p158
      %s161 = sadd.s32 %s160, 1
      %p164 = scmp.eq.s32.totalorder %s21, 1
      %p165 = scmp.ne.s32.totalorder %s160, %s162
      %p166 = scmp.eq.s32.totalorder %s21, 0
      %p167 = por %p165, %p166
      %p168 = scmp.ne.s32.totalorder %s160, %s162
      %p169 = scmp.eq.s32.totalorder %s26, 1
      %p170 = por %p168, %p169
      %p171 = scmp.ne.s32.totalorder %s162, %s163
      %p172 = scmp.eq.s32.totalorder %s26, 0
      %p173 = por %p171, %p172
      %p174 = scmp.ne.s32.totalorder %s162, %s163
      %p175 = scmp.eq.s32.totalorder %s27, 1
      %p176 = por %p174, %p175
      %p178 = scmp.ne.s32.totalorder %s163, %s177
      %p179 = scmp.eq.s32.totalorder %s27, 0
      %p180 = por %p178, %p179
      %s181 = ssub.s32 %s21, %s28
      %p182 = scmp.eq.s32.totalorder %s181, 0
      %s184 = sadd.s32 %s183, 1
      %s185 = scalar_select %p182, %s183, %s184
      %p188 = pneg %p182
      %p189 = scmp.eq.s32.totalorder %s21, 1
      %p190 = por %p188, %p189
      %p191 = scmp.ne.s32.totalorder %s183, %s186
      %p192 = scmp.eq.s32.totalorder %s21, 0
      %p193 = por %p191, %p192
      %p194 = scmp.ne.s32.totalorder %s183, %s186
      %p195 = scmp.eq.s32.totalorder %s26, 1
      %p196 = por %p194, %p195
      %p197 = scmp.ne.s32.totalorder %s186, %s187
      %p198 = scmp.eq.s32.totalorder %s26, 0
      %p199 = por %p197, %p198
      %p200 = scmp.ne.s32.totalorder %s186, %s187
      %p201 = scmp.eq.s32.totalorder %s27, 1
      %p202 = por %p200, %p201
      %p204 = scmp.ne.s32.totalorder %s187, %s203
      %p205 = scmp.eq.s32.totalorder %s27, 0
      %p206 = por %p204, %p205
      %s208 = sadd.s32 %s207, 1
      %p211 = scmp.eq.s32.totalorder %s21, 1
      %p212 = scmp.ne.s32.totalorder %s207, %s209
      %p213 = scmp.eq.s32.totalorder %s21, 0
      %p214 = por %p212, %p213
      %p215 = scmp.ne.s32.totalorder %s207, %s209
      %p216 = scmp.eq.s32.totalorder %s26, 1
      %p217 = por %p215, %p216
      %p218 = scmp.ne.s32.totalorder %s209, %s210
      %p219 = scmp.eq.s32.totalorder %s26, 0
      %p220 = por %p218, %p219
      %p221 = scmp.ne.s32.totalorder %s209, %s210
      %p222 = scmp.eq.s32.totalorder %s27, 1
      %p223 = por %p221, %p222
      %p225 = scmp.ne.s32.totalorder %s210, %s224
      %p226 = scmp.eq.s32.totalorder %s27, 0
      %p227 = por %p225, %p226
      %s229 = sadd.s32 %s228, 1
      %p232 = scmp.eq.s32.totalorder %s21, 1
      %p233 = scmp.ne.s32.totalorder %s228, %s230
      %p234 = scmp.eq.s32.totalorder %s21, 0
      %p235 = por %p233, %p234
      %p236 = scmp.ne.s32.totalorder %s228, %s230
      %p237 = scmp.eq.s32.totalorder %s26, 1
      %p238 = por %p236, %p237
      %p239 = scmp.ne.s32.totalorder %s230, %s231
      %p240 = scmp.eq.s32.totalorder %s26, 0
      %p241 = por %p239, %p240
      %p242 = scmp.ne.s32.totalorder %s230, %s231
      %p243 = scmp.eq.s32.totalorder %s27, 1
      %p244 = por %p242, %p243
      %p246 = scmp.ne.s32.totalorder %s231, %s245
      %p247 = scmp.eq.s32.totalorder %s27, 0
      %p248 = por %p246, %p247
      %p249 = scmp.le.s32.totalorder 1, %s21
      %p250 = scmp.lt.s32.totalorder %s21, 3
      %p251 = pnand %p249, %p250
      %p252 = pneg %p251
      // Predicated region
      $region9: #{decoder_forward.2} parent=5 // pred_check
        _
      $region10: #{decoder_forward.2} parent=5 // pred_check_branch
        %254 = sbr.rel (%p251) target = $region12
      $region11: #{decoder_forward.2} parent=5 // pred_region
        %s255 = ssub.s32 %s21, 1
        // Predicated region
        $region13: #{decoder_forward.2} parent=11 // pred_check
          %p256 = pneg %p68
        $region14: #{decoder_forward.2} parent=11 // pred_check_branch
          %258 = sbr.rel (%p256) target = $region16
        $region15: #{decoder_forward.2} parent=11 // pred_region
          %260 = vsyncadd [#allocation9], 0
          %s261 = sshll.u32 %s1, 4
          %s262 = int_to_ptr.hbm [resolvable:$true] %s261
          %s263 = sshll.u32 [#allocation8], 4
          %s264 = int_to_ptr.vmem [resolvable:$true] %s263
          %269 = dma.hbm_to_vmem [thread:$0]  %s262, 256, %s264, [#allocation9], 128, 128, 8
        $region16: #{decoder_forward.2} parent=11 // pred_fallthru
          _
        // Predicated region
        $region17: #{decoder_forward.2} parent=11 // pred_check
          %p270 = pneg %p89
        $region18: #{decoder_forward.2} parent=11 // pred_check_branch
          %272 = sbr.rel (%p270) target = $region20
        $region19: #{decoder_forward.2} parent=11 // pred_region
          %274 = vsyncadd [#allocation9], 0
          %s275 = sshll.u32 %s2, 4
          %s276 = int_to_ptr.hbm [resolvable:$true] %s275
          %s277 = sshll.u32 [#allocation10], 4
          %s278 = int_to_ptr.vmem [resolvable:$true] %s277
          %283 = dma.hbm_to_vmem [thread:$0]  %s276, 512, %s278, [#allocation9], 128, 128, 8
        $region20: #{decoder_forward.2} parent=11 // pred_fallthru
          _
        // Predicated region
        $region21: #{decoder_forward.2} parent=11 // pred_check
          %p284 = pneg %p110
        $region22: #{decoder_forward.2} parent=11 // pred_check_branch
          %286 = sbr.rel (%p284) target = $region24
        $region23: #{decoder_forward.2} parent=11 // pred_region
          _
        $region24: #{decoder_forward.2} parent=11 // pred_fallthru
          _
        // Predicated region
        $region25: #{decoder_forward.2} parent=11 // pred_check
          %p287 = pneg %p131
        $region26: #{decoder_forward.2} parent=11 // pred_check_branch
          %289 = sbr.rel (%p287) target = $region28
        $region27: #{decoder_forward.2} parent=11 // pred_region
          %291 = vsyncadd [#allocation12], 0
          %s292 = sshll.u32 %s4, 4
          %s293 = int_to_ptr.hbm [resolvable:$true] %s292
          %s294 = sshll.u32 [#allocation11], 4
          %s295 = int_to_ptr.vmem [resolvable:$true] %s294
          %300 = dma.hbm_to_vmem [thread:$0]  %s293, 512, %s295, [#allocation12], 128, 128, 8
        $region28: #{decoder_forward.2} parent=11 // pred_fallthru
          _
        // Predicated region
        $region29: #{decoder_forward.2} parent=11 // pred_check
          %p301 = pneg %p152
        $region30: #{decoder_forward.2} parent=11 // pred_check_branch
          %303 = sbr.rel (%p301) target = $region32
        $region31: #{decoder_forward.2} parent=11 // pred_region
          %305 = vsyncadd [#allocation12], 0
          %s306 = sshll.u32 %s5, 4
          %s307 = int_to_ptr.hbm [resolvable:$true] %s306
          %s308 = sshll.u32 [#allocation13], 4
          %s309 = int_to_ptr.vmem [resolvable:$true] %s308
          %314 = dma.hbm_to_vmem [thread:$0]  %s307, 512, %s309, [#allocation12], 128, 128, 8
        $region32: #{decoder_forward.2} parent=11 // pred_fallthru
          _
        // Predicated region
        $region33: #{decoder_forward.2} parent=11 // pred_check
          %p315 = pneg %p173
        $region34: #{decoder_forward.2} parent=11 // pred_check_branch
          %317 = sbr.rel (%p315) target = $region36
        $region35: #{decoder_forward.2} parent=11 // pred_region
          _
        $region36: #{decoder_forward.2} parent=11 // pred_fallthru
          _
      $region12: #{decoder_forward.2} parent=5 // pred_fallthru
        _
      %p318 = scmp.lt.s32.totalorder %s21, 2
      // Predicated region
      $region37: #{decoder_forward.2} parent=5 // pred_check
        %p319 = pneg %p318
      $region38: #{decoder_forward.2} parent=5 // pred_check_branch
        %321 = sbr.rel (%p319) target = $region40
      $region39: #{decoder_forward.2} parent=5 // pred_region
        // Predicated region
        $region41: #{decoder_forward.2} parent=39 // pred_check
          %p322 = pneg %p41
        $region42: #{decoder_forward.2} parent=39 // pred_check_branch
          %324 = sbr.rel (%p322) target = $region44
        $region43: #{decoder_forward.2} parent=39 // pred_region
          %s325 = sand.u32 %s31, 1
          %s326 = scalar_lea.sflag [#allocation7], %s325
          %s327 = sand.u32 %s31, 1
          %s328 = smul.addr %s327, 16
          %s329 = scalar_lea.vmem [#allocation6], %s328
          %331 = vsyncadd %s326, 0
          %s332 = smul.addr %s21, 8
          %s333 = scalar_lea.hbm %s0, %s332
          %s334 = sshll.u32 %s333, 4
          %s335 = int_to_ptr.hbm [resolvable:$true] %s334
          %s336 = sshll.u32 %s329, 4
          %s337 = int_to_ptr.vmem [resolvable:$true] %s336
          %342 = dma.hbm_to_vmem [thread:$0]  %s335, 256, %s337, %s326, 256, 128, 8
        $region44: #{decoder_forward.2} parent=39 // pred_fallthru
          _
      $region40: #{decoder_forward.2} parent=5 // pred_fallthru
        _
      %p343 = scmp.le.s32.totalorder 1, %s21
      %p344 = scmp.lt.s32.totalorder %s21, 3
      %p345 = pnand %p343, %p344
      %p346 = pneg %p345
      // Predicated region
      $region45: #{decoder_forward.2} parent=5 // pred_check
        _
      $region46: #{decoder_forward.2} parent=5 // pred_check_branch
        %348 = sbr.rel (%p345) target = $region48
      $region47: #{decoder_forward.2} parent=5 // pred_region
        %s349 = ssub.s32 %s21, 1
        %s350 = sand.u32 %s34, 1
        %s351 = scalar_lea.sflag [#allocation7], %s350
        %s352 = sand.u32 %s34, 1
        %s353 = smul.addr %s352, 16
        %s354 = scalar_lea.vmem [#allocation6], %s353
        // Predicated region
        $region49: #{decoder_forward.2} parent=47 // pred_check
          %p355 = pneg %p47
        $region50: #{decoder_forward.2} parent=47 // pred_check_branch
          %357 = sbr.rel (%p355) target = $region52
        $region51: #{decoder_forward.2} parent=47 // pred_region
          %359 = dma.done %s351, 256
        $region52: #{decoder_forward.2} parent=47 // pred_fallthru
          _
        // Predicated region
        $region53: #{decoder_forward.2} parent=47 // pred_check
          %p360 = pneg %p68
        $region54: #{decoder_forward.2} parent=47 // pred_check_branch
          %362 = sbr.rel (%p360) target = $region56
        $region55: #{decoder_forward.2} parent=47 // pred_region
          %364 = dma.done [#allocation9], 256
        $region56: #{decoder_forward.2} parent=47 // pred_fallthru
          _
        // Predicated region
        $region57: #{decoder_forward.2} parent=47 // pred_check
          %p365 = pneg %p89
        $region58: #{decoder_forward.2} parent=47 // pred_check_branch
          %367 = sbr.rel (%p365) target = $region60
        $region59: #{decoder_forward.2} parent=47 // pred_region
          %369 = dma.done [#allocation9], 512
        $region60: #{decoder_forward.2} parent=47 // pred_fallthru
          _
        // Predicated region
        $region61: #{decoder_forward.2} parent=47 // pred_check
          %p370 = pneg %p131
        $region62: #{decoder_forward.2} parent=47 // pred_check_branch
          %372 = sbr.rel (%p370) target = $region64
        $region63: #{decoder_forward.2} parent=47 // pred_region
          %374 = dma.done [#allocation12], 512
        $region64: #{decoder_forward.2} parent=47 // pred_fallthru
          _
        // Predicated region
        $region65: #{decoder_forward.2} parent=47 // pred_check
          %p375 = pneg %p152
        $region66: #{decoder_forward.2} parent=47 // pred_check_branch
          %377 = sbr.rel (%p375) target = $region68
        $region67: #{decoder_forward.2} parent=47 // pred_region
          %379 = dma.done [#allocation12], 512
        $region68: #{decoder_forward.2} parent=47 // pred_fallthru
          _
        %s380 = sand.u32 %s34, 1
        %s381 = scalar_lea.sflag [#allocation7], %s380
        %s382 = sand.u32 %s34, 1
        %s383 = smul.addr %s382, 16
        %s384 = scalar_lea.vmem [#allocation6], %s383
        %p385 = pneg %p47
        %p386 = pneg %p44
        %p387 = pneg %p68
        %p388 = pneg %p65
        %p389 = pneg %p89
        %p390 = pneg %p86
        %p391 = pneg %p110
        %p392 = pneg %p107
        %p393 = pneg %p131
        %p394 = pneg %p128
        %p395 = pneg %p152
        %p396 = pneg %p149
        %p397 = pneg %p173
        %p398 = pneg %p170
        %p399 = pneg %p199
        %p400 = pneg %p196
        %s401 = sand.u32 %s186, 1
        %s402 = sand.u32 %s186, 1
        %s403 = smul.addr %s402, 16
        %s404 = scalar_lea.vmem [#allocation14], %s403
        %p405 = pneg %p220
        %p406 = pneg %p217
        %p407 = pneg %p241
        %p408 = pneg %p238
        %p409 = scmp.eq.s32.totalorder %s26, 0
        // Predicated region
        $region69: #{decoder_forward.2} parent=47 // pred_check
          %p410 = pneg %p409
        $region70: #{decoder_forward.2} parent=47 // pred_check_branch
          %412 = sbr.rel (%p410) target = $region72
        $region71: #{decoder_forward.2} parent=47 // pred_region
          %vm413 = vcmask 254976
          %414 = vst.msk [vmem:[#allocation2] sm:$0x3] %vm413, 0.0
          %415 = vst.msk [vmem:[#allocation2 + $0x2] sm:$0x3] %vm413, 0.0
          %416 = vst.msk [vmem:[#allocation3] sm:$0x3] %vm413, 0.0
          %417 = vst.msk [vmem:[#allocation3 + $0x2] sm:$0x3] %vm413, 0.0
          %vm418 = vcmask 253952
          %419 = vst.msk [vmem:[%s8] sm:$0x1] %vm418, 0.0
          %420 = vst.msk [vmem:[%s9] sm:$0x1] %vm418, 0.0
        $region72: #{decoder_forward.2} parent=47 // pred_fallthru
          _
        %v421 = vld [vmem:[%s354] sm:$0xff]
        %v422 = vld [vmem:[%s354 + $0x8] sm:$0xff]
        %v423 = vld [vmem:[#allocation8] sm:$0xff]
        %v424 = vld [vmem:[#allocation8 + $0x8] sm:$0xff]
        %v425 = vld [vmem:[#allocation10] sm:$0xff]
        %v426 = vld [vmem:[#allocation10 + $0x8] sm:$0xff]
        %v427 = vld [vmem:[#allocation10 + $0x10] sm:$0xff]
        %v428 = vld [vmem:[#allocation10 + $0x18] sm:$0xff]
        %v429 = vld [vmem:[%s3] sm:$0x1]
        %v431 = vperm.slane %v429, 0
        %vm433 = vcmask 130048
        %v435 = vsel %vm433, %v421, 0
        %v438 = vsel %vm433, %v422, 0
        %440 = vmatpush.msra.mxu0 0.0
        %441 = vmatpush.msra.mxu0 0.0
        %442 = vmatpush.msra.mxu0 0.0
        %443 = vmatpush.msra.mxu0 0.0
        %444 = vmatpush.msra.mxu0 0.0
        %445 = vmatpush.msra.mxu0 0.0
        %446 = vmatpush.msra.mxu0 0.0
        %447 = vmatpush.msra.mxu0 0.0
        %448 = vmatpush.msra.mxu0 0.0
        %449 = vmatpush.msra.mxu0 0.0
        %450 = vmatpush.msra.mxu0 0.0
        %451 = vmatpush.msra.mxu0 0.0
        %452 = vmatpush.msra.mxu0 0.0
        %453 = vmatpush.msra.mxu0 0.0
        %454 = vmatpush.msra.mxu0 %v424
        %455 = vmatpush.msra.mxu0 %v423
        %456 = vmatmul.f32.gmra.mxu0 %v435
        %v457 = vpop.f32.mrf.mxu0
        %v458 = vadd.f32 %v431, %v457
        %459 = vmatmul.f32.gmra.mxu0 %v438
        %v460 = vpop.f32.mrf.mxu0
        %v461 = vadd.f32 %v431, %v460
        %462 = vdwg.mxu0
        %463 = vst [vmem:[#allocation5] sm:$0xff] %v458
        %464 = vst [vmem:[#allocation5 + $0x8] sm:$0xff] %v461
        %v465 = vld [vmem:[#allocation2] sm:$0x3]
        %v466 = vld [vmem:[#allocation3] sm:$0x3]
        %v467 = vld [vmem:[#allocation5] sm:$0x1]
        %v468 = vld [vmem:[#allocation5 + $0x8] sm:$0x1]
        %vm469 = vcmask 261120
        %v471 = vsel %vm469, %v465, 0
        %473 = vmatpush.msra.mxu0 0.0
        %474 = vmatpush.msra.mxu0 0.0
        %475 = vmatpush.msra.mxu0 0.0
        %476 = vmatpush.msra.mxu0 0.0
        %477 = vmatpush.msra.mxu0 0.0
        %478 = vmatpush.msra.mxu0 0.0
        %479 = vmatpush.msra.mxu0 0.0
        %480 = vmatpush.msra.mxu0 0.0
        %481 = vmatpush.msra.mxu0 0.0
        %482 = vmatpush.msra.mxu0 0.0
        %483 = vmatpush.msra.mxu0 0.0
        %484 = vmatpush.msra.mxu0 0.0
        %485 = vmatpush.msra.mxu0 %v428
        %486 = vmatpush.msra.mxu0 %v427
        %487 = vmatpush.msra.mxu0 %v426
        %488 = vmatpush.msra.mxu0 %v425
        %489 = vmatmul.f32.gmra.mxu0 %v471
        %v490 = vpop.f32.mrf.mxu0
        %v491 = vadd.f32 0.0, %v490
        %492 = vdwg.mxu0
        %v494 = vrot.slane %v491, 1
        %v497 = vadd.f32 %v467, %v491
        %v498 = vadd.f32 %v468, %v494
        %v499 = vxor.u32 %v497, 2147483648
        %v500 = vxor.u32 %v498, 2147483648
        %v501 = vmul.f32 %v499, 1.442695
        %v502 = vpow.pop %v501
        %v503 = vmul.f32 %v500, 1.442695
        %v504 = vpow.pop %v503
        %v505 = vadd.f32 %v502, 1.0
        %v506 = vadd.f32 %v504, 1.0
        %v507 = vrcp.pop %v505
        %v508 = vmul.f32 %v505, %v507
        %v509 = vsub.f32 1.0, %v508
        %v510 = vmul.f32 %v507, %v509
        %v511 = vadd.f32 %v507, %v510
        %vm512 = vweird.f32 %v505
        %vm513 = vweird.f32 %v507
        %vm514 = vmor %vm512, %vm513
        %v515 = vsel %vm514, %v507, %v511
        %v516 = vand.u32 2147483647, %v505
        %vm517 = vcmp.eq.f32.partialorder %v516, 8.507059e+37
        %v518 = vand.u32 %v505, 2147483648
        %v519 = vor.u32 1.1754944e-38, %v518
        %v520 = vsel %vm517, %v519, %v515
        %v521 = vmul.f32 1.0, %v520
        %v522 = vrcp.pop %v506
        %v523 = vmul.f32 %v506, %v522
        %v524 = vsub.f32 1.0, %v523
        %v525 = vmul.f32 %v522, %v524
        %v526 = vadd.f32 %v522, %v525
        %vm527 = vweird.f32 %v506
        %vm528 = vweird.f32 %v522
        %vm529 = vmor %vm527, %vm528
        %v530 = vsel %vm529, %v522, %v526
        %v531 = vand.u32 2147483647, %v506
        %vm532 = vcmp.eq.f32.partialorder %v531, 8.507059e+37
        %v533 = vand.u32 %v506, 2147483648
        %v534 = vor.u32 1.1754944e-38, %v533
        %v535 = vsel %vm532, %v534, %v530
        %v536 = vmul.f32 1.0, %v535
        %v537 = vtanh.pop %v497
        %v538 = vtanh.pop %v498
        %v540 = vrot.slane %v466, 1
        %541 = vrot.lane.b32.xlu0 %v466, 32
        %v542 = vpop.permute.xlu0 %541
        %543 = vrot.lane.b32.xlu0 %v540, 32
        %v544 = vpop.permute.xlu0 %543
        %v547 = vmul.f32 %v521, %v542
        %v548 = vmul.f32 %v536, %v544
        %551 = vrot.lane.b32.xlu0 %v537, 64
        %v552 = vpop.permute.xlu0 %551
        %553 = vrot.lane.b32.xlu0 %v538, 64
        %v554 = vpop.permute.xlu0 %553
        %v557 = vmul.f32 %v521, %v552
        %v558 = vmul.f32 %v536, %v554
        %561 = vrot.lane.b32.xlu0 %v557, 32
        %v562 = vpop.permute.xlu0 %561
        %563 = vrot.lane.b32.xlu0 %v558, 32
        %v564 = vpop.permute.xlu0 %563
        %v567 = vadd.f32 %v547, %v562
        %v568 = vadd.f32 %v548, %v564
        %v569 = vtanh.pop %v567
        %v570 = vtanh.pop %v568
        %573 = vrot.lane.b32.xlu0 %v569, 64
        %v574 = vpop.permute.xlu0 %573
        %575 = vrot.lane.b32.xlu0 %v570, 64
        %v576 = vpop.permute.xlu0 %575
        %v579 = vmul.f32 %v521, %v574
        %v580 = vmul.f32 %v536, %v576
        %583 = vrot.lane.b32.xlu0 %v579, 32
        %v584 = vpop.permute.xlu0 %583
        %585 = vrot.lane.b32.xlu0 %v580, 32
        %v586 = vpop.permute.xlu0 %585
        %vm589 = vcmask 253952
        %590 = vst.msk [vmem:[#allocation4] sm:$0x1] %vm589, %v584
        %591 = vst.msk [vmem:[#allocation4 + $0x8] sm:$0x1] %vm589, %v586
        %v592 = vld [vmem:[#allocation5 + $0x1] sm:$0x1]
        %v593 = vld [vmem:[#allocation5 + $0x9] sm:$0x1]
        %v594 = vrot.slane %v580, 7
        %vm595 = vcmask 1041409
        %v596 = vsel %vm595, %v594, %v579
        %597 = vrot.lane.b32.xlu0 %v596, 32
        %v598 = vpop.permute.xlu0 %597
        %v599 = vsel %vm469, %v598, 0
        %601 = vmatpush.msra.mxu0 0.0
        %602 = vmatpush.msra.mxu0 0.0
        %603 = vmatpush.msra.mxu0 0.0
        %604 = vmatpush.msra.mxu0 0.0
        %605 = vmatpush.msra.mxu0 0.0
        %606 = vmatpush.msra.mxu0 0.0
        %607 = vmatpush.msra.mxu0 0.0
        %608 = vmatpush.msra.mxu0 0.0
        %609 = vmatpush.msra.mxu0 0.0
        %610 = vmatpush.msra.mxu0 0.0
        %611 = vmatpush.msra.mxu0 0.0
        %612 = vmatpush.msra.mxu0 0.0
        %613 = vmatpush.msra.mxu0 %v428
        %614 = vmatpush.msra.mxu0 %v427
        %615 = vmatpush.msra.mxu0 %v426
        %616 = vmatpush.msra.mxu0 %v425
        %617 = vmatmul.f32.gmra.mxu0 %v599
        %v618 = vpop.f32.mrf.mxu0
        %v619 = vadd.f32 0.0, %v618
        %620 = vdwg.mxu0
        %v622 = vrot.slane %v619, 1
        %v625 = vadd.f32 %v592, %v619
        %v626 = vadd.f32 %v593, %v622
        %v627 = vxor.u32 %v625, 2147483648
        %v628 = vxor.u32 %v626, 2147483648
        %v629 = vmul.f32 %v627, 1.442695
        %v630 = vpow.pop %v629
        %v631 = vmul.f32 %v628, 1.442695
        %v632 = vpow.pop %v631
        %v633 = vadd.f32 %v630, 1.0
        %v634 = vadd.f32 %v632, 1.0
        %v635 = vrcp.pop %v633
        %v636 = vmul.f32 %v633, %v635
        %v637 = vsub.f32 1.0, %v636
        %v638 = vmul.f32 %v635, %v637
        %v639 = vadd.f32 %v635, %v638
        %vm640 = vweird.f32 %v633
        %vm641 = vweird.f32 %v635
        %vm642 = vmor %vm640, %vm641
        %v643 = vsel %vm642, %v635, %v639
        %v644 = vand.u32 2147483647, %v633
        %vm645 = vcmp.eq.f32.partialorder %v644, 8.507059e+37
        %v646 = vand.u32 %v633, 2147483648
        %v647 = vor.u32 1.1754944e-38, %v646
        %v648 = vsel %vm645, %v647, %v643
        %v649 = vmul.f32 1.0, %v648
        %v650 = vrcp.pop %v634
        %v651 = vmul.f32 %v634, %v650
        %v652 = vsub.f32 1.0, %v651
        %v653 = vmul.f32 %v650, %v652
        %v654 = vadd.f32 %v650, %v653
        %vm655 = vweird.f32 %v634
        %vm656 = vweird.f32 %v650
        %vm657 = vmor %vm655, %vm656
        %v658 = vsel %vm657, %v650, %v654
        %v659 = vand.u32 2147483647, %v634
        %vm660 = vcmp.eq.f32.partialorder %v659, 8.507059e+37
        %v661 = vand.u32 %v634, 2147483648
        %v662 = vor.u32 1.1754944e-38, %v661
        %v663 = vsel %vm660, %v662, %v658
        %v664 = vmul.f32 1.0, %v663
        %v665 = vtanh.pop %v625
        %v666 = vtanh.pop %v626
        %v667 = vmul.f32 %v649, %v567
        %v668 = vmul.f32 %v664, %v568
        %671 = vrot.lane.b32.xlu0 %v665, 64
        %v672 = vpop.permute.xlu0 %671
        %673 = vrot.lane.b32.xlu0 %v666, 64
        %v674 = vpop.permute.xlu0 %673
        %v677 = vmul.f32 %v649, %v672
        %v678 = vmul.f32 %v664, %v674
        %681 = vrot.lane.b32.xlu0 %v677, 32
        %v682 = vpop.permute.xlu0 %681
        %683 = vrot.lane.b32.xlu0 %v678, 32
        %v684 = vpop.permute.xlu0 %683
        %v687 = vadd.f32 %v667, %v682
        %v688 = vadd.f32 %v668, %v684
        %v689 = vtanh.pop %v687
        %v690 = vtanh.pop %v688
        %693 = vrot.lane.b32.xlu0 %v689, 64
        %v694 = vpop.permute.xlu0 %693
        %695 = vrot.lane.b32.xlu0 %v690, 64
        %v696 = vpop.permute.xlu0 %695
        %v699 = vmul.f32 %v649, %v694
        %v700 = vmul.f32 %v664, %v696
        %703 = vrot.lane.b32.xlu0 %v699, 32
        %v704 = vpop.permute.xlu0 %703
        %705 = vrot.lane.b32.xlu0 %v700, 32
        %v706 = vpop.permute.xlu0 %705
        %709 = vst.msk [vmem:[#allocation4 + $0x1] sm:$0x1] %vm589, %v704
        %710 = vst.msk [vmem:[#allocation4 + $0x9] sm:$0x1] %vm589, %v706
        %v711 = vld [vmem:[#allocation5 + $0x2] sm:$0x1]
        %v712 = vld [vmem:[#allocation5 + $0xa] sm:$0x1]
        %v713 = vrot.slane %v700, 7
        %v714 = vsel %vm595, %v713, %v699
        %715 = vrot.lane.b32.xlu0 %v714, 32
        %v716 = vpop.permute.xlu0 %715
        %v717 = vsel %vm469, %v716, 0
        %719 = vmatpush.msra.mxu0 0.0
        %720 = vmatpush.msra.mxu0 0.0
        %721 = vmatpush.msra.mxu0 0.0
        %722 = vmatpush.msra.mxu0 0.0
        %723 = vmatpush.msra.mxu0 0.0
        %724 = vmatpush.msra.mxu0 0.0
        %725 = vmatpush.msra.mxu0 0.0
        %726 = vmatpush.msra.mxu0 0.0
        %727 = vmatpush.msra.mxu0 0.0
        %728 = vmatpush.msra.mxu0 0.0
        %729 = vmatpush.msra.mxu0 0.0
        %730 = vmatpush.msra.mxu0 0.0
        %731 = vmatpush.msra.mxu0 %v428
        %732 = vmatpush.msra.mxu0 %v427
        %733 = vmatpush.msra.mxu0 %v426
        %734 = vmatpush.msra.mxu0 %v425
        %735 = vmatmul.f32.gmra.mxu0 %v717
        %v736 = vpop.f32.mrf.mxu0
        %v737 = vadd.f32 0.0, %v736
        %738 = vdwg.mxu0
        %v740 = vrot.slane %v737, 1
        %v743 = vadd.f32 %v711, %v737
        %v744 = vadd.f32 %v712, %v740
        %v745 = vxor.u32 %v743, 2147483648
        %v746 = vxor.u32 %v744, 2147483648
        %v747 = vmul.f32 %v745, 1.442695
        %v748 = vpow.pop %v747
        %v749 = vmul.f32 %v746, 1.442695
        %v750 = vpow.pop %v749
        %v751 = vadd.f32 %v748, 1.0
        %v752 = vadd.f32 %v750, 1.0
        %v753 = vrcp.pop %v751
        %v754 = vmul.f32 %v751, %v753
        %v755 = vsub.f32 1.0, %v754
        %v756 = vmul.f32 %v753, %v755
        %v757 = vadd.f32 %v753, %v756
        %vm758 = vweird.f32 %v751
        %vm759 = vweird.f32 %v753
        %vm760 = vmor %vm758, %vm759
        %v761 = vsel %vm760, %v753, %v757
        %v762 = vand.u32 2147483647, %v751
        %vm763 = vcmp.eq.f32.partialorder %v762, 8.507059e+37
        %v764 = vand.u32 %v751, 2147483648
        %v765 = vor.u32 1.1754944e-38, %v764
        %v766 = vsel %vm763, %v765, %v761
        %v767 = vmul.f32 1.0, %v766
        %v768 = vrcp.pop %v752
        %v769 = vmul.f32 %v752, %v768
        %v770 = vsub.f32 1.0, %v769
        %v771 = vmul.f32 %v768, %v770
        %v772 = vadd.f32 %v768, %v771
        %vm773 = vweird.f32 %v752
        %vm774 = vweird.f32 %v768
        %vm775 = vmor %vm773, %vm774
        %v776 = vsel %vm775, %v768, %v772
        %v777 = vand.u32 2147483647, %v752
        %vm778 = vcmp.eq.f32.partialorder %v777, 8.507059e+37
        %v779 = vand.u32 %v752, 2147483648
        %v780 = vor.u32 1.1754944e-38, %v779
        %v781 = vsel %vm778, %v780, %v776
        %v782 = vmul.f32 1.0, %v781
        %v783 = vtanh.pop %v743
        %v784 = vtanh.pop %v744
        %v785 = vmul.f32 %v767, %v687
        %v786 = vmul.f32 %v782, %v688
        %789 = vrot.lane.b32.xlu0 %v783, 64
        %v790 = vpop.permute.xlu0 %789
        %791 = vrot.lane.b32.xlu0 %v784, 64
        %v792 = vpop.permute.xlu0 %791
        %v795 = vmul.f32 %v767, %v790
        %v796 = vmul.f32 %v782, %v792
        %799 = vrot.lane.b32.xlu0 %v795, 32
        %v800 = vpop.permute.xlu0 %799
        %801 = vrot.lane.b32.xlu0 %v796, 32
        %v802 = vpop.permute.xlu0 %801
        %v805 = vadd.f32 %v785, %v800
        %v806 = vadd.f32 %v786, %v802
        %v807 = vtanh.pop %v805
        %v808 = vtanh.pop %v806
        %811 = vrot.lane.b32.xlu0 %v807, 64
        %v812 = vpop.permute.xlu0 %811
        %813 = vrot.lane.b32.xlu0 %v808, 64
        %v814 = vpop.permute.xlu0 %813
        %v817 = vmul.f32 %v767, %v812
        %v818 = vmul.f32 %v782, %v814
        %821 = vrot.lane.b32.xlu0 %v817, 32
        %v822 = vpop.permute.xlu0 %821
        %823 = vrot.lane.b32.xlu0 %v818, 32
        %v824 = vpop.permute.xlu0 %823
        %827 = vst.msk [vmem:[#allocation4 + $0x2] sm:$0x1] %vm589, %v822
        %828 = vst.msk [vmem:[#allocation4 + $0xa] sm:$0x1] %vm589, %v824
        %v829 = vld [vmem:[#allocation5 + $0x3] sm:$0x1]
        %v830 = vld [vmem:[#allocation5 + $0xb] sm:$0x1]
        %v831 = vrot.slane %v818, 7
        %v832 = vsel %vm595, %v831, %v817
        %833 = vrot.lane.b32.xlu0 %v832, 32
        %v834 = vpop.permute.xlu0 %833
        %v835 = vsel %vm469, %v834, 0
        %837 = vmatpush.msra.mxu0 0.0
        %838 = vmatpush.msra.mxu0 0.0
        %839 = vmatpush.msra.mxu0 0.0
        %840 = vmatpush.msra.mxu0 0.0
        %841 = vmatpush.msra.mxu0 0.0
        %842 = vmatpush.msra.mxu0 0.0
        %843 = vmatpush.msra.mxu0 0.0
        %844 = vmatpush.msra.mxu0 0.0
        %845 = vmatpush.msra.mxu0 0.0
        %846 = vmatpush.msra.mxu0 0.0
        %847 = vmatpush.msra.mxu0 0.0
        %848 = vmatpush.msra.mxu0 0.0
        %849 = vmatpush.msra.mxu0 %v428
        %850 = vmatpush.msra.mxu0 %v427
        %851 = vmatpush.msra.mxu0 %v426
        %852 = vmatpush.msra.mxu0 %v425
        %853 = vmatmul.f32.gmra.mxu0 %v835
        %v854 = vpop.f32.mrf.mxu0
        %v855 = vadd.f32 0.0, %v854
        %856 = vdwg.mxu0
        %v858 = vrot.slane %v855, 1
        %v861 = vadd.f32 %v829, %v855
        %v862 = vadd.f32 %v830, %v858
        %v863 = vxor.u32 %v861, 2147483648
        %v864 = vxor.u32 %v862, 2147483648
        %v865 = vmul.f32 %v863, 1.442695
        %v866 = vpow.pop %v865
        %v867 = vmul.f32 %v864, 1.442695
        %v868 = vpow.pop %v867
        %v869 = vadd.f32 %v866, 1.0
        %v870 = vadd.f32 %v868, 1.0
        %v871 = vrcp.pop %v869
        %v872 = vmul.f32 %v869, %v871
        %v873 = vsub.f32 1.0, %v872
        %v874 = vmul.f32 %v871, %v873
        %v875 = vadd.f32 %v871, %v874
        %vm876 = vweird.f32 %v869
        %vm877 = vweird.f32 %v871
        %vm878 = vmor %vm876, %vm877
        %v879 = vsel %vm878, %v871, %v875
        %v880 = vand.u32 2147483647, %v869
        %vm881 = vcmp.eq.f32.partialorder %v880, 8.507059e+37
        %v882 = vand.u32 %v869, 2147483648
        %v883 = vor.u32 1.1754944e-38, %v882
        %v884 = vsel %vm881, %v883, %v879
        %v885 = vmul.f32 1.0, %v884
        %v886 = vrcp.pop %v870
        %v887 = vmul.f32 %v870, %v886
        %v888 = vsub.f32 1.0, %v887
        %v889 = vmul.f32 %v886, %v888
        %v890 = vadd.f32 %v886, %v889
        %vm891 = vweird.f32 %v870
        %vm892 = vweird.f32 %v886
        %vm893 = vmor %vm891, %vm892
        %v894 = vsel %vm893, %v886, %v890
        %v895 = vand.u32 2147483647, %v870
        %vm896 = vcmp.eq.f32.partialorder %v895, 8.507059e+37
        %v897 = vand.u32 %v870, 2147483648
        %v898 = vor.u32 1.1754944e-38, %v897
        %v899 = vsel %vm896, %v898, %v894
        %v900 = vmul.f32 1.0, %v899
        %v901 = vtanh.pop %v861
        %v902 = vtanh.pop %v862
        %v903 = vmul.f32 %v885, %v805
        %v904 = vmul.f32 %v900, %v806
        %907 = vrot.lane.b32.xlu0 %v901, 64
        %v908 = vpop.permute.xlu0 %907
        %909 = vrot.lane.b32.xlu0 %v902, 64
        %v910 = vpop.permute.xlu0 %909
        %v913 = vmul.f32 %v885, %v908
        %v914 = vmul.f32 %v900, %v910
        %917 = vrot.lane.b32.xlu0 %v913, 32
        %v918 = vpop.permute.xlu0 %917
        %919 = vrot.lane.b32.xlu0 %v914, 32
        %v920 = vpop.permute.xlu0 %919
        %v923 = vadd.f32 %v903, %v918
        %v924 = vadd.f32 %v904, %v920
        %v925 = vtanh.pop %v923
        %v926 = vtanh.pop %v924
        %929 = vrot.lane.b32.xlu0 %v925, 64
        %v930 = vpop.permute.xlu0 %929
        %931 = vrot.lane.b32.xlu0 %v926, 64
        %v932 = vpop.permute.xlu0 %931
        %v935 = vmul.f32 %v885, %v930
        %v936 = vmul.f32 %v900, %v932
        %939 = vrot.lane.b32.xlu0 %v935, 32
        %v940 = vpop.permute.xlu0 %939
        %941 = vrot.lane.b32.xlu0 %v936, 32
        %v942 = vpop.permute.xlu0 %941
        %945 = vst.msk [vmem:[#allocation4 + $0x3] sm:$0x1] %vm589, %v940
        %946 = vst.msk [vmem:[#allocation4 + $0xb] sm:$0x1] %vm589, %v942
        %v947 = vld [vmem:[#allocation5 + $0x4] sm:$0x1]
        %v948 = vld [vmem:[#allocation5 + $0xc] sm:$0x1]
        %v949 = vrot.slane %v936, 7
        %v950 = vsel %vm595, %v949, %v935
        %951 = vrot.lane.b32.xlu0 %v950, 32
        %v952 = vpop.permute.xlu0 %951
        %v953 = vsel %vm469, %v952, 0
        %955 = vmatpush.msra.mxu0 0.0
        %956 = vmatpush.msra.mxu0 0.0
        %957 = vmatpush.msra.mxu0 0.0
        %958 = vmatpush.msra.mxu0 0.0
        %959 = vmatpush.msra.mxu0 0.0
        %960 = vmatpush.msra.mxu0 0.0
        %961 = vmatpush.msra.mxu0 0.0
        %962 = vmatpush.msra.mxu0 0.0
        %963 = vmatpush.msra.mxu0 0.0
        %964 = vmatpush.msra.mxu0 0.0
        %965 = vmatpush.msra.mxu0 0.0
        %966 = vmatpush.msra.mxu0 0.0
        %967 = vmatpush.msra.mxu0 %v428
        %968 = vmatpush.msra.mxu0 %v427
        %969 = vmatpush.msra.mxu0 %v426
        %970 = vmatpush.msra.mxu0 %v425
        %971 = vmatmul.f32.gmra.mxu0 %v953
        %v972 = vpop.f32.mrf.mxu0
        %v973 = vadd.f32 0.0, %v972
        %974 = vdwg.mxu0
        %v976 = vrot.slane %v973, 1
        %v979 = vadd.f32 %v947, %v973
        %v980 = vadd.f32 %v948, %v976
        %v981 = vxor.u32 %v979, 2147483648
        %v982 = vxor.u32 %v980, 2147483648
        %v983 = vmul.f32 %v981, 1.442695
        %v984 = vpow.pop %v983
        %v985 = vmul.f32 %v982, 1.442695
        %v986 = vpow.pop %v985
        %v987 = vadd.f32 %v984, 1.0
        %v988 = vadd.f32 %v986, 1.0
        %v989 = vrcp.pop %v987
        %v990 = vmul.f32 %v987, %v989
        %v991 = vsub.f32 1.0, %v990
        %v992 = vmul.f32 %v989, %v991
        %v993 = vadd.f32 %v989, %v992
        %vm994 = vweird.f32 %v987
        %vm995 = vweird.f32 %v989
        %vm996 = vmor %vm994, %vm995
        %v997 = vsel %vm996, %v989, %v993
        %v998 = vand.u32 2147483647, %v987
        %vm999 = vcmp.eq.f32.partialorder %v998, 8.507059e+37
        %v1000 = vand.u32 %v987, 2147483648
        %v1001 = vor.u32 1.1754944e-38, %v1000
        %v1002 = vsel %vm999, %v1001, %v997
        %v1003 = vmul.f32 1.0, %v1002
        %v1004 = vrcp.pop %v988
        %v1005 = vmul.f32 %v988, %v1004
        %v1006 = vsub.f32 1.0, %v1005
        %v1007 = vmul.f32 %v1004, %v1006
        %v1008 = vadd.f32 %v1004, %v1007
        %vm1009 = vweird.f32 %v988
        %vm1010 = vweird.f32 %v1004
        %vm1011 = vmor %vm1009, %vm1010
        %v1012 = vsel %vm1011, %v1004, %v1008
        %v1013 = vand.u32 2147483647, %v988
        %vm1014 = vcmp.eq.f32.partialorder %v1013, 8.507059e+37
        %v1015 = vand.u32 %v988, 2147483648
        %v1016 = vor.u32 1.1754944e-38, %v1015
        %v1017 = vsel %vm1014, %v1016, %v1012
        %v1018 = vmul.f32 1.0, %v1017
        %v1019 = vtanh.pop %v979
        %v1020 = vtanh.pop %v980
        %v1021 = vmul.f32 %v1003, %v923
        %v1022 = vmul.f32 %v1018, %v924
        %1025 = vrot.lane.b32.xlu0 %v1019, 64
        %v1026 = vpop.permute.xlu0 %1025
        %1027 = vrot.lane.b32.xlu0 %v1020, 64
        %v1028 = vpop.permute.xlu0 %1027
        %v1031 = vmul.f32 %v1003, %v1026
        %v1032 = vmul.f32 %v1018, %v1028
        %1035 = vrot.lane.b32.xlu0 %v1031, 32
        %v1036 = vpop.permute.xlu0 %1035
        %1037 = vrot.lane.b32.xlu0 %v1032, 32
        %v1038 = vpop.permute.xlu0 %1037
        %v1041 = vadd.f32 %v1021, %v1036
        %v1042 = vadd.f32 %v1022, %v1038
        %v1043 = vtanh.pop %v1041
        %v1044 = vtanh.pop %v1042
        %1047 = vrot.lane.b32.xlu0 %v1043, 64
        %v1048 = vpop.permute.xlu0 %1047
        %1049 = vrot.lane.b32.xlu0 %v1044, 64
        %v1050 = vpop.permute.xlu0 %1049
        %v1053 = vmul.f32 %v1003, %v1048
        %v1054 = vmul.f32 %v1018, %v1050
        %1057 = vrot.lane.b32.xlu0 %v1053, 32
        %v1058 = vpop.permute.xlu0 %1057
        %1059 = vrot.lane.b32.xlu0 %v1054, 32
        %v1060 = vpop.permute.xlu0 %1059
        %1063 = vst.msk [vmem:[#allocation4 + $0x4] sm:$0x1] %vm589, %v1058
        %1064 = vst.msk [vmem:[#allocation4 + $0xc] sm:$0x1] %vm589, %v1060
        %v1065 = vld [vmem:[#allocation5 + $0x5] sm:$0x1]
        %v1066 = vld [vmem:[#allocation5 + $0xd] sm:$0x1]
        %v1067 = vrot.slane %v1054, 7
        %v1068 = vsel %vm595, %v1067, %v1053
        %1069 = vrot.lane.b32.xlu0 %v1068, 32
        %v1070 = vpop.permute.xlu0 %1069
        %v1071 = vsel %vm469, %v1070, 0
        %1073 = vmatpush.msra.mxu0 0.0
        %1074 = vmatpush.msra.mxu0 0.0
        %1075 = vmatpush.msra.mxu0 0.0
        %1076 = vmatpush.msra.mxu0 0.0
        %1077 = vmatpush.msra.mxu0 0.0
        %1078 = vmatpush.msra.mxu0 0.0
        %1079 = vmatpush.msra.mxu0 0.0
        %1080 = vmatpush.msra.mxu0 0.0
        %1081 = vmatpush.msra.mxu0 0.0
        %1082 = vmatpush.msra.mxu0 0.0
        %1083 = vmatpush.msra.mxu0 0.0
        %1084 = vmatpush.msra.mxu0 0.0
        %1085 = vmatpush.msra.mxu0 %v428
        %1086 = vmatpush.msra.mxu0 %v427
        %1087 = vmatpush.msra.mxu0 %v426
        %1088 = vmatpush.msra.mxu0 %v425
        %1089 = vmatmul.f32.gmra.mxu0 %v1071
        %v1090 = vpop.f32.mrf.mxu0
        %v1091 = vadd.f32 0.0, %v1090
        %1092 = vdwg.mxu0
        %v1094 = vrot.slane %v1091, 1
        %v1097 = vadd.f32 %v1065, %v1091
        %v1098 = vadd.f32 %v1066, %v1094
        %v1099 = vxor.u32 %v1097, 2147483648
        %v1100 = vxor.u32 %v1098, 2147483648
        %v1101 = vmul.f32 %v1099, 1.442695
        %v1102 = vpow.pop %v1101
        %v1103 = vmul.f32 %v1100, 1.442695
        %v1104 = vpow.pop %v1103
        %v1105 = vadd.f32 %v1102, 1.0
        %v1106 = vadd.f32 %v1104, 1.0
        %v1107 = vrcp.pop %v1105
        %v1108 = vmul.f32 %v1105, %v1107
        %v1109 = vsub.f32 1.0, %v1108
        %v1110 = vmul.f32 %v1107, %v1109
        %v1111 = vadd.f32 %v1107, %v1110
        %vm1112 = vweird.f32 %v1105
        %vm1113 = vweird.f32 %v1107
        %vm1114 = vmor %vm1112, %vm1113
        %v1115 = vsel %vm1114, %v1107, %v1111
        %v1116 = vand.u32 2147483647, %v1105
        %vm1117 = vcmp.eq.f32.partialorder %v1116, 8.507059e+37
        %v1118 = vand.u32 %v1105, 2147483648
        %v1119 = vor.u32 1.1754944e-38, %v1118
        %v1120 = vsel %vm1117, %v1119, %v1115
        %v1121 = vmul.f32 1.0, %v1120
        %v1122 = vrcp.pop %v1106
        %v1123 = vmul.f32 %v1106, %v1122
        %v1124 = vsub.f32 1.0, %v1123
        %v1125 = vmul.f32 %v1122, %v1124
        %v1126 = vadd.f32 %v1122, %v1125
        %vm1127 = vweird.f32 %v1106
        %vm1128 = vweird.f32 %v1122
        %vm1129 = vmor %vm1127, %vm1128
        %v1130 = vsel %vm1129, %v1122, %v1126
        %v1131 = vand.u32 2147483647, %v1106
        %vm1132 = vcmp.eq.f32.partialorder %v1131, 8.507059e+37
        %v1133 = vand.u32 %v1106, 2147483648
        %v1134 = vor.u32 1.1754944e-38, %v1133
        %v1135 = vsel %vm1132, %v1134, %v1130
        %v1136 = vmul.f32 1.0, %v1135
        %v1137 = vtanh.pop %v1097
        %v1138 = vtanh.pop %v1098
        %v1139 = vmul.f32 %v1121, %v1041
        %v1140 = vmul.f32 %v1136, %v1042
        %1143 = vrot.lane.b32.xlu0 %v1137, 64
        %v1144 = vpop.permute.xlu0 %1143
        %1145 = vrot.lane.b32.xlu0 %v1138, 64
        %v1146 = vpop.permute.xlu0 %1145
        %v1149 = vmul.f32 %v1121, %v1144
        %v1150 = vmul.f32 %v1136, %v1146
        %1153 = vrot.lane.b32.xlu0 %v1149, 32
        %v1154 = vpop.permute.xlu0 %1153
        %1155 = vrot.lane.b32.xlu0 %v1150, 32
        %v1156 = vpop.permute.xlu0 %1155
        %v1159 = vadd.f32 %v1139, %v1154
        %v1160 = vadd.f32 %v1140, %v1156
        %v1161 = vtanh.pop %v1159
        %v1162 = vtanh.pop %v1160
        %1165 = vrot.lane.b32.xlu0 %v1161, 64
        %v1166 = vpop.permute.xlu0 %1165
        %1167 = vrot.lane.b32.xlu0 %v1162, 64
        %v1168 = vpop.permute.xlu0 %1167
        %v1171 = vmul.f32 %v1121, %v1166
        %v1172 = vmul.f32 %v1136, %v1168
        %1175 = vrot.lane.b32.xlu0 %v1171, 32
        %v1176 = vpop.permute.xlu0 %1175
        %1177 = vrot.lane.b32.xlu0 %v1172, 32
        %v1178 = vpop.permute.xlu0 %1177
        %1181 = vst.msk [vmem:[#allocation4 + $0x5] sm:$0x1] %vm589, %v1176
        %1182 = vst.msk [vmem:[#allocation4 + $0xd] sm:$0x1] %vm589, %v1178
        %v1183 = vld [vmem:[#allocation5 + $0x6] sm:$0x1]
        %v1184 = vld [vmem:[#allocation5 + $0xe] sm:$0x1]
        %v1185 = vrot.slane %v1172, 7
        %v1186 = vsel %vm595, %v1185, %v1171
        %1187 = vrot.lane.b32.xlu0 %v1186, 32
        %v1188 = vpop.permute.xlu0 %1187
        %v1189 = vsel %vm469, %v1188, 0
        %1191 = vmatpush.msra.mxu0 0.0
        %1192 = vmatpush.msra.mxu0 0.0
        %1193 = vmatpush.msra.mxu0 0.0
        %1194 = vmatpush.msra.mxu0 0.0
        %1195 = vmatpush.msra.mxu0 0.0
        %1196 = vmatpush.msra.mxu0 0.0
        %1197 = vmatpush.msra.mxu0 0.0
        %1198 = vmatpush.msra.mxu0 0.0
        %1199 = vmatpush.msra.mxu0 0.0
        %1200 = vmatpush.msra.mxu0 0.0
        %1201 = vmatpush.msra.mxu0 0.0
        %1202 = vmatpush.msra.mxu0 0.0
        %1203 = vmatpush.msra.mxu0 %v428
        %1204 = vmatpush.msra.mxu0 %v427
        %1205 = vmatpush.msra.mxu0 %v426
        %1206 = vmatpush.msra.mxu0 %v425
        %1207 = vmatmul.f32.gmra.mxu0 %v1189
        %v1208 = vpop.f32.mrf.mxu0
        %v1209 = vadd.f32 0.0, %v1208
        %1210 = vdwg.mxu0
        %v1212 = vrot.slane %v1209, 1
        %v1215 = vadd.f32 %v1183, %v1209
        %v1216 = vadd.f32 %v1184, %v1212
        %v1217 = vxor.u32 %v1215, 2147483648
        %v1218 = vxor.u32 %v1216, 2147483648
        %v1219 = vmul.f32 %v1217, 1.442695
        %v1220 = vpow.pop %v1219
        %v1221 = vmul.f32 %v1218, 1.442695
        %v1222 = vpow.pop %v1221
        %v1223 = vadd.f32 %v1220, 1.0
        %v1224 = vadd.f32 %v1222, 1.0
        %v1225 = vrcp.pop %v1223
        %v1226 = vmul.f32 %v1223, %v1225
        %v1227 = vsub.f32 1.0, %v1226
        %v1228 = vmul.f32 %v1225, %v1227
        %v1229 = vadd.f32 %v1225, %v1228
        %vm1230 = vweird.f32 %v1223
        %vm1231 = vweird.f32 %v1225
        %vm1232 = vmor %vm1230, %vm1231
        %v1233 = vsel %vm1232, %v1225, %v1229
        %v1234 = vand.u32 2147483647, %v1223
        %vm1235 = vcmp.eq.f32.partialorder %v1234, 8.507059e+37
        %v1236 = vand.u32 %v1223, 2147483648
        %v1237 = vor.u32 1.1754944e-38, %v1236
        %v1238 = vsel %vm1235, %v1237, %v1233
        %v1239 = vmul.f32 1.0, %v1238
        %v1240 = vrcp.pop %v1224
        %v1241 = vmul.f32 %v1224, %v1240
        %v1242 = vsub.f32 1.0, %v1241
        %v1243 = vmul.f32 %v1240, %v1242
        %v1244 = vadd.f32 %v1240, %v1243
        %vm1245 = vweird.f32 %v1224
        %vm1246 = vweird.f32 %v1240
        %vm1247 = vmor %vm1245, %vm1246
        %v1248 = vsel %vm1247, %v1240, %v1244
        %v1249 = vand.u32 2147483647, %v1224
        %vm1250 = vcmp.eq.f32.partialorder %v1249, 8.507059e+37
        %v1251 = vand.u32 %v1224, 2147483648
        %v1252 = vor.u32 1.1754944e-38, %v1251
        %v1253 = vsel %vm1250, %v1252, %v1248
        %v1254 = vmul.f32 1.0, %v1253
        %v1255 = vtanh.pop %v1215
        %v1256 = vtanh.pop %v1216
        %v1257 = vmul.f32 %v1239, %v1159
        %v1258 = vmul.f32 %v1254, %v1160
        %1261 = vrot.lane.b32.xlu0 %v1255, 64
        %v1262 = vpop.permute.xlu0 %1261
        %1263 = vrot.lane.b32.xlu0 %v1256, 64
        %v1264 = vpop.permute.xlu0 %1263
        %v1267 = vmul.f32 %v1239, %v1262
        %v1268 = vmul.f32 %v1254, %v1264
        %1271 = vrot.lane.b32.xlu0 %v1267, 32
        %v1272 = vpop.permute.xlu0 %1271
        %1273 = vrot.lane.b32.xlu0 %v1268, 32
        %v1274 = vpop.permute.xlu0 %1273
        %v1277 = vadd.f32 %v1257, %v1272
        %v1278 = vadd.f32 %v1258, %v1274
        %v1279 = vtanh.pop %v1277
        %v1280 = vtanh.pop %v1278
        %1283 = vrot.lane.b32.xlu0 %v1279, 64
        %v1284 = vpop.permute.xlu0 %1283
        %1285 = vrot.lane.b32.xlu0 %v1280, 64
        %v1286 = vpop.permute.xlu0 %1285
        %v1289 = vmul.f32 %v1239, %v1284
        %v1290 = vmul.f32 %v1254, %v1286
        %1293 = vrot.lane.b32.xlu0 %v1289, 32
        %v1294 = vpop.permute.xlu0 %1293
        %1295 = vrot.lane.b32.xlu0 %v1290, 32
        %v1296 = vpop.permute.xlu0 %1295
        %1299 = vst.msk [vmem:[#allocation4 + $0x6] sm:$0x1] %vm589, %v1294
        %1300 = vst.msk [vmem:[#allocation4 + $0xe] sm:$0x1] %vm589, %v1296
        %v1301 = vld [vmem:[#allocation5 + $0x7] sm:$0x1]
        %v1302 = vld [vmem:[#allocation5 + $0xf] sm:$0x1]
        %v1303 = vrot.slane %v1290, 7
        %v1304 = vsel %vm595, %v1303, %v1289
        %1305 = vrot.lane.b32.xlu0 %v1304, 32
        %v1306 = vpop.permute.xlu0 %1305
        %v1307 = vsel %vm469, %v1306, 0
        %1309 = vmatpush.msra.mxu0 0.0
        %1310 = vmatpush.msra.mxu0 0.0
        %1311 = vmatpush.msra.mxu0 0.0
        %1312 = vmatpush.msra.mxu0 0.0
        %1313 = vmatpush.msra.mxu0 0.0
        %1314 = vmatpush.msra.mxu0 0.0
        %1315 = vmatpush.msra.mxu0 0.0
        %1316 = vmatpush.msra.mxu0 0.0
        %1317 = vmatpush.msra.mxu0 0.0
        %1318 = vmatpush.msra.mxu0 0.0
        %1319 = vmatpush.msra.mxu0 0.0
        %1320 = vmatpush.msra.mxu0 0.0
        %1321 = vmatpush.msra.mxu0 %v428
        %1322 = vmatpush.msra.mxu0 %v427
        %1323 = vmatpush.msra.mxu0 %v426
        %1324 = vmatpush.msra.mxu0 %v425
        %1325 = vmatmul.f32.gmra.mxu0 %v1307
        %v1326 = vpop.f32.mrf.mxu0
        %v1327 = vadd.f32 0.0, %v1326
        %1328 = vdwg.mxu0
        %v1330 = vrot.slane %v1327, 1
        %v1333 = vadd.f32 %v1301, %v1327
        %v1334 = vadd.f32 %v1302, %v1330
        %v1335 = vxor.u32 %v1333, 2147483648
        %v1336 = vxor.u32 %v1334, 2147483648
        %v1337 = vmul.f32 %v1335, 1.442695
        %v1338 = vpow.pop %v1337
        %v1339 = vmul.f32 %v1336, 1.442695
        %v1340 = vpow.pop %v1339
        %v1341 = vadd.f32 %v1338, 1.0
        %v1342 = vadd.f32 %v1340, 1.0
        %v1343 = vrcp.pop %v1341
        %v1344 = vmul.f32 %v1341, %v1343
        %v1345 = vsub.f32 1.0, %v1344
        %v1346 = vmul.f32 %v1343, %v1345
        %v1347 = vadd.f32 %v1343, %v1346
        %vm1348 = vweird.f32 %v1341
        %vm1349 = vweird.f32 %v1343
        %vm1350 = vmor %vm1348, %vm1349
        %v1351 = vsel %vm1350, %v1343, %v1347
        %v1352 = vand.u32 2147483647, %v1341
        %vm1353 = vcmp.eq.f32.partialorder %v1352, 8.507059e+37
        %v1354 = vand.u32 %v1341, 2147483648
        %v1355 = vor.u32 1.1754944e-38, %v1354
        %v1356 = vsel %vm1353, %v1355, %v1351
        %v1357 = vmul.f32 1.0, %v1356
        %v1358 = vrcp.pop %v1342
        %v1359 = vmul.f32 %v1342, %v1358
        %v1360 = vsub.f32 1.0, %v1359
        %v1361 = vmul.f32 %v1358, %v1360
        %v1362 = vadd.f32 %v1358, %v1361
        %vm1363 = vweird.f32 %v1342
        %vm1364 = vweird.f32 %v1358
        %vm1365 = vmor %vm1363, %vm1364
        %v1366 = vsel %vm1365, %v1358, %v1362
        %v1367 = vand.u32 2147483647, %v1342
        %vm1368 = vcmp.eq.f32.partialorder %v1367, 8.507059e+37
        %v1369 = vand.u32 %v1342, 2147483648
        %v1370 = vor.u32 1.1754944e-38, %v1369
        %v1371 = vsel %vm1368, %v1370, %v1366
        %v1372 = vmul.f32 1.0, %v1371
        %v1373 = vtanh.pop %v1333
        %v1374 = vtanh.pop %v1334
        %v1375 = vmul.f32 %v1357, %v1277
        %v1376 = vmul.f32 %v1372, %v1278
        %1379 = vrot.lane.b32.xlu0 %v1373, 64
        %v1380 = vpop.permute.xlu0 %1379
        %1381 = vrot.lane.b32.xlu0 %v1374, 64
        %v1382 = vpop.permute.xlu0 %1381
        %v1385 = vmul.f32 %v1357, %v1380
        %v1386 = vmul.f32 %v1372, %v1382
        %1389 = vrot.lane.b32.xlu0 %v1385, 32
        %v1390 = vpop.permute.xlu0 %1389
        %1391 = vrot.lane.b32.xlu0 %v1386, 32
        %v1392 = vpop.permute.xlu0 %1391
        %v1395 = vadd.f32 %v1375, %v1390
        %v1396 = vadd.f32 %v1376, %v1392
        %v1397 = vtanh.pop %v1395
        %v1398 = vtanh.pop %v1396
        %1401 = vrot.lane.b32.xlu0 %v1397, 64
        %v1402 = vpop.permute.xlu0 %1401
        %1403 = vrot.lane.b32.xlu0 %v1398, 64
        %v1404 = vpop.permute.xlu0 %1403
        %v1407 = vmul.f32 %v1357, %v1402
        %v1408 = vmul.f32 %v1372, %v1404
        %1411 = vrot.lane.b32.xlu0 %v1407, 32
        %v1412 = vpop.permute.xlu0 %1411
        %1413 = vrot.lane.b32.xlu0 %v1408, 32
        %v1414 = vpop.permute.xlu0 %1413
        %1417 = vst.msk [vmem:[#allocation4 + $0x7] sm:$0x1] %vm589, %v1412
        %1418 = vst.msk [vmem:[#allocation4 + $0xf] sm:$0x1] %vm589, %v1414
        %v1419 = vrot.slane %v1408, 7
        %v1420 = vsel %vm595, %v1419, %v1407
        %1421 = vrot.lane.b32.xlu0 %v1420, 32
        %v1422 = vpop.permute.xlu0 %1421
        %vm1424 = vcmask 254976
        %1425 = vst.msk [vmem:[#allocation2] sm:$0x3] %vm1424, %v1422
        %v1428 = vrot.slane %v1396, 7
        %v1429 = vsel %vm595, %v1428, %v1395
        %1430 = vrot.lane.b32.xlu0 %v1429, 96
        %v1431 = vpop.permute.xlu0 %1430
        %1433 = vst.msk [vmem:[#allocation3] sm:$0x3] %vm1424, %v1431
        %v1434 = vld [vmem:[#allocation4] sm:$0xff]
        %v1435 = vld [vmem:[#allocation4 + $0x8] sm:$0xff]
        %v1436 = vld [vmem:[#allocation11] sm:$0xff]
        %v1437 = vld [vmem:[#allocation11 + $0x8] sm:$0xff]
        %v1438 = vld [vmem:[#allocation11 + $0x10] sm:$0xff]
        %v1439 = vld [vmem:[#allocation11 + $0x18] sm:$0xff]
        %v1440 = vld [vmem:[#allocation13] sm:$0xff]
        %v1441 = vld [vmem:[#allocation13 + $0x8] sm:$0xff]
        %v1442 = vld [vmem:[#allocation13 + $0x10] sm:$0xff]
        %v1443 = vld [vmem:[#allocation13 + $0x18] sm:$0xff]
        %v1444 = vld [vmem:[%s6] sm:$0x1]
        %v1446 = vperm.slane %v1444, 0
        %v1449 = vsel %vm469, %v1434, 0
        %v1452 = vsel %vm469, %v1435, 0
        %1454 = vmatpush.msra.mxu0 0.0
        %1455 = vmatpush.msra.mxu0 0.0
        %1456 = vmatpush.msra.mxu0 0.0
        %1457 = vmatpush.msra.mxu0 0.0
        %1458 = vmatpush.msra.mxu0 0.0
        %1459 = vmatpush.msra.mxu0 0.0
        %1460 = vmatpush.msra.mxu0 0.0
        %1461 = vmatpush.msra.mxu0 0.0
        %1462 = vmatpush.msra.mxu0 0.0
        %1463 = vmatpush.msra.mxu0 0.0
        %1464 = vmatpush.msra.mxu0 0.0
        %1465 = vmatpush.msra.mxu0 0.0
        %1466 = vmatpush.msra.mxu0 %v1439
        %1467 = vmatpush.msra.mxu0 %v1438
        %1468 = vmatpush.msra.mxu0 %v1437
        %1469 = vmatpush.msra.mxu0 %v1436
        %1470 = vmatmul.f32.gmra.mxu0 %v1449
        %v1471 = vpop.f32.mrf.mxu0
        %v1472 = vadd.f32 %v1446, %v1471
        %1473 = vmatmul.f32.gmra.mxu0 %v1452
        %v1474 = vpop.f32.mrf.mxu0
        %v1475 = vadd.f32 %v1446, %v1474
        %1476 = vdwg.mxu0
        %1477 = vst [vmem:[#allocation5] sm:$0xff] %v1472
        %1478 = vst [vmem:[#allocation5 + $0x8] sm:$0xff] %v1475
        %s1479 = scalar_lea.vmem [#allocation2], 2
        %v1480 = vld [vmem:[%s1479] sm:$0x3]
        %s1481 = scalar_lea.vmem [#allocation3], 2
        %v1482 = vld [vmem:[%s1481] sm:$0x3]
        %v1483 = vld [vmem:[#allocation5] sm:$0x1]
        %v1484 = vld [vmem:[#allocation5 + $0x8] sm:$0x1]
        %v1486 = vsel %vm469, %v1480, 0
        %1488 = vmatpush.msra.mxu0 0.0
        %1489 = vmatpush.msra.mxu0 0.0
        %1490 = vmatpush.msra.mxu0 0.0
        %1491 = vmatpush.msra.mxu0 0.0
        %1492 = vmatpush.msra.mxu0 0.0
        %1493 = vmatpush.msra.mxu0 0.0
        %1494 = vmatpush.msra.mxu0 0.0
        %1495 = vmatpush.msra.mxu0 0.0
        %1496 = vmatpush.msra.mxu0 0.0
        %1497 = vmatpush.msra.mxu0 0.0
        %1498 = vmatpush.msra.mxu0 0.0
        %1499 = vmatpush.msra.mxu0 0.0
        %1500 = vmatpush.msra.mxu0 %v1443
        %1501 = vmatpush.msra.mxu0 %v1442
        %1502 = vmatpush.msra.mxu0 %v1441
        %1503 = vmatpush.msra.mxu0 %v1440
        %1504 = vmatmul.f32.gmra.mxu0 %v1486
        %v1505 = vpop.f32.mrf.mxu0
        %v1506 = vadd.f32 0.0, %v1505
        %1507 = vdwg.mxu0
        %v1509 = vrot.slane %v1506, 1
        %v1512 = vadd.f32 %v1483, %v1506
        %v1513 = vadd.f32 %v1484, %v1509
        %v1514 = vxor.u32 %v1512, 2147483648
        %v1515 = vxor.u32 %v1513, 2147483648
        %v1516 = vmul.f32 %v1514, 1.442695
        %v1517 = vpow.pop %v1516
        %v1518 = vmul.f32 %v1515, 1.442695
        %v1519 = vpow.pop %v1518
        %v1520 = vadd.f32 %v1517, 1.0
        %v1521 = vadd.f32 %v1519, 1.0
        %v1522 = vrcp.pop %v1520
        %v1523 = vmul.f32 %v1520, %v1522
        %v1524 = vsub.f32 1.0, %v1523
        %v1525 = vmul.f32 %v1522, %v1524
        %v1526 = vadd.f32 %v1522, %v1525
        %vm1527 = vweird.f32 %v1520
        %vm1528 = vweird.f32 %v1522
        %vm1529 = vmor %vm1527, %vm1528
        %v1530 = vsel %vm1529, %v1522, %v1526
        %v1531 = vand.u32 2147483647, %v1520
        %vm1532 = vcmp.eq.f32.partialorder %v1531, 8.507059e+37
        %v1533 = vand.u32 %v1520, 2147483648
        %v1534 = vor.u32 1.1754944e-38, %v1533
        %v1535 = vsel %vm1532, %v1534, %v1530
        %v1536 = vmul.f32 1.0, %v1535
        %v1537 = vrcp.pop %v1521
        %v1538 = vmul.f32 %v1521, %v1537
        %v1539 = vsub.f32 1.0, %v1538
        %v1540 = vmul.f32 %v1537, %v1539
        %v1541 = vadd.f32 %v1537, %v1540
        %vm1542 = vweird.f32 %v1521
        %vm1543 = vweird.f32 %v1537
        %vm1544 = vmor %vm1542, %vm1543
        %v1545 = vsel %vm1544, %v1537, %v1541
        %v1546 = vand.u32 2147483647, %v1521
        %vm1547 = vcmp.eq.f32.partialorder %v1546, 8.507059e+37
        %v1548 = vand.u32 %v1521, 2147483648
        %v1549 = vor.u32 1.1754944e-38, %v1548
        %v1550 = vsel %vm1547, %v1549, %v1545
        %v1551 = vmul.f32 1.0, %v1550
        %v1552 = vtanh.pop %v1512
        %v1553 = vtanh.pop %v1513
        %v1555 = vrot.slane %v1482, 1
        %1556 = vrot.lane.b32.xlu0 %v1482, 32
        %v1557 = vpop.permute.xlu0 %1556
        %1558 = vrot.lane.b32.xlu0 %v1555, 32
        %v1559 = vpop.permute.xlu0 %1558
        %v1562 = vmul.f32 %v1536, %v1557
        %v1563 = vmul.f32 %v1551, %v1559
        %1566 = vrot.lane.b32.xlu0 %v1552, 64
        %v1567 = vpop.permute.xlu0 %1566
        %1568 = vrot.lane.b32.xlu0 %v1553, 64
        %v1569 = vpop.permute.xlu0 %1568
        %v1572 = vmul.f32 %v1536, %v1567
        %v1573 = vmul.f32 %v1551, %v1569
        %1576 = vrot.lane.b32.xlu0 %v1572, 32
        %v1577 = vpop.permute.xlu0 %1576
        %1578 = vrot.lane.b32.xlu0 %v1573, 32
        %v1579 = vpop.permute.xlu0 %1578
        %v1582 = vadd.f32 %v1562, %v1577
        %v1583 = vadd.f32 %v1563, %v1579
        %v1584 = vtanh.pop %v1582
        %v1585 = vtanh.pop %v1583
        %1588 = vrot.lane.b32.xlu0 %v1584, 64
        %v1589 = vpop.permute.xlu0 %1588
        %1590 = vrot.lane.b32.xlu0 %v1585, 64
        %v1591 = vpop.permute.xlu0 %1590
        %v1594 = vmul.f32 %v1536, %v1589
        %v1595 = vmul.f32 %v1551, %v1591
        %v1596 = vxor.u32 %v1594, 2147483648
        %v1597 = vxor.u32 %v1595, 2147483648
        %v1598 = vmul.f32 %v1596, 1.442695
        %v1599 = vpow.pop %v1598
        %v1600 = vmul.f32 %v1597, 1.442695
        %v1601 = vpow.pop %v1600
        %v1602 = vadd.f32 %v1599, 1.0
        %v1603 = vadd.f32 %v1601, 1.0
        %v1604 = vrcp.pop %v1602
        %v1605 = vmul.f32 %v1602, %v1604
        %v1606 = vsub.f32 1.0, %v1605
        %v1607 = vmul.f32 %v1604, %v1606
        %v1608 = vadd.f32 %v1604, %v1607
        %vm1609 = vweird.f32 %v1602
        %vm1610 = vweird.f32 %v1604
        %vm1611 = vmor %vm1609, %vm1610
        %v1612 = vsel %vm1611, %v1604, %v1608
        %v1613 = vand.u32 2147483647, %v1602
        %vm1614 = vcmp.eq.f32.partialorder %v1613, 8.507059e+37
        %v1615 = vand.u32 %v1602, 2147483648
        %v1616 = vor.u32 1.1754944e-38, %v1615
        %v1617 = vsel %vm1614, %v1616, %v1612
        %v1618 = vmul.f32 1.0, %v1617
        %v1619 = vrcp.pop %v1603
        %v1620 = vmul.f32 %v1603, %v1619
        %v1621 = vsub.f32 1.0, %v1620
        %v1622 = vmul.f32 %v1619, %v1621
        %v1623 = vadd.f32 %v1619, %v1622
        %vm1624 = vweird.f32 %v1603
        %vm1625 = vweird.f32 %v1619
        %vm1626 = vmor %vm1624, %vm1625
        %v1627 = vsel %vm1626, %v1619, %v1623
        %v1628 = vand.u32 2147483647, %v1603
        %vm1629 = vcmp.eq.f32.partialorder %v1628, 8.507059e+37
        %v1630 = vand.u32 %v1603, 2147483648
        %v1631 = vor.u32 1.1754944e-38, %v1630
        %v1632 = vsel %vm1629, %v1631, %v1627
        %v1633 = vmul.f32 1.0, %v1632
        %v1634 = vmul.f32 %v1594, %v1618
        %v1635 = vmul.f32 %v1595, %v1633
        %1638 = vrot.lane.b32.xlu0 %v1634, 32
        %v1639 = vpop.permute.xlu0 %1638
        %1640 = vrot.lane.b32.xlu0 %v1635, 32
        %v1641 = vpop.permute.xlu0 %1640
        %1644 = vst.msk [vmem:[%s404] sm:$0x1] %vm589, %v1639
        %1645 = vst.msk [vmem:[%s404 + $0x8] sm:$0x1] %vm589, %v1641
        %v1646 = vld [vmem:[#allocation5 + $0x1] sm:$0x1]
        %v1647 = vld [vmem:[#allocation5 + $0x9] sm:$0x1]
        %v1650 = vrot.slane %v1595, 7
        %v1651 = vsel %vm595, %v1650, %v1594
        %1652 = vrot.lane.b32.xlu0 %v1651, 32
        %v1653 = vpop.permute.xlu0 %1652
        %v1654 = vsel %vm469, %v1653, 0
        %1656 = vmatpush.msra.mxu0 0.0
        %1657 = vmatpush.msra.mxu0 0.0
        %1658 = vmatpush.msra.mxu0 0.0
        %1659 = vmatpush.msra.mxu0 0.0
        %1660 = vmatpush.msra.mxu0 0.0
        %1661 = vmatpush.msra.mxu0 0.0
        %1662 = vmatpush.msra.mxu0 0.0
        %1663 = vmatpush.msra.mxu0 0.0
        %1664 = vmatpush.msra.mxu0 0.0
        %1665 = vmatpush.msra.mxu0 0.0
        %1666 = vmatpush.msra.mxu0 0.0
        %1667 = vmatpush.msra.mxu0 0.0
        %1668 = vmatpush.msra.mxu0 %v1443
        %1669 = vmatpush.msra.mxu0 %v1442
        %1670 = vmatpush.msra.mxu0 %v1441
        %1671 = vmatpush.msra.mxu0 %v1440
        %1672 = vmatmul.f32.gmra.mxu0 %v1654
        %v1673 = vpop.f32.mrf.mxu0
        %v1674 = vadd.f32 0.0, %v1673
        %1675 = vdwg.mxu0
        %v1677 = vrot.slane %v1674, 1
        %v1680 = vadd.f32 %v1646, %v1674
        %v1681 = vadd.f32 %v1647, %v1677
        %v1682 = vxor.u32 %v1680, 2147483648
        %v1683 = vxor.u32 %v1681, 2147483648
        %v1684 = vmul.f32 %v1682, 1.442695
        %v1685 = vpow.pop %v1684
        %v1686 = vmul.f32 %v1683, 1.442695
        %v1687 = vpow.pop %v1686
        %v1688 = vadd.f32 %v1685, 1.0
        %v1689 = vadd.f32 %v1687, 1.0
        %v1690 = vrcp.pop %v1688
        %v1691 = vmul.f32 %v1688, %v1690
        %v1692 = vsub.f32 1.0, %v1691
        %v1693 = vmul.f32 %v1690, %v1692
        %v1694 = vadd.f32 %v1690, %v1693
        %vm1695 = vweird.f32 %v1688
        %vm1696 = vweird.f32 %v1690
        %vm1697 = vmor %vm1695, %vm1696
        %v1698 = vsel %vm1697, %v1690, %v1694
        %v1699 = vand.u32 2147483647, %v1688
        %vm1700 = vcmp.eq.f32.partialorder %v1699, 8.507059e+37
        %v1701 = vand.u32 %v1688, 2147483648
        %v1702 = vor.u32 1.1754944e-38, %v1701
        %v1703 = vsel %vm1700, %v1702, %v1698
        %v1704 = vmul.f32 1.0, %v1703
        %v1705 = vrcp.pop %v1689
        %v1706 = vmul.f32 %v1689, %v1705
        %v1707 = vsub.f32 1.0, %v1706
        %v1708 = vmul.f32 %v1705, %v1707
        %v1709 = vadd.f32 %v1705, %v1708
        %vm1710 = vweird.f32 %v1689
        %vm1711 = vweird.f32 %v1705
        %vm1712 = vmor %vm1710, %vm1711
        %v1713 = vsel %vm1712, %v1705, %v1709
        %v1714 = vand.u32 2147483647, %v1689
        %vm1715 = vcmp.eq.f32.partialorder %v1714, 8.507059e+37
        %v1716 = vand.u32 %v1689, 2147483648
        %v1717 = vor.u32 1.1754944e-38, %v1716
        %v1718 = vsel %vm1715, %v1717, %v1713
        %v1719 = vmul.f32 1.0, %v1718
        %v1720 = vtanh.pop %v1680
        %v1721 = vtanh.pop %v1681
        %v1722 = vmul.f32 %v1704, %v1582
        %v1723 = vmul.f32 %v1719, %v1583
        %1726 = vrot.lane.b32.xlu0 %v1720, 64
        %v1727 = vpop.permute.xlu0 %1726
        %1728 = vrot.lane.b32.xlu0 %v1721, 64
        %v1729 = vpop.permute.xlu0 %1728
        %v1732 = vmul.f32 %v1704, %v1727
        %v1733 = vmul.f32 %v1719, %v1729
        %1736 = vrot.lane.b32.xlu0 %v1732, 32
        %v1737 = vpop.permute.xlu0 %1736
        %1738 = vrot.lane.b32.xlu0 %v1733, 32
        %v1739 = vpop.permute.xlu0 %1738
        %v1742 = vadd.f32 %v1722, %v1737
        %v1743 = vadd.f32 %v1723, %v1739
        %v1744 = vtanh.pop %v1742
        %v1745 = vtanh.pop %v1743
        %1748 = vrot.lane.b32.xlu0 %v1744, 64
        %v1749 = vpop.permute.xlu0 %1748
        %1750 = vrot.lane.b32.xlu0 %v1745, 64
        %v1751 = vpop.permute.xlu0 %1750
        %v1754 = vmul.f32 %v1704, %v1749
        %v1755 = vmul.f32 %v1719, %v1751
        %v1756 = vxor.u32 %v1754, 2147483648
        %v1757 = vxor.u32 %v1755, 2147483648
        %v1758 = vmul.f32 %v1756, 1.442695
        %v1759 = vpow.pop %v1758
        %v1760 = vmul.f32 %v1757, 1.442695
        %v1761 = vpow.pop %v1760
        %v1762 = vadd.f32 %v1759, 1.0
        %v1763 = vadd.f32 %v1761, 1.0
        %v1764 = vrcp.pop %v1762
        %v1765 = vmul.f32 %v1762, %v1764
        %v1766 = vsub.f32 1.0, %v1765
        %v1767 = vmul.f32 %v1764, %v1766
        %v1768 = vadd.f32 %v1764, %v1767
        %vm1769 = vweird.f32 %v1762
        %vm1770 = vweird.f32 %v1764
        %vm1771 = vmor %vm1769, %vm1770
        %v1772 = vsel %vm1771, %v1764, %v1768
        %v1773 = vand.u32 2147483647, %v1762
        %vm1774 = vcmp.eq.f32.partialorder %v1773, 8.507059e+37
        %v1775 = vand.u32 %v1762, 2147483648
        %v1776 = vor.u32 1.1754944e-38, %v1775
        %v1777 = vsel %vm1774, %v1776, %v1772
        %v1778 = vmul.f32 1.0, %v1777
        %v1779 = vrcp.pop %v1763
        %v1780 = vmul.f32 %v1763, %v1779
        %v1781 = vsub.f32 1.0, %v1780
        %v1782 = vmul.f32 %v1779, %v1781
        %v1783 = vadd.f32 %v1779, %v1782
        %vm1784 = vweird.f32 %v1763
        %vm1785 = vweird.f32 %v1779
        %vm1786 = vmor %vm1784, %vm1785
        %v1787 = vsel %vm1786, %v1779, %v1783
        %v1788 = vand.u32 2147483647, %v1763
        %vm1789 = vcmp.eq.f32.partialorder %v1788, 8.507059e+37
        %v1790 = vand.u32 %v1763, 2147483648
        %v1791 = vor.u32 1.1754944e-38, %v1790
        %v1792 = vsel %vm1789, %v1791, %v1787
        %v1793 = vmul.f32 1.0, %v1792
        %v1794 = vmul.f32 %v1754, %v1778
        %v1795 = vmul.f32 %v1755, %v1793
        %1798 = vrot.lane.b32.xlu0 %v1794, 32
        %v1799 = vpop.permute.xlu0 %1798
        %1800 = vrot.lane.b32.xlu0 %v1795, 32
        %v1801 = vpop.permute.xlu0 %1800
        %1804 = vst.msk [vmem:[%s404 + $0x1] sm:$0x1] %vm589, %v1799
        %1805 = vst.msk [vmem:[%s404 + $0x9] sm:$0x1] %vm589, %v1801
        %v1806 = vld [vmem:[#allocation5 + $0x2] sm:$0x1]
        %v1807 = vld [vmem:[#allocation5 + $0xa] sm:$0x1]
        %v1810 = vrot.slane %v1755, 7
        %v1811 = vsel %vm595, %v1810, %v1754
        %1812 = vrot.lane.b32.xlu0 %v1811, 32
        %v1813 = vpop.permute.xlu0 %1812
        %v1814 = vsel %vm469, %v1813, 0
        %1816 = vmatpush.msra.mxu0 0.0
        %1817 = vmatpush.msra.mxu0 0.0
        %1818 = vmatpush.msra.mxu0 0.0
        %1819 = vmatpush.msra.mxu0 0.0
        %1820 = vmatpush.msra.mxu0 0.0
        %1821 = vmatpush.msra.mxu0 0.0
        %1822 = vmatpush.msra.mxu0 0.0
        %1823 = vmatpush.msra.mxu0 0.0
        %1824 = vmatpush.msra.mxu0 0.0
        %1825 = vmatpush.msra.mxu0 0.0
        %1826 = vmatpush.msra.mxu0 0.0
        %1827 = vmatpush.msra.mxu0 0.0
        %1828 = vmatpush.msra.mxu0 %v1443
        %1829 = vmatpush.msra.mxu0 %v1442
        %1830 = vmatpush.msra.mxu0 %v1441
        %1831 = vmatpush.msra.mxu0 %v1440
        %1832 = vmatmul.f32.gmra.mxu0 %v1814
        %v1833 = vpop.f32.mrf.mxu0
        %v1834 = vadd.f32 0.0, %v1833
        %1835 = vdwg.mxu0
        %v1837 = vrot.slane %v1834, 1
        %v1840 = vadd.f32 %v1806, %v1834
        %v1841 = vadd.f32 %v1807, %v1837
        %v1842 = vxor.u32 %v1840, 2147483648
        %v1843 = vxor.u32 %v1841, 2147483648
        %v1844 = vmul.f32 %v1842, 1.442695
        %v1845 = vpow.pop %v1844
        %v1846 = vmul.f32 %v1843, 1.442695
        %v1847 = vpow.pop %v1846
        %v1848 = vadd.f32 %v1845, 1.0
        %v1849 = vadd.f32 %v1847, 1.0
        %v1850 = vrcp.pop %v1848
        %v1851 = vmul.f32 %v1848, %v1850
        %v1852 = vsub.f32 1.0, %v1851
        %v1853 = vmul.f32 %v1850, %v1852
        %v1854 = vadd.f32 %v1850, %v1853
        %vm1855 = vweird.f32 %v1848
        %vm1856 = vweird.f32 %v1850
        %vm1857 = vmor %vm1855, %vm1856
        %v1858 = vsel %vm1857, %v1850, %v1854
        %v1859 = vand.u32 2147483647, %v1848
        %vm1860 = vcmp.eq.f32.partialorder %v1859, 8.507059e+37
        %v1861 = vand.u32 %v1848, 2147483648
        %v1862 = vor.u32 1.1754944e-38, %v1861
        %v1863 = vsel %vm1860, %v1862, %v1858
        %v1864 = vmul.f32 1.0, %v1863
        %v1865 = vrcp.pop %v1849
        %v1866 = vmul.f32 %v1849, %v1865
        %v1867 = vsub.f32 1.0, %v1866
        %v1868 = vmul.f32 %v1865, %v1867
        %v1869 = vadd.f32 %v1865, %v1868
        %vm1870 = vweird.f32 %v1849
        %vm1871 = vweird.f32 %v1865
        %vm1872 = vmor %vm1870, %vm1871
        %v1873 = vsel %vm1872, %v1865, %v1869
        %v1874 = vand.u32 2147483647, %v1849
        %vm1875 = vcmp.eq.f32.partialorder %v1874, 8.507059e+37
        %v1876 = vand.u32 %v1849, 2147483648
        %v1877 = vor.u32 1.1754944e-38, %v1876
        %v1878 = vsel %vm1875, %v1877, %v1873
        %v1879 = vmul.f32 1.0, %v1878
        %v1880 = vtanh.pop %v1840
        %v1881 = vtanh.pop %v1841
        %v1882 = vmul.f32 %v1864, %v1742
        %v1883 = vmul.f32 %v1879, %v1743
        %1886 = vrot.lane.b32.xlu0 %v1880, 64
        %v1887 = vpop.permute.xlu0 %1886
        %1888 = vrot.lane.b32.xlu0 %v1881, 64
        %v1889 = vpop.permute.xlu0 %1888
        %v1892 = vmul.f32 %v1864, %v1887
        %v1893 = vmul.f32 %v1879, %v1889
        %1896 = vrot.lane.b32.xlu0 %v1892, 32
        %v1897 = vpop.permute.xlu0 %1896
        %1898 = vrot.lane.b32.xlu0 %v1893, 32
        %v1899 = vpop.permute.xlu0 %1898
        %v1902 = vadd.f32 %v1882, %v1897
        %v1903 = vadd.f32 %v1883, %v1899
        %v1904 = vtanh.pop %v1902
        %v1905 = vtanh.pop %v1903
        %1908 = vrot.lane.b32.xlu0 %v1904, 64
        %v1909 = vpop.permute.xlu0 %1908
        %1910 = vrot.lane.b32.xlu0 %v1905, 64
        %v1911 = vpop.permute.xlu0 %1910
        %v1914 = vmul.f32 %v1864, %v1909
        %v1915 = vmul.f32 %v1879, %v1911
        %v1916 = vxor.u32 %v1914, 2147483648
        %v1917 = vxor.u32 %v1915, 2147483648
        %v1918 = vmul.f32 %v1916, 1.442695
        %v1919 = vpow.pop %v1918
        %v1920 = vmul.f32 %v1917, 1.442695
        %v1921 = vpow.pop %v1920
        %v1922 = vadd.f32 %v1919, 1.0
        %v1923 = vadd.f32 %v1921, 1.0
        %v1924 = vrcp.pop %v1922
        %v1925 = vmul.f32 %v1922, %v1924
        %v1926 = vsub.f32 1.0, %v1925
        %v1927 = vmul.f32 %v1924, %v1926
        %v1928 = vadd.f32 %v1924, %v1927
        %vm1929 = vweird.f32 %v1922
        %vm1930 = vweird.f32 %v1924
        %vm1931 = vmor %vm1929, %vm1930
        %v1932 = vsel %vm1931, %v1924, %v1928
        %v1933 = vand.u32 2147483647, %v1922
        %vm1934 = vcmp.eq.f32.partialorder %v1933, 8.507059e+37
        %v1935 = vand.u32 %v1922, 2147483648
        %v1936 = vor.u32 1.1754944e-38, %v1935
        %v1937 = vsel %vm1934, %v1936, %v1932
        %v1938 = vmul.f32 1.0, %v1937
        %v1939 = vrcp.pop %v1923
        %v1940 = vmul.f32 %v1923, %v1939
        %v1941 = vsub.f32 1.0, %v1940
        %v1942 = vmul.f32 %v1939, %v1941
        %v1943 = vadd.f32 %v1939, %v1942
        %vm1944 = vweird.f32 %v1923
        %vm1945 = vweird.f32 %v1939
        %vm1946 = vmor %vm1944, %vm1945
        %v1947 = vsel %vm1946, %v1939, %v1943
        %v1948 = vand.u32 2147483647, %v1923
        %vm1949 = vcmp.eq.f32.partialorder %v1948, 8.507059e+37
        %v1950 = vand.u32 %v1923, 2147483648
        %v1951 = vor.u32 1.1754944e-38, %v1950
        %v1952 = vsel %vm1949, %v1951, %v1947
        %v1953 = vmul.f32 1.0, %v1952
        %v1954 = vmul.f32 %v1914, %v1938
        %v1955 = vmul.f32 %v1915, %v1953
        %1958 = vrot.lane.b32.xlu0 %v1954, 32
        %v1959 = vpop.permute.xlu0 %1958
        %1960 = vrot.lane.b32.xlu0 %v1955, 32
        %v1961 = vpop.permute.xlu0 %1960
        %1964 = vst.msk [vmem:[%s404 + $0x2] sm:$0x1] %vm589, %v1959
        %1965 = vst.msk [vmem:[%s404 + $0xa] sm:$0x1] %vm589, %v1961
        %v1966 = vld [vmem:[#allocation5 + $0x3] sm:$0x1]
        %v1967 = vld [vmem:[#allocation5 + $0xb] sm:$0x1]
        %v1970 = vrot.slane %v1915, 7
        %v1971 = vsel %vm595, %v1970, %v1914
        %1972 = vrot.lane.b32.xlu0 %v1971, 32
        %v1973 = vpop.permute.xlu0 %1972
        %v1974 = vsel %vm469, %v1973, 0
        %1976 = vmatpush.msra.mxu0 0.0
        %1977 = vmatpush.msra.mxu0 0.0
        %1978 = vmatpush.msra.mxu0 0.0
        %1979 = vmatpush.msra.mxu0 0.0
        %1980 = vmatpush.msra.mxu0 0.0
        %1981 = vmatpush.msra.mxu0 0.0
        %1982 = vmatpush.msra.mxu0 0.0
        %1983 = vmatpush.msra.mxu0 0.0
        %1984 = vmatpush.msra.mxu0 0.0
        %1985 = vmatpush.msra.mxu0 0.0
        %1986 = vmatpush.msra.mxu0 0.0
        %1987 = vmatpush.msra.mxu0 0.0
        %1988 = vmatpush.msra.mxu0 %v1443
        %1989 = vmatpush.msra.mxu0 %v1442
        %1990 = vmatpush.msra.mxu0 %v1441
        %1991 = vmatpush.msra.mxu0 %v1440
        %1992 = vmatmul.f32.gmra.mxu0 %v1974
        %v1993 = vpop.f32.mrf.mxu0
        %v1994 = vadd.f32 0.0, %v1993
        %1995 = vdwg.mxu0
        %v1997 = vrot.slane %v1994, 1
        %v2000 = vadd.f32 %v1966, %v1994
        %v2001 = vadd.f32 %v1967, %v1997
        %v2002 = vxor.u32 %v2000, 2147483648
        %v2003 = vxor.u32 %v2001, 2147483648
        %v2004 = vmul.f32 %v2002, 1.442695
        %v2005 = vpow.pop %v2004
        %v2006 = vmul.f32 %v2003, 1.442695
        %v2007 = vpow.pop %v2006
        %v2008 = vadd.f32 %v2005, 1.0
        %v2009 = vadd.f32 %v2007, 1.0
        %v2010 = vrcp.pop %v2008
        %v2011 = vmul.f32 %v2008, %v2010
        %v2012 = vsub.f32 1.0, %v2011
        %v2013 = vmul.f32 %v2010, %v2012
        %v2014 = vadd.f32 %v2010, %v2013
        %vm2015 = vweird.f32 %v2008
        %vm2016 = vweird.f32 %v2010
        %vm2017 = vmor %vm2015, %vm2016
        %v2018 = vsel %vm2017, %v2010, %v2014
        %v2019 = vand.u32 2147483647, %v2008
        %vm2020 = vcmp.eq.f32.partialorder %v2019, 8.507059e+37
        %v2021 = vand.u32 %v2008, 2147483648
        %v2022 = vor.u32 1.1754944e-38, %v2021
        %v2023 = vsel %vm2020, %v2022, %v2018
        %v2024 = vmul.f32 1.0, %v2023
        %v2025 = vrcp.pop %v2009
        %v2026 = vmul.f32 %v2009, %v2025
        %v2027 = vsub.f32 1.0, %v2026
        %v2028 = vmul.f32 %v2025, %v2027
        %v2029 = vadd.f32 %v2025, %v2028
        %vm2030 = vweird.f32 %v2009
        %vm2031 = vweird.f32 %v2025
        %vm2032 = vmor %vm2030, %vm2031
        %v2033 = vsel %vm2032, %v2025, %v2029
        %v2034 = vand.u32 2147483647, %v2009
        %vm2035 = vcmp.eq.f32.partialorder %v2034, 8.507059e+37
        %v2036 = vand.u32 %v2009, 2147483648
        %v2037 = vor.u32 1.1754944e-38, %v2036
        %v2038 = vsel %vm2035, %v2037, %v2033
        %v2039 = vmul.f32 1.0, %v2038
        %v2040 = vtanh.pop %v2000
        %v2041 = vtanh.pop %v2001
        %v2042 = vmul.f32 %v2024, %v1902
        %v2043 = vmul.f32 %v2039, %v1903
        %2046 = vrot.lane.b32.xlu0 %v2040, 64
        %v2047 = vpop.permute.xlu0 %2046
        %2048 = vrot.lane.b32.xlu0 %v2041, 64
        %v2049 = vpop.permute.xlu0 %2048
        %v2052 = vmul.f32 %v2024, %v2047
        %v2053 = vmul.f32 %v2039, %v2049
        %2056 = vrot.lane.b32.xlu0 %v2052, 32
        %v2057 = vpop.permute.xlu0 %2056
        %2058 = vrot.lane.b32.xlu0 %v2053, 32
        %v2059 = vpop.permute.xlu0 %2058
        %v2062 = vadd.f32 %v2042, %v2057
        %v2063 = vadd.f32 %v2043, %v2059
        %v2064 = vtanh.pop %v2062
        %v2065 = vtanh.pop %v2063
        %2068 = vrot.lane.b32.xlu0 %v2064, 64
        %v2069 = vpop.permute.xlu0 %2068
        %2070 = vrot.lane.b32.xlu0 %v2065, 64
        %v2071 = vpop.permute.xlu0 %2070
        %v2074 = vmul.f32 %v2024, %v2069
        %v2075 = vmul.f32 %v2039, %v2071
        %v2076 = vxor.u32 %v2074, 2147483648
        %v2077 = vxor.u32 %v2075, 2147483648
        %v2078 = vmul.f32 %v2076, 1.442695
        %v2079 = vpow.pop %v2078
        %v2080 = vmul.f32 %v2077, 1.442695
        %v2081 = vpow.pop %v2080
        %v2082 = vadd.f32 %v2079, 1.0
        %v2083 = vadd.f32 %v2081, 1.0
        %v2084 = vrcp.pop %v2082
        %v2085 = vmul.f32 %v2082, %v2084
        %v2086 = vsub.f32 1.0, %v2085
        %v2087 = vmul.f32 %v2084, %v2086
        %v2088 = vadd.f32 %v2084, %v2087
        %vm2089 = vweird.f32 %v2082
        %vm2090 = vweird.f32 %v2084
        %vm2091 = vmor %vm2089, %vm2090
        %v2092 = vsel %vm2091, %v2084, %v2088
        %v2093 = vand.u32 2147483647, %v2082
        %vm2094 = vcmp.eq.f32.partialorder %v2093, 8.507059e+37
        %v2095 = vand.u32 %v2082, 2147483648
        %v2096 = vor.u32 1.1754944e-38, %v2095
        %v2097 = vsel %vm2094, %v2096, %v2092
        %v2098 = vmul.f32 1.0, %v2097
        %v2099 = vrcp.pop %v2083
        %v2100 = vmul.f32 %v2083, %v2099
        %v2101 = vsub.f32 1.0, %v2100
        %v2102 = vmul.f32 %v2099, %v2101
        %v2103 = vadd.f32 %v2099, %v2102
        %vm2104 = vweird.f32 %v2083
        %vm2105 = vweird.f32 %v2099
        %vm2106 = vmor %vm2104, %vm2105
        %v2107 = vsel %vm2106, %v2099, %v2103
        %v2108 = vand.u32 2147483647, %v2083
        %vm2109 = vcmp.eq.f32.partialorder %v2108, 8.507059e+37
        %v2110 = vand.u32 %v2083, 2147483648
        %v2111 = vor.u32 1.1754944e-38, %v2110
        %v2112 = vsel %vm2109, %v2111, %v2107
        %v2113 = vmul.f32 1.0, %v2112
        %v2114 = vmul.f32 %v2074, %v2098
        %v2115 = vmul.f32 %v2075, %v2113
        %2118 = vrot.lane.b32.xlu0 %v2114, 32
        %v2119 = vpop.permute.xlu0 %2118
        %2120 = vrot.lane.b32.xlu0 %v2115, 32
        %v2121 = vpop.permute.xlu0 %2120
        %2124 = vst.msk [vmem:[%s404 + $0x3] sm:$0x1] %vm589, %v2119
        %2125 = vst.msk [vmem:[%s404 + $0xb] sm:$0x1] %vm589, %v2121
        %v2126 = vld [vmem:[#allocation5 + $0x4] sm:$0x1]
        %v2127 = vld [vmem:[#allocation5 + $0xc] sm:$0x1]
        %v2130 = vrot.slane %v2075, 7
        %v2131 = vsel %vm595, %v2130, %v2074
        %2132 = vrot.lane.b32.xlu0 %v2131, 32
        %v2133 = vpop.permute.xlu0 %2132
        %v2134 = vsel %vm469, %v2133, 0
        %2136 = vmatpush.msra.mxu0 0.0
        %2137 = vmatpush.msra.mxu0 0.0
        %2138 = vmatpush.msra.mxu0 0.0
        %2139 = vmatpush.msra.mxu0 0.0
        %2140 = vmatpush.msra.mxu0 0.0
        %2141 = vmatpush.msra.mxu0 0.0
        %2142 = vmatpush.msra.mxu0 0.0
        %2143 = vmatpush.msra.mxu0 0.0
        %2144 = vmatpush.msra.mxu0 0.0
        %2145 = vmatpush.msra.mxu0 0.0
        %2146 = vmatpush.msra.mxu0 0.0
        %2147 = vmatpush.msra.mxu0 0.0
        %2148 = vmatpush.msra.mxu0 %v1443
        %2149 = vmatpush.msra.mxu0 %v1442
        %2150 = vmatpush.msra.mxu0 %v1441
        %2151 = vmatpush.msra.mxu0 %v1440
        %2152 = vmatmul.f32.gmra.mxu0 %v2134
        %v2153 = vpop.f32.mrf.mxu0
        %v2154 = vadd.f32 0.0, %v2153
        %2155 = vdwg.mxu0
        %v2157 = vrot.slane %v2154, 1
        %v2160 = vadd.f32 %v2126, %v2154
        %v2161 = vadd.f32 %v2127, %v2157
        %v2162 = vxor.u32 %v2160, 2147483648
        %v2163 = vxor.u32 %v2161, 2147483648
        %v2164 = vmul.f32 %v2162, 1.442695
        %v2165 = vpow.pop %v2164
        %v2166 = vmul.f32 %v2163, 1.442695
        %v2167 = vpow.pop %v2166
        %v2168 = vadd.f32 %v2165, 1.0
        %v2169 = vadd.f32 %v2167, 1.0
        %v2170 = vrcp.pop %v2168
        %v2171 = vmul.f32 %v2168, %v2170
        %v2172 = vsub.f32 1.0, %v2171
        %v2173 = vmul.f32 %v2170, %v2172
        %v2174 = vadd.f32 %v2170, %v2173
        %vm2175 = vweird.f32 %v2168
        %vm2176 = vweird.f32 %v2170
        %vm2177 = vmor %vm2175, %vm2176
        %v2178 = vsel %vm2177, %v2170, %v2174
        %v2179 = vand.u32 2147483647, %v2168
        %vm2180 = vcmp.eq.f32.partialorder %v2179, 8.507059e+37
        %v2181 = vand.u32 %v2168, 2147483648
        %v2182 = vor.u32 1.1754944e-38, %v2181
        %v2183 = vsel %vm2180, %v2182, %v2178
        %v2184 = vmul.f32 1.0, %v2183
        %v2185 = vrcp.pop %v2169
        %v2186 = vmul.f32 %v2169, %v2185
        %v2187 = vsub.f32 1.0, %v2186
        %v2188 = vmul.f32 %v2185, %v2187
        %v2189 = vadd.f32 %v2185, %v2188
        %vm2190 = vweird.f32 %v2169
        %vm2191 = vweird.f32 %v2185
        %vm2192 = vmor %vm2190, %vm2191
        %v2193 = vsel %vm2192, %v2185, %v2189
        %v2194 = vand.u32 2147483647, %v2169
        %vm2195 = vcmp.eq.f32.partialorder %v2194, 8.507059e+37
        %v2196 = vand.u32 %v2169, 2147483648
        %v2197 = vor.u32 1.1754944e-38, %v2196
        %v2198 = vsel %vm2195, %v2197, %v2193
        %v2199 = vmul.f32 1.0, %v2198
        %v2200 = vtanh.pop %v2160
        %v2201 = vtanh.pop %v2161
        %v2202 = vmul.f32 %v2184, %v2062
        %v2203 = vmul.f32 %v2199, %v2063
        %2206 = vrot.lane.b32.xlu0 %v2200, 64
        %v2207 = vpop.permute.xlu0 %2206
        %2208 = vrot.lane.b32.xlu0 %v2201, 64
        %v2209 = vpop.permute.xlu0 %2208
        %v2212 = vmul.f32 %v2184, %v2207
        %v2213 = vmul.f32 %v2199, %v2209
        %2216 = vrot.lane.b32.xlu0 %v2212, 32
        %v2217 = vpop.permute.xlu0 %2216
        %2218 = vrot.lane.b32.xlu0 %v2213, 32
        %v2219 = vpop.permute.xlu0 %2218
        %v2222 = vadd.f32 %v2202, %v2217
        %v2223 = vadd.f32 %v2203, %v2219
        %v2224 = vtanh.pop %v2222
        %v2225 = vtanh.pop %v2223
        %2228 = vrot.lane.b32.xlu0 %v2224, 64
        %v2229 = vpop.permute.xlu0 %2228
        %2230 = vrot.lane.b32.xlu0 %v2225, 64
        %v2231 = vpop.permute.xlu0 %2230
        %v2234 = vmul.f32 %v2184, %v2229
        %v2235 = vmul.f32 %v2199, %v2231
        %v2236 = vxor.u32 %v2234, 2147483648
        %v2237 = vxor.u32 %v2235, 2147483648
        %v2238 = vmul.f32 %v2236, 1.442695
        %v2239 = vpow.pop %v2238
        %v2240 = vmul.f32 %v2237, 1.442695
        %v2241 = vpow.pop %v2240
        %v2242 = vadd.f32 %v2239, 1.0
        %v2243 = vadd.f32 %v2241, 1.0
        %v2244 = vrcp.pop %v2242
        %v2245 = vmul.f32 %v2242, %v2244
        %v2246 = vsub.f32 1.0, %v2245
        %v2247 = vmul.f32 %v2244, %v2246
        %v2248 = vadd.f32 %v2244, %v2247
        %vm2249 = vweird.f32 %v2242
        %vm2250 = vweird.f32 %v2244
        %vm2251 = vmor %vm2249, %vm2250
        %v2252 = vsel %vm2251, %v2244, %v2248
        %v2253 = vand.u32 2147483647, %v2242
        %vm2254 = vcmp.eq.f32.partialorder %v2253, 8.507059e+37
        %v2255 = vand.u32 %v2242, 2147483648
        %v2256 = vor.u32 1.1754944e-38, %v2255
        %v2257 = vsel %vm2254, %v2256, %v2252
        %v2258 = vmul.f32 1.0, %v2257
        %v2259 = vrcp.pop %v2243
        %v2260 = vmul.f32 %v2243, %v2259
        %v2261 = vsub.f32 1.0, %v2260
        %v2262 = vmul.f32 %v2259, %v2261
        %v2263 = vadd.f32 %v2259, %v2262
        %vm2264 = vweird.f32 %v2243
        %vm2265 = vweird.f32 %v2259
        %vm2266 = vmor %vm2264, %vm2265
        %v2267 = vsel %vm2266, %v2259, %v2263
        %v2268 = vand.u32 2147483647, %v2243
        %vm2269 = vcmp.eq.f32.partialorder %v2268, 8.507059e+37
        %v2270 = vand.u32 %v2243, 2147483648
        %v2271 = vor.u32 1.1754944e-38, %v2270
        %v2272 = vsel %vm2269, %v2271, %v2267
        %v2273 = vmul.f32 1.0, %v2272
        %v2274 = vmul.f32 %v2234, %v2258
        %v2275 = vmul.f32 %v2235, %v2273
        %2278 = vrot.lane.b32.xlu0 %v2274, 32
        %v2279 = vpop.permute.xlu0 %2278
        %2280 = vrot.lane.b32.xlu0 %v2275, 32
        %v2281 = vpop.permute.xlu0 %2280
        %2284 = vst.msk [vmem:[%s404 + $0x4] sm:$0x1] %vm589, %v2279
        %2285 = vst.msk [vmem:[%s404 + $0xc] sm:$0x1] %vm589, %v2281
        %v2286 = vld [vmem:[#allocation5 + $0x5] sm:$0x1]
        %v2287 = vld [vmem:[#allocation5 + $0xd] sm:$0x1]
        %v2290 = vrot.slane %v2235, 7
        %v2291 = vsel %vm595, %v2290, %v2234
        %2292 = vrot.lane.b32.xlu0 %v2291, 32
        %v2293 = vpop.permute.xlu0 %2292
        %v2294 = vsel %vm469, %v2293, 0
        %2296 = vmatpush.msra.mxu0 0.0
        %2297 = vmatpush.msra.mxu0 0.0
        %2298 = vmatpush.msra.mxu0 0.0
        %2299 = vmatpush.msra.mxu0 0.0
        %2300 = vmatpush.msra.mxu0 0.0
        %2301 = vmatpush.msra.mxu0 0.0
        %2302 = vmatpush.msra.mxu0 0.0
        %2303 = vmatpush.msra.mxu0 0.0
        %2304 = vmatpush.msra.mxu0 0.0
        %2305 = vmatpush.msra.mxu0 0.0
        %2306 = vmatpush.msra.mxu0 0.0
        %2307 = vmatpush.msra.mxu0 0.0
        %2308 = vmatpush.msra.mxu0 %v1443
        %2309 = vmatpush.msra.mxu0 %v1442
        %2310 = vmatpush.msra.mxu0 %v1441
        %2311 = vmatpush.msra.mxu0 %v1440
        %2312 = vmatmul.f32.gmra.mxu0 %v2294
        %v2313 = vpop.f32.mrf.mxu0
        %v2314 = vadd.f32 0.0, %v2313
        %2315 = vdwg.mxu0
        %v2317 = vrot.slane %v2314, 1
        %v2320 = vadd.f32 %v2286, %v2314
        %v2321 = vadd.f32 %v2287, %v2317
        %v2322 = vxor.u32 %v2320, 2147483648
        %v2323 = vxor.u32 %v2321, 2147483648
        %v2324 = vmul.f32 %v2322, 1.442695
        %v2325 = vpow.pop %v2324
        %v2326 = vmul.f32 %v2323, 1.442695
        %v2327 = vpow.pop %v2326
        %v2328 = vadd.f32 %v2325, 1.0
        %v2329 = vadd.f32 %v2327, 1.0
        %v2330 = vrcp.pop %v2328
        %v2331 = vmul.f32 %v2328, %v2330
        %v2332 = vsub.f32 1.0, %v2331
        %v2333 = vmul.f32 %v2330, %v2332
        %v2334 = vadd.f32 %v2330, %v2333
        %vm2335 = vweird.f32 %v2328
        %vm2336 = vweird.f32 %v2330
        %vm2337 = vmor %vm2335, %vm2336
        %v2338 = vsel %vm2337, %v2330, %v2334
        %v2339 = vand.u32 2147483647, %v2328
        %vm2340 = vcmp.eq.f32.partialorder %v2339, 8.507059e+37
        %v2341 = vand.u32 %v2328, 2147483648
        %v2342 = vor.u32 1.1754944e-38, %v2341
        %v2343 = vsel %vm2340, %v2342, %v2338
        %v2344 = vmul.f32 1.0, %v2343
        %v2345 = vrcp.pop %v2329
        %v2346 = vmul.f32 %v2329, %v2345
        %v2347 = vsub.f32 1.0, %v2346
        %v2348 = vmul.f32 %v2345, %v2347
        %v2349 = vadd.f32 %v2345, %v2348
        %vm2350 = vweird.f32 %v2329
        %vm2351 = vweird.f32 %v2345
        %vm2352 = vmor %vm2350, %vm2351
        %v2353 = vsel %vm2352, %v2345, %v2349
        %v2354 = vand.u32 2147483647, %v2329
        %vm2355 = vcmp.eq.f32.partialorder %v2354, 8.507059e+37
        %v2356 = vand.u32 %v2329, 2147483648
        %v2357 = vor.u32 1.1754944e-38, %v2356
        %v2358 = vsel %vm2355, %v2357, %v2353
        %v2359 = vmul.f32 1.0, %v2358
        %v2360 = vtanh.pop %v2320
        %v2361 = vtanh.pop %v2321
        %v2362 = vmul.f32 %v2344, %v2222
        %v2363 = vmul.f32 %v2359, %v2223
        %2366 = vrot.lane.b32.xlu0 %v2360, 64
        %v2367 = vpop.permute.xlu0 %2366
        %2368 = vrot.lane.b32.xlu0 %v2361, 64
        %v2369 = vpop.permute.xlu0 %2368
        %v2372 = vmul.f32 %v2344, %v2367
        %v2373 = vmul.f32 %v2359, %v2369
        %2376 = vrot.lane.b32.xlu0 %v2372, 32
        %v2377 = vpop.permute.xlu0 %2376
        %2378 = vrot.lane.b32.xlu0 %v2373, 32
        %v2379 = vpop.permute.xlu0 %2378
        %v2382 = vadd.f32 %v2362, %v2377
        %v2383 = vadd.f32 %v2363, %v2379
        %v2384 = vtanh.pop %v2382
        %v2385 = vtanh.pop %v2383
        %2388 = vrot.lane.b32.xlu0 %v2384, 64
        %v2389 = vpop.permute.xlu0 %2388
        %2390 = vrot.lane.b32.xlu0 %v2385, 64
        %v2391 = vpop.permute.xlu0 %2390
        %v2394 = vmul.f32 %v2344, %v2389
        %v2395 = vmul.f32 %v2359, %v2391
        %v2396 = vxor.u32 %v2394, 2147483648
        %v2397 = vxor.u32 %v2395, 2147483648
        %v2398 = vmul.f32 %v2396, 1.442695
        %v2399 = vpow.pop %v2398
        %v2400 = vmul.f32 %v2397, 1.442695
        %v2401 = vpow.pop %v2400
        %v2402 = vadd.f32 %v2399, 1.0
        %v2403 = vadd.f32 %v2401, 1.0
        %v2404 = vrcp.pop %v2402
        %v2405 = vmul.f32 %v2402, %v2404
        %v2406 = vsub.f32 1.0, %v2405
        %v2407 = vmul.f32 %v2404, %v2406
        %v2408 = vadd.f32 %v2404, %v2407
        %vm2409 = vweird.f32 %v2402
        %vm2410 = vweird.f32 %v2404
        %vm2411 = vmor %vm2409, %vm2410
        %v2412 = vsel %vm2411, %v2404, %v2408
        %v2413 = vand.u32 2147483647, %v2402
        %vm2414 = vcmp.eq.f32.partialorder %v2413, 8.507059e+37
        %v2415 = vand.u32 %v2402, 2147483648
        %v2416 = vor.u32 1.1754944e-38, %v2415
        %v2417 = vsel %vm2414, %v2416, %v2412
        %v2418 = vmul.f32 1.0, %v2417
        %v2419 = vrcp.pop %v2403
        %v2420 = vmul.f32 %v2403, %v2419
        %v2421 = vsub.f32 1.0, %v2420
        %v2422 = vmul.f32 %v2419, %v2421
        %v2423 = vadd.f32 %v2419, %v2422
        %vm2424 = vweird.f32 %v2403
        %vm2425 = vweird.f32 %v2419
        %vm2426 = vmor %vm2424, %vm2425
        %v2427 = vsel %vm2426, %v2419, %v2423
        %v2428 = vand.u32 2147483647, %v2403
        %vm2429 = vcmp.eq.f32.partialorder %v2428, 8.507059e+37
        %v2430 = vand.u32 %v2403, 2147483648
        %v2431 = vor.u32 1.1754944e-38, %v2430
        %v2432 = vsel %vm2429, %v2431, %v2427
        %v2433 = vmul.f32 1.0, %v2432
        %v2434 = vmul.f32 %v2394, %v2418
        %v2435 = vmul.f32 %v2395, %v2433
        %2438 = vrot.lane.b32.xlu0 %v2434, 32
        %v2439 = vpop.permute.xlu0 %2438
        %2440 = vrot.lane.b32.xlu0 %v2435, 32
        %v2441 = vpop.permute.xlu0 %2440
        %2444 = vst.msk [vmem:[%s404 + $0x5] sm:$0x1] %vm589, %v2439
        %2445 = vst.msk [vmem:[%s404 + $0xd] sm:$0x1] %vm589, %v2441
        %v2446 = vld [vmem:[#allocation5 + $0x6] sm:$0x1]
        %v2447 = vld [vmem:[#allocation5 + $0xe] sm:$0x1]
        %v2450 = vrot.slane %v2395, 7
        %v2451 = vsel %vm595, %v2450, %v2394
        %2452 = vrot.lane.b32.xlu0 %v2451, 32
        %v2453 = vpop.permute.xlu0 %2452
        %v2454 = vsel %vm469, %v2453, 0
        %2456 = vmatpush.msra.mxu0 0.0
        %2457 = vmatpush.msra.mxu0 0.0
        %2458 = vmatpush.msra.mxu0 0.0
        %2459 = vmatpush.msra.mxu0 0.0
        %2460 = vmatpush.msra.mxu0 0.0
        %2461 = vmatpush.msra.mxu0 0.0
        %2462 = vmatpush.msra.mxu0 0.0
        %2463 = vmatpush.msra.mxu0 0.0
        %2464 = vmatpush.msra.mxu0 0.0
        %2465 = vmatpush.msra.mxu0 0.0
        %2466 = vmatpush.msra.mxu0 0.0
        %2467 = vmatpush.msra.mxu0 0.0
        %2468 = vmatpush.msra.mxu0 %v1443
        %2469 = vmatpush.msra.mxu0 %v1442
        %2470 = vmatpush.msra.mxu0 %v1441
        %2471 = vmatpush.msra.mxu0 %v1440
        %2472 = vmatmul.f32.gmra.mxu0 %v2454
        %v2473 = vpop.f32.mrf.mxu0
        %v2474 = vadd.f32 0.0, %v2473
        %2475 = vdwg.mxu0
        %v2477 = vrot.slane %v2474, 1
        %v2480 = vadd.f32 %v2446, %v2474
        %v2481 = vadd.f32 %v2447, %v2477
        %v2482 = vxor.u32 %v2480, 2147483648
        %v2483 = vxor.u32 %v2481, 2147483648
        %v2484 = vmul.f32 %v2482, 1.442695
        %v2485 = vpow.pop %v2484
        %v2486 = vmul.f32 %v2483, 1.442695
        %v2487 = vpow.pop %v2486
        %v2488 = vadd.f32 %v2485, 1.0
        %v2489 = vadd.f32 %v2487, 1.0
        %v2490 = vrcp.pop %v2488
        %v2491 = vmul.f32 %v2488, %v2490
        %v2492 = vsub.f32 1.0, %v2491
        %v2493 = vmul.f32 %v2490, %v2492
        %v2494 = vadd.f32 %v2490, %v2493
        %vm2495 = vweird.f32 %v2488
        %vm2496 = vweird.f32 %v2490
        %vm2497 = vmor %vm2495, %vm2496
        %v2498 = vsel %vm2497, %v2490, %v2494
        %v2499 = vand.u32 2147483647, %v2488
        %vm2500 = vcmp.eq.f32.partialorder %v2499, 8.507059e+37
        %v2501 = vand.u32 %v2488, 2147483648
        %v2502 = vor.u32 1.1754944e-38, %v2501
        %v2503 = vsel %vm2500, %v2502, %v2498
        %v2504 = vmul.f32 1.0, %v2503
        %v2505 = vrcp.pop %v2489
        %v2506 = vmul.f32 %v2489, %v2505
        %v2507 = vsub.f32 1.0, %v2506
        %v2508 = vmul.f32 %v2505, %v2507
        %v2509 = vadd.f32 %v2505, %v2508
        %vm2510 = vweird.f32 %v2489
        %vm2511 = vweird.f32 %v2505
        %vm2512 = vmor %vm2510, %vm2511
        %v2513 = vsel %vm2512, %v2505, %v2509
        %v2514 = vand.u32 2147483647, %v2489
        %vm2515 = vcmp.eq.f32.partialorder %v2514, 8.507059e+37
        %v2516 = vand.u32 %v2489, 2147483648
        %v2517 = vor.u32 1.1754944e-38, %v2516
        %v2518 = vsel %vm2515, %v2517, %v2513
        %v2519 = vmul.f32 1.0, %v2518
        %v2520 = vtanh.pop %v2480
        %v2521 = vtanh.pop %v2481
        %v2522 = vmul.f32 %v2504, %v2382
        %v2523 = vmul.f32 %v2519, %v2383
        %2526 = vrot.lane.b32.xlu0 %v2520, 64
        %v2527 = vpop.permute.xlu0 %2526
        %2528 = vrot.lane.b32.xlu0 %v2521, 64
        %v2529 = vpop.permute.xlu0 %2528
        %v2532 = vmul.f32 %v2504, %v2527
        %v2533 = vmul.f32 %v2519, %v2529
        %2536 = vrot.lane.b32.xlu0 %v2532, 32
        %v2537 = vpop.permute.xlu0 %2536
        %2538 = vrot.lane.b32.xlu0 %v2533, 32
        %v2539 = vpop.permute.xlu0 %2538
        %v2542 = vadd.f32 %v2522, %v2537
        %v2543 = vadd.f32 %v2523, %v2539
        %v2544 = vtanh.pop %v2542
        %v2545 = vtanh.pop %v2543
        %2548 = vrot.lane.b32.xlu0 %v2544, 64
        %v2549 = vpop.permute.xlu0 %2548
        %2550 = vrot.lane.b32.xlu0 %v2545, 64
        %v2551 = vpop.permute.xlu0 %2550
        %v2554 = vmul.f32 %v2504, %v2549
        %v2555 = vmul.f32 %v2519, %v2551
        %v2556 = vxor.u32 %v2554, 2147483648
        %v2557 = vxor.u32 %v2555, 2147483648
        %v2558 = vmul.f32 %v2556, 1.442695
        %v2559 = vpow.pop %v2558
        %v2560 = vmul.f32 %v2557, 1.442695
        %v2561 = vpow.pop %v2560
        %v2562 = vadd.f32 %v2559, 1.0
        %v2563 = vadd.f32 %v2561, 1.0
        %v2564 = vrcp.pop %v2562
        %v2565 = vmul.f32 %v2562, %v2564
        %v2566 = vsub.f32 1.0, %v2565
        %v2567 = vmul.f32 %v2564, %v2566
        %v2568 = vadd.f32 %v2564, %v2567
        %vm2569 = vweird.f32 %v2562
        %vm2570 = vweird.f32 %v2564
        %vm2571 = vmor %vm2569, %vm2570
        %v2572 = vsel %vm2571, %v2564, %v2568
        %v2573 = vand.u32 2147483647, %v2562
        %vm2574 = vcmp.eq.f32.partialorder %v2573, 8.507059e+37
        %v2575 = vand.u32 %v2562, 2147483648
        %v2576 = vor.u32 1.1754944e-38, %v2575
        %v2577 = vsel %vm2574, %v2576, %v2572
        %v2578 = vmul.f32 1.0, %v2577
        %v2579 = vrcp.pop %v2563
        %v2580 = vmul.f32 %v2563, %v2579
        %v2581 = vsub.f32 1.0, %v2580
        %v2582 = vmul.f32 %v2579, %v2581
        %v2583 = vadd.f32 %v2579, %v2582
        %vm2584 = vweird.f32 %v2563
        %vm2585 = vweird.f32 %v2579
        %vm2586 = vmor %vm2584, %vm2585
        %v2587 = vsel %vm2586, %v2579, %v2583
        %v2588 = vand.u32 2147483647, %v2563
        %vm2589 = vcmp.eq.f32.partialorder %v2588, 8.507059e+37
        %v2590 = vand.u32 %v2563, 2147483648
        %v2591 = vor.u32 1.1754944e-38, %v2590
        %v2592 = vsel %vm2589, %v2591, %v2587
        %v2593 = vmul.f32 1.0, %v2592
        %v2594 = vmul.f32 %v2554, %v2578
        %v2595 = vmul.f32 %v2555, %v2593
        %2598 = vrot.lane.b32.xlu0 %v2594, 32
        %v2599 = vpop.permute.xlu0 %2598
        %2600 = vrot.lane.b32.xlu0 %v2595, 32
        %v2601 = vpop.permute.xlu0 %2600
        %2604 = vst.msk [vmem:[%s404 + $0x6] sm:$0x1] %vm589, %v2599
        %2605 = vst.msk [vmem:[%s404 + $0xe] sm:$0x1] %vm589, %v2601
        %v2606 = vld [vmem:[#allocation5 + $0x7] sm:$0x1]
        %v2607 = vld [vmem:[#allocation5 + $0xf] sm:$0x1]
        %v2610 = vrot.slane %v2555, 7
        %v2611 = vsel %vm595, %v2610, %v2554
        %2612 = vrot.lane.b32.xlu0 %v2611, 32
        %v2613 = vpop.permute.xlu0 %2612
        %v2614 = vsel %vm469, %v2613, 0
        %2616 = vmatpush.msra.mxu0 0.0
        %2617 = vmatpush.msra.mxu0 0.0
        %2618 = vmatpush.msra.mxu0 0.0
        %2619 = vmatpush.msra.mxu0 0.0
        %2620 = vmatpush.msra.mxu0 0.0
        %2621 = vmatpush.msra.mxu0 0.0
        %2622 = vmatpush.msra.mxu0 0.0
        %2623 = vmatpush.msra.mxu0 0.0
        %2624 = vmatpush.msra.mxu0 0.0
        %2625 = vmatpush.msra.mxu0 0.0
        %2626 = vmatpush.msra.mxu0 0.0
        %2627 = vmatpush.msra.mxu0 0.0
        %2628 = vmatpush.msra.mxu0 %v1443
        %2629 = vmatpush.msra.mxu0 %v1442
        %2630 = vmatpush.msra.mxu0 %v1441
        %2631 = vmatpush.msra.mxu0 %v1440
        %2632 = vmatmul.f32.gmra.mxu0 %v2614
        %v2633 = vpop.f32.mrf.mxu0
        %v2634 = vadd.f32 0.0, %v2633
        %2635 = vdwg.mxu0
        %v2637 = vrot.slane %v2634, 1
        %v2640 = vadd.f32 %v2606, %v2634
        %v2641 = vadd.f32 %v2607, %v2637
        %v2642 = vxor.u32 %v2640, 2147483648
        %v2643 = vxor.u32 %v2641, 2147483648
        %v2644 = vmul.f32 %v2642, 1.442695
        %v2645 = vpow.pop %v2644
        %v2646 = vmul.f32 %v2643, 1.442695
        %v2647 = vpow.pop %v2646
        %v2648 = vadd.f32 %v2645, 1.0
        %v2649 = vadd.f32 %v2647, 1.0
        %v2650 = vrcp.pop %v2648
        %v2651 = vmul.f32 %v2648, %v2650
        %v2652 = vsub.f32 1.0, %v2651
        %v2653 = vmul.f32 %v2650, %v2652
        %v2654 = vadd.f32 %v2650, %v2653
        %vm2655 = vweird.f32 %v2648
        %vm2656 = vweird.f32 %v2650
        %vm2657 = vmor %vm2655, %vm2656
        %v2658 = vsel %vm2657, %v2650, %v2654
        %v2659 = vand.u32 2147483647, %v2648
        %vm2660 = vcmp.eq.f32.partialorder %v2659, 8.507059e+37
        %v2661 = vand.u32 %v2648, 2147483648
        %v2662 = vor.u32 1.1754944e-38, %v2661
        %v2663 = vsel %vm2660, %v2662, %v2658
        %v2664 = vmul.f32 1.0, %v2663
        %v2665 = vrcp.pop %v2649
        %v2666 = vmul.f32 %v2649, %v2665
        %v2667 = vsub.f32 1.0, %v2666
        %v2668 = vmul.f32 %v2665, %v2667
        %v2669 = vadd.f32 %v2665, %v2668
        %vm2670 = vweird.f32 %v2649
        %vm2671 = vweird.f32 %v2665
        %vm2672 = vmor %vm2670, %vm2671
        %v2673 = vsel %vm2672, %v2665, %v2669
        %v2674 = vand.u32 2147483647, %v2649
        %vm2675 = vcmp.eq.f32.partialorder %v2674, 8.507059e+37
        %v2676 = vand.u32 %v2649, 2147483648
        %v2677 = vor.u32 1.1754944e-38, %v2676
        %v2678 = vsel %vm2675, %v2677, %v2673
        %v2679 = vmul.f32 1.0, %v2678
        %v2680 = vtanh.pop %v2640
        %v2681 = vtanh.pop %v2641
        %v2682 = vmul.f32 %v2664, %v2542
        %v2683 = vmul.f32 %v2679, %v2543
        %2686 = vrot.lane.b32.xlu0 %v2680, 64
        %v2687 = vpop.permute.xlu0 %2686
        %2688 = vrot.lane.b32.xlu0 %v2681, 64
        %v2689 = vpop.permute.xlu0 %2688
        %v2692 = vmul.f32 %v2664, %v2687
        %v2693 = vmul.f32 %v2679, %v2689
        %2696 = vrot.lane.b32.xlu0 %v2692, 32
        %v2697 = vpop.permute.xlu0 %2696
        %2698 = vrot.lane.b32.xlu0 %v2693, 32
        %v2699 = vpop.permute.xlu0 %2698
        %v2702 = vadd.f32 %v2682, %v2697
        %v2703 = vadd.f32 %v2683, %v2699
        %v2704 = vtanh.pop %v2702
        %v2705 = vtanh.pop %v2703
        %2708 = vrot.lane.b32.xlu0 %v2704, 64
        %v2709 = vpop.permute.xlu0 %2708
        %2710 = vrot.lane.b32.xlu0 %v2705, 64
        %v2711 = vpop.permute.xlu0 %2710
        %v2714 = vmul.f32 %v2664, %v2709
        %v2715 = vmul.f32 %v2679, %v2711
        %v2716 = vxor.u32 %v2714, 2147483648
        %v2717 = vxor.u32 %v2715, 2147483648
        %v2718 = vmul.f32 %v2716, 1.442695
        %v2719 = vpow.pop %v2718
        %v2720 = vmul.f32 %v2717, 1.442695
        %v2721 = vpow.pop %v2720
        %v2722 = vadd.f32 %v2719, 1.0
        %v2723 = vadd.f32 %v2721, 1.0
        %v2724 = vrcp.pop %v2722
        %v2725 = vmul.f32 %v2722, %v2724
        %v2726 = vsub.f32 1.0, %v2725
        %v2727 = vmul.f32 %v2724, %v2726
        %v2728 = vadd.f32 %v2724, %v2727
        %vm2729 = vweird.f32 %v2722
        %vm2730 = vweird.f32 %v2724
        %vm2731 = vmor %vm2729, %vm2730
        %v2732 = vsel %vm2731, %v2724, %v2728
        %v2733 = vand.u32 2147483647, %v2722
        %vm2734 = vcmp.eq.f32.partialorder %v2733, 8.507059e+37
        %v2735 = vand.u32 %v2722, 2147483648
        %v2736 = vor.u32 1.1754944e-38, %v2735
        %v2737 = vsel %vm2734, %v2736, %v2732
        %v2738 = vmul.f32 1.0, %v2737
        %v2739 = vrcp.pop %v2723
        %v2740 = vmul.f32 %v2723, %v2739
        %v2741 = vsub.f32 1.0, %v2740
        %v2742 = vmul.f32 %v2739, %v2741
        %v2743 = vadd.f32 %v2739, %v2742
        %vm2744 = vweird.f32 %v2723
        %vm2745 = vweird.f32 %v2739
        %vm2746 = vmor %vm2744, %vm2745
        %v2747 = vsel %vm2746, %v2739, %v2743
        %v2748 = vand.u32 2147483647, %v2723
        %vm2749 = vcmp.eq.f32.partialorder %v2748, 8.507059e+37
        %v2750 = vand.u32 %v2723, 2147483648
        %v2751 = vor.u32 1.1754944e-38, %v2750
        %v2752 = vsel %vm2749, %v2751, %v2747
        %v2753 = vmul.f32 1.0, %v2752
        %v2754 = vmul.f32 %v2714, %v2738
        %v2755 = vmul.f32 %v2715, %v2753
        %2758 = vrot.lane.b32.xlu0 %v2754, 32
        %v2759 = vpop.permute.xlu0 %2758
        %2760 = vrot.lane.b32.xlu0 %v2755, 32
        %v2761 = vpop.permute.xlu0 %2760
        %2764 = vst.msk [vmem:[%s404 + $0x7] sm:$0x1] %vm589, %v2759
        %2765 = vst.msk [vmem:[%s404 + $0xf] sm:$0x1] %vm589, %v2761
        %v2768 = vrot.slane %v2715, 7
        %v2769 = vsel %vm595, %v2768, %v2714
        %2770 = vrot.lane.b32.xlu0 %v2769, 32
        %v2771 = vpop.permute.xlu0 %2770
        %2773 = vst.msk [vmem:[%s1479] sm:$0x3] %vm1424, %v2771
        %v2776 = vrot.slane %v2703, 7
        %v2777 = vsel %vm595, %v2776, %v2702
        %2778 = vrot.lane.b32.xlu0 %v2777, 96
        %v2779 = vpop.permute.xlu0 %2778
        %2781 = vst.msk [vmem:[%s1481] sm:$0x3] %vm1424, %v2779
        %v2782 = vld [vmem:[%s404] sm:$0xff]
        %v2783 = vld [vmem:[%s404 + $0x8] sm:$0xff]
        %v2784 = vld [vmem:[%s8] sm:$0x1]
        %v2785 = vsel %vm469, %v2782, 0.0
        %v2786 = vsel %vm469, %v2783, 0.0
        %v2787 = vadd.f32 %v2785, %v2786
        %v2788 = vrot.slane %v2787, 4
        %v2789 = vadd.f32 %v2787, %v2788
        %v2790 = vrot.slane %v2789, 2
        %v2791 = vadd.f32 %v2789, %v2790
        %v2792 = vrot.slane %v2791, 1
        %v2793 = vadd.f32 %v2791, %v2792
        %v2794 = vadd.f32 %v2784, %v2793
        %2795 = vst.msk [vmem:[%s8] sm:$0x1] %vm589, %v2794
        %v2796 = vld [vmem:[%s9] sm:$0x1]
        %v2797 = vmul.f32 %v2782, %v2782
        %v2798 = vmul.f32 %v2783, %v2783
        %v2799 = vsel %vm469, %v2797, 0.0
        %v2800 = vsel %vm469, %v2798, 0.0
        %v2801 = vadd.f32 %v2799, %v2800
        %v2802 = vrot.slane %v2801, 4
        %v2803 = vadd.f32 %v2801, %v2802
        %v2804 = vrot.slane %v2803, 2
        %v2805 = vadd.f32 %v2803, %v2804
        %v2806 = vrot.slane %v2805, 1
        %v2807 = vadd.f32 %v2805, %v2806
        %v2808 = vadd.f32 %v2796, %v2807
        %2809 = vst.msk [vmem:[%s9] sm:$0x1] %vm589, %v2808
        %p2810 = scmp.eq.s32.totalorder %s26, 1
        // Predicated region
        $region73: #{decoder_forward.2} parent=47 // pred_check
          %p2811 = pneg %p2810
        $region74: #{decoder_forward.2} parent=47 // pred_check_branch
          %2813 = sbr.rel (%p2811) target = $region76
        $region75: #{decoder_forward.2} parent=47 // pred_region
          %v2814 = vld [vmem:[%s8] sm:$0x1]
          %v2815 = vmul.f32 %v2814, 0.03125
          %v2816 = vld [vmem:[%s9] sm:$0x1]
          %v2817 = vmul.f32 %v2816, 0.03125
          %v2818 = vmul.f32 %v2815, %v2815
          %v2819 = vsub.f32 %v2817, %v2818
          %2820 = vst.msk [vmem:[%s8] sm:$0x1] %vm589, %v2815
          %2821 = vst.msk [vmem:[%s9] sm:$0x1] %vm589, %v2819
        $region76: #{decoder_forward.2} parent=47 // pred_fallthru
          _
        %s2822 = sand.u32 %s186, 1
        %s2823 = sand.u32 %s186, 1
        %s2824 = smul.addr %s2823, 16
        %s2825 = scalar_lea.vmem [#allocation14], %s2824
        // Predicated region
        $region77: #{decoder_forward.2} parent=47 // pred_check
          %p2826 = pneg %p196
        $region78: #{decoder_forward.2} parent=47 // pred_check_branch
          %2828 = sbr.rel (%p2826) target = $region80
        $region79: #{decoder_forward.2} parent=47 // pred_region
          %s2829 = smul.addr %s26, 8
          %s2830 = scalar_lea.vmem %s7, %s2829
          // Predicated region
          $region81: #{decoder_forward.2} parent=79 // pred_check
            _
          $region82: #{decoder_forward.2} parent=79 // pred_check_branch
            %2832 = sbr.rel (0) target = $region84
          $region83: #{decoder_forward.2} parent=79 // pred_region
            // Predicated region
            $region85: #{decoder_forward.2} parent=83 // pred_check
              _
            $region86: #{decoder_forward.2} parent=83 // pred_check_branch
              %2834 = sbr.rel (0) target = $region88
            $region87: #{decoder_forward.2} parent=83 // pred_region
              // Predicated region
              $region100: #{decoder_forward.2} parent=87 // pred_check
                _
              $region101: #{decoder_forward.2} parent=87 // pred_check_branch
                %2852 = sbr.rel (0) target = $region103
              $region102: #{decoder_forward.2} parent=87 // pred_region
                loop: start=0, step=1, limit=1
                $region104: #{decoder_forward.2} parent=102 // loop_pre_header
                  _
                $region105: #{decoder_forward.2} parent=102 // loop_header
                  %s2854 = sphi 0, %s2858
                  %p2855 = scmp.ge.s32.totalorder %s2854, 1
                  %s2859 = sphi %s2825, %s2825
                  %s2860 = sphi %s2830, %s2830
                $region106: #{decoder_forward.2} parent=102 // loop_header_branch
                  %2857 = sbr.rel (%p2855) target = $region110
                $region107: #{decoder_forward.2} parent=102 // loop_body
                  %v2861 = vld [vmem:[%s2859] sm:$0xff]
                  %2862 = vst [vmem:[%s2860] sm:$0xff] %v2861
                  %v2863 = vld [vmem:[%s2859 + $0x8] sm:$0xff]
                  %2864 = vst [vmem:[%s2860 + $0x10] sm:$0xff] %v2863
                $region108: #{decoder_forward.2} parent=102 // loop_footer
                  %s2858 = sadd.s32 1, %s2854
                $region109: #{decoder_forward.2} parent=102 // loop_footer_branch
                  %2853 = sbr.rel target = $region105
                $region110: #{decoder_forward.2} parent=102 // loop_exit
                  _
              $region103: #{decoder_forward.2} parent=87 // pred_fallthru
                _
              // Predicated region
              $region111: #{decoder_forward.2} parent=87 // pred_check
                _
              $region112: #{decoder_forward.2} parent=87 // pred_check_branch
                %2866 = sbr.rel target = $region114
              $region113: #{decoder_forward.2} parent=87 // pred_region
                _
              $region114: #{decoder_forward.2} parent=87 // pred_fallthru
                _
            $region88: #{decoder_forward.2} parent=83 // pred_fallthru
              _
            // Predicated region
            $region89: #{decoder_forward.2} parent=83 // pred_check
              _
            $region90: #{decoder_forward.2} parent=83 // pred_check_branch
              %2836 = sbr.rel target = $region92
            $region91: #{decoder_forward.2} parent=83 // pred_region
              %s2838 = ssub.s32 256, 1
              loop: start=0, step=1, limit=1
              $region93: #{decoder_forward.2} parent=91 // loop_pre_header
                _
              $region94: #{decoder_forward.2} parent=91 // loop_header
                %s2840 = sphi 0, %s2844
                %p2841 = scmp.ge.s32.totalorder %s2840, 1
                %s2845 = sphi %s2825, %s2825
                %s2846 = sphi %s2830, %s2830
              $region95: #{decoder_forward.2} parent=91 // loop_header_branch
                %2843 = sbr.rel (%p2841) target = $region99
              $region96: #{decoder_forward.2} parent=91 // loop_body
                %v2847 = vld [vmem:[%s2845] sm:%s2838]
                %2848 = vst [vmem:[%s2846] sm:%s2838] %v2847
                %v2849 = vld [vmem:[%s2845 + $0x8] sm:%s2838]
                %2850 = vst [vmem:[%s2846 + $0x10] sm:%s2838] %v2849
              $region97: #{decoder_forward.2} parent=91 // loop_footer
                %s2844 = sadd.s32 1, %s2840
              $region98: #{decoder_forward.2} parent=91 // loop_footer_branch
                %2839 = sbr.rel target = $region94
              $region99: #{decoder_forward.2} parent=91 // loop_exit
                _
            $region92: #{decoder_forward.2} parent=83 // pred_fallthru
              _
          $region84: #{decoder_forward.2} parent=79 // pred_fallthru
            _
          %2867 = vnop
        $region80: #{decoder_forward.2} parent=47 // pred_fallthru
          _
        // Predicated region
        $region115: #{decoder_forward.2} parent=47 // pred_check
          %p2868 = pneg %p217
        $region116: #{decoder_forward.2} parent=47 // pred_check_branch
          %2870 = sbr.rel (%p2868) target = $region118
        $region117: #{decoder_forward.2} parent=47 // pred_region
          _
        $region118: #{decoder_forward.2} parent=47 // pred_fallthru
          _
        // Predicated region
        $region119: #{decoder_forward.2} parent=47 // pred_check
          %p2871 = pneg %p238
        $region120: #{decoder_forward.2} parent=47 // pred_check_branch
          %2873 = sbr.rel (%p2871) target = $region122
        $region121: #{decoder_forward.2} parent=47 // pred_region
          _
        $region122: #{decoder_forward.2} parent=47 // pred_fallthru
          _
        // Predicated region
        $region123: #{decoder_forward.2} parent=47 // pred_check
          %p2874 = pneg %p217
        $region124: #{decoder_forward.2} parent=47 // pred_check_branch
          %2876 = sbr.rel (%p2874) target = $region126
        $region125: #{decoder_forward.2} parent=47 // pred_region
          _
        $region126: #{decoder_forward.2} parent=47 // pred_fallthru
          _
        // Predicated region
        $region127: #{decoder_forward.2} parent=47 // pred_check
          %p2877 = pneg %p238
        $region128: #{decoder_forward.2} parent=47 // pred_check_branch
          %2879 = sbr.rel (%p2877) target = $region130
        $region129: #{decoder_forward.2} parent=47 // pred_region
          _
        $region130: #{decoder_forward.2} parent=47 // pred_fallthru
          _
      $region48: #{decoder_forward.2} parent=5 // pred_fallthru
        _
      %p2880 = scmp.le.s32.totalorder 2, %s21
      // Predicated region
      $region131: #{decoder_forward.2} parent=5 // pred_check
        %p2881 = pneg %p2880
      $region132: #{decoder_forward.2} parent=5 // pred_check_branch
        %2883 = sbr.rel (%p2881) target = $region134
      $region133: #{decoder_forward.2} parent=5 // pred_region
        %s2884 = ssub.s32 %s21, 2
        // Predicated region
        $region135: #{decoder_forward.2} parent=133 // pred_check
          %p2885 = pneg %p202
        $region136: #{decoder_forward.2} parent=133 // pred_check_branch
          %2887 = sbr.rel (%p2885) target = $region138
        $region137: #{decoder_forward.2} parent=133 // pred_region
          %s2888 = sand.u32 %s187, 1
          %s2889 = sand.u32 %s187, 1
          %s2890 = smul.addr %s2889, 16
          %s2891 = scalar_lea.vmem [#allocation14], %s2890
        $region138: #{decoder_forward.2} parent=133 // pred_fallthru
          _
      $region134: #{decoder_forward.2} parent=5 // pred_fallthru
        _
    $region6: #{decoder_forward.2} parent=1 // loop_footer
      %s25 = sadd.s32 1, %s21
    $region7: #{decoder_forward.2} parent=1 // loop_footer_branch
      %20 = sbr.rel target = $region3
    $region8: #{decoder_forward.2} parent=1 // loop_exit
      _
    %2892 = vsyncpa [#allocation7], 1
    %s2893 = scalar_lea.sflag [#allocation7], 1
    %2894 = vsyncpa %s2893, 1
    %2895 = vsyncpa [#allocation9], 1
    %2896 = vsyncpa [#allocation12], 1

</llo_original>
